<compile_context>
chip_gen: v7x
topology: tpu7x:2x2x1
jax: 0.10.0
libtpu: 0.0.40
codegen_flags: <defaults>
</compile_context>

<pallas_src>
import functools

import numpy as np

import jax
import jax.numpy as jnp
from jax.experimental import pallas as pl
from jax.experimental.pallas import tpu as pltpu


# ----------------------------------------------------------------------------- helpers

def _full_spec(shape):
    """BlockSpec covering the whole array (single grid step)."""
    n = len(shape)
    return pl.BlockSpec(shape, lambda *_, _n=n: (0,) * _n)


def _pool_pattern_t(H, W, Ho, Wo, hw_pad):
    """Static [hw_pad, Ho*Wo] bf16 0/1 indicator: pixel p lies inside pooled cell o.

    Rows >= H*W (tile padding) are zero.  The 1/(kh*kw) averaging factor is applied as an exact
    f32 scalar inside the kernel (so bf16 never touches it).
    """
    kh, kw = H // Ho, W // Wo
    ph = np.arange(H * W) // W
    pw = np.arange(H * W) % W
    oh = np.arange(Ho * Wo) // Wo
    ow = np.arange(Ho * Wo) % Wo
    pat = ((ph[:, None] // kh) == oh[None, :]) & ((pw[:, None] // kw) == ow[None, :])
    full = np.zeros((hw_pad, Ho * Wo), np.float32)
    full[: H * W] = pat.astype(np.float32)
    return jnp.asarray(full, dtype=jnp.bfloat16)


# ----------------------------------------------------------------------------- fused query + head kernel

def _query_head_kernel(hs_ref, eff_ref, clssel_ref,
                       qw_ref, qb_ref, g_ref, gb_ref,
                       w1_ref, b1_ref, w2_ref, b2_ref, we_ref, web_ref,
                       logits_ref, qpred_ref, *, B, Qd, eps):
    # ---- query_proj (bf16 MXU operands, f32 acc) + bias -----------------------------------
    proj = jnp.dot(hs_ref[...], qw_ref[...],
                   preferred_element_type=jnp.float32) + qb_ref[...]            # [M, Qs]
    # validity of each pre-LN token (reference: query_tokens.abs().sum(-1) > 0 before LayerNorm)
    rownz = (jnp.sum(jnp.abs(proj), axis=-1, keepdims=True) > 0.0).astype(jnp.float32)

    # ---- query_norm (row-wise LayerNorm; padded rows are masked out downstream) -----------
    mu = jnp.mean(proj, axis=-1, keepdims=True)
    var = jnp.mean(jnp.square(proj - mu), axis=-1, keepdims=True)
    y = (proj - mu) * jax.lax.rsqrt(var + eps) * g_ref[...] + gb_ref[...]       # [M, Qs]

    M, Qs = y.shape
    # selected prompt tokens of each element's own batch
    pv = eff_ref[...] * rownz                                                   # [M, 1]
    own_sum = jnp.sum((y * pv).reshape(B, Qd, Qs), axis=1)                      # [B, Qs]
    own_cnt = jnp.sum(pv.reshape(B, Qd, 1), axis=1)                             # [B, 1]

    # cls queries of batches 1..B-1 (positions 1..B-1 of every concatenated sequence in the
    # reference), shared identically by every batch element — matches reference semantics.
    cvm = rownz * clssel_ref[...]                                               # [M, 1]
    cls_sum = jnp.sum(y * cvm, axis=0, keepdims=True)                           # [1, Qs]
    cls_cnt = jnp.sum(cvm, axis=0, keepdims=True)                               # [1, 1]

    inv_den = pl.reciprocal(jnp.maximum(own_cnt + cls_cnt, 1e-6), approx=True)  # [B, 1] (EUP)
    prompt_mean = (own_sum + cls_sum) * inv_den                                 # [B, Qs]
    # reference: cls_token = last_hidden_state[:, 0] == LN(proj(hs[0, 0, :])) for every element
    fused = y[0:1, :] + prompt_mean                                             # [B, Qs]

    # ---- classifier MLP + embedding head (chained in VMEM, bf16 MXU operands) -------------
    fb = fused.astype(jnp.bfloat16)
    h1 = jnp.maximum(jnp.dot(fb, w1_ref[...], preferred_element_type=jnp.float32)
                     + b1_ref[...], 0.0)
    logits_ref[...] = jnp.dot(h1.astype(jnp.bfloat16), w2_ref[...],
                              preferred_element_type=jnp.float32) + b2_ref[...]
    qpred_ref[...] = jnp.dot(fb, we_ref[...],
                             preferred_element_type=jnp.float32) + web_ref[...]


def query_head(hs2_bf16, eff, cls_sel, params, *, B, Qd, eps=1e-5):
    """hs2: [B*Qd, R] bf16, eff/cls_sel: [B*Qd, 1] f32 -> (logits [B, nc], query_pred [B, Qs])."""
    M, R = hs2_bf16.shape
    Qs = params["query_proj_w"].shape[1]
    nc = params["cls_w2"].shape[1]
    kernel = functools.partial(_query_head_kernel, B=B, Qd=Qd, eps=eps)
    return pl.pallas_call(
        kernel,
        grid=(1,),
        in_specs=[_full_spec((M, R)), _full_spec((M, 1)), _full_spec((M, 1)),
                  _full_spec((R, Qs)), _full_spec((1, Qs)),
                  _full_spec((1, Qs)), _full_spec((1, Qs)),
                  _full_spec((Qs, Qs)), _full_spec((1, Qs)),
                  _full_spec((Qs, nc)), _full_spec((1, nc)),
                  _full_spec((Qs, Qs)), _full_spec((1, Qs))],
        out_specs=(_full_spec((B, nc)), _full_spec((B, Qs))),
        out_shape=(jax.ShapeDtypeStruct((B, nc), jnp.float32),
                   jax.ShapeDtypeStruct((B, Qs), jnp.float32)),
        compiler_params=pltpu.CompilerParams(vmem_limit_bytes=32 * 1024 * 1024),
    )(hs2_bf16, eff, cls_sel,
      params["query_proj_w"], params["query_proj_b"].reshape(1, Qs),
      params["query_norm_g"].reshape(1, Qs), params["query_norm_b"].reshape(1, Qs),
      params["cls_w1"], params["cls_b1"].reshape(1, Qs),
      params["cls_w2"], params["cls_b2"].reshape(1, nc),
      params["emb_w"], params["emb_b"].reshape(1, Qs))


# ----------------------------------------------------------------------------- fused context kernel

def _ctx_kernel(x_ref, p_ref, m_ref, pat_ref, w_ref, b_ref, g_ref, bt_ref,
                o_ref, acc_ref, msum_ref, *, t_hw, inv_nw, eps):
    t = pl.program_id(1)

    @pl.when(t == 0)
    def _init():
        acc_ref[...] = jnp.zeros_like(acc_ref)
        msum_ref[...] = jnp.zeros_like(msum_ref)

    off = pl.multiple_of(t * t_hw, t_hw)
    A = pat_ref[pl.ds(off, t_hw), :]                           # [t_hw, No] bf16 0/1 (resident)
    keep = 1.0 - m_ref[0]                                      # [1, t_hw]  bf16
    # masked (feat + pos); select (not multiply) so garbage in a partial boundary block of
    # feat/pos (OOB pixels past H*W) can never leak through as 0*NaN.
    z = jnp.where(keep > 0, x_ref[0] + p_ref[0], 0.0)          # [Ci, t_hw] bf16
    # masked adaptive-avg-pool of (feat+pos), accumulated across pixel tiles (MXU, f32 acc)
    acc_ref[...] += jnp.dot(z, A, preferred_element_type=jnp.float32)           # [Ci, No]
    msum_ref[...] += jnp.dot(keep, A, preferred_element_type=jnp.float32)       # [1, No]

    @pl.when(t == pl.num_programs(1) - 1)
    def _finalize():
        # Reference: toks = (W @ pool(z_masked) + b) / clamp(pool(1-mask), 1e-6); the 1x1 conv
        # (incl. its bias averaging to itself) commutes with avg pooling.
        inv_den = pl.reciprocal(jnp.maximum(msum_ref[...] * inv_nw, 1e-6),
                                approx=True)                                    # [1, No] (EUP)
        pooled = acc_ref[...] * inv_nw * inv_den                                # [Ci, No]
        # W-part: contract Ci (TN matmul); bias-part: outer(1/den, b) via a K=1 matmul — keeps
        # everything lane-dense with no small transposes.
        wpart = jax.lax.dot_general(pooled.astype(jnp.bfloat16), w_ref[...],
                                    (((0,), (0,)), ((), ())),
                                    preferred_element_type=jnp.float32)         # [No, Cs]
        bpart = jax.lax.dot_general(inv_den, b_ref[...],
                                    (((0,), (0,)), ((), ())),
                                    preferred_element_type=jnp.float32)         # [No, Cs]
        toks = wpart + bpart
        mu = jnp.mean(toks, axis=-1, keepdims=True)
        var = jnp.mean(jnp.square(toks - mu), axis=-1, keepdims=True)
        o_ref[0] = (toks - mu) * jax.lax.rsqrt(var + eps) * g_ref[...] + bt_ref[...]


def ctx_tokens(feat, pos, mask, w_bf16, bias, gamma, beta, pool_hw,
               *, hw_tile=2048, eps=1e-5):
    """feat/pos: [B, Ci, H, W] (bf16 preferred), mask: [B, H, W] bool -> tokens [B, Ho*Wo, Cs] f32."""
    B, Ci, H, W = feat.shape
    Cs = w_bf16.shape[1]
    Ho, Wo = pool_hw
    # TODO(synk): adaptive_avg_pool2d with non-divisible spatial dims (uneven windows) not supported.
    assert H % Ho == 0 and W % Wo == 0
    assert hw_tile % 128 == 0
    No, HW = Ho * Wo, H * W
    kh, kw = H // Ho, W // Wo
    inv_nw = 1.0 / float(kh * kw)

    # NCHW consumed directly as [B, Ci, H*W] (free view; no NHWC transpose round-trip); bf16
    # halves the streamed HBM bytes (no-op cast if the backbone already emits bf16).
    x = feat.reshape(B, Ci, HW).astype(jnp.bfloat16)
    pz = pos.reshape(B, Ci, HW).astype(jnp.bfloat16)

    if HW <= hw_tile:
        t_hw, n_t = HW, 1                                      # single full-extent tile
    else:
        t_hw = hw_tile
        n_t = (HW + t_hw - 1) // t_hw                          # ragged last tile handled in-kernel
    hw_pad = n_t * t_hw

    m = mask.reshape(B, 1, HW).astype(jnp.bfloat16)
    if hw_pad > HW:
        # pad mask with 1.0 ("padded pixel") so the ragged boundary tile contributes nothing
        m = jnp.pad(m, ((0, 0), (0, 0), (0, hw_pad - HW)), constant_values=1.0)

    pat = _pool_pattern_t(H, W, Ho, Wo, hw_pad)                # [hw_pad, No], resident in VMEM

    kernel = functools.partial(_ctx_kernel, t_hw=t_hw, inv_nw=inv_nw, eps=eps)
    # TODO(synk): for B == 1 on v7x (2 TCs) add a second parallel split (e.g. over pooled rows)
    # so both cores get work; with B >= 2 the batch axis already shards across cores.
    return pl.pallas_call(
        kernel,
        grid=(B, n_t),
        in_specs=[
            pl.BlockSpec((1, Ci, t_hw), lambda bi, ti: (bi, 0, ti)),   # feat   [B, Ci, HW] bf16
            pl.BlockSpec((1, Ci, t_hw), lambda bi, ti: (bi, 0, ti)),   # pos    [B, Ci, HW] bf16
            pl.BlockSpec((1, 1, t_hw), lambda bi, ti: (bi, 0, ti)),    # mask   [B, 1, HW_pad] bf16
            pl.BlockSpec((hw_pad, No), lambda bi, ti: (0, 0)),         # pool pattern, resident
            pl.BlockSpec((Ci, Cs), lambda bi, ti: (0, 0)),             # conv weight (bf16)
            pl.BlockSpec((1, Cs), lambda bi, ti: (0, 0)),              # conv bias
            pl.BlockSpec((1, Cs), lambda bi, ti: (0, 0)),              # LN gamma
            pl.BlockSpec((1, Cs), lambda bi, ti: (0, 0)),              # LN beta
        ],
        out_specs=pl.BlockSpec((1, No, Cs), lambda bi, ti: (bi, 0, 0)),
        out_shape=jax.ShapeDtypeStruct((B, No, Cs), jnp.float32),
        scratch_shapes=[pltpu.VMEM((Ci, No), jnp.float32),
                        pltpu.VMEM((1, No), jnp.float32)],
        compiler_params=pltpu.CompilerParams(
            dimension_semantics=("parallel", "arbitrary"),
            vmem_limit_bytes=32 * 1024 * 1024),
    )(x, pz, m, pat, w_bf16, bias.reshape(1, Cs), gamma.reshape(1, Cs), beta.reshape(1, Cs))


# ----------------------------------------------------------------------------- params / forward

def init_params(key, cfg):
    Qs, R, Cs, Ci = cfg["query_size"], cfg["region_size"], cfg["context_size"], cfg["image_size"]
    nc, scale = cfg["num_classes"], cfg["image_scale"]
    keys = jax.random.split(key, 8 + 2 * scale)

    def lin(k, fan_in, fan_out):
        kw, kb = jax.random.split(k)
        lim = 1.0 / float(fan_in) ** 0.5
        w = jax.random.uniform(kw, (fan_in, fan_out), minval=-lim, maxval=lim, dtype=jnp.float32)
        b = jax.random.uniform(kb, (fan_out,), minval=-lim, maxval=lim, dtype=jnp.float32)
        return w.astype(jnp.bfloat16), b        # weights stored bf16 (MXU operands), bias f32

    p = {}
    p["query_proj_w"], p["query_proj_b"] = lin(keys[0], R, Qs)
    p["query_norm_g"] = jnp.ones((Qs,), jnp.float32)
    p["query_norm_b"] = jnp.zeros((Qs,), jnp.float32)
    p["ctx_w"], p["ctx_b"], p["ctx_ln_g"], p["ctx_ln_b"] = [], [], [], []
    for s in range(scale):
        w, b = lin(keys[1 + s], Ci, Cs)          # 1x1 conv == [Cin, Cout] matmul
        p["ctx_w"].append(w)
        p["ctx_b"].append(b)
        p["ctx_ln_g"].append(jnp.ones((Cs,), jnp.float32))
        p["ctx_ln_b"].append(jnp.zeros((Cs,), jnp.float32))
    p["cls_w1"], p["cls_b1"] = lin(keys[1 + scale], Qs, Qs)
    p["cls_w2"], p["cls_b2"] = lin(keys[2 + scale], Qs, nc)
    p["emb_w"], p["emb_b"] = lin(keys[3 + scale], Qs, Qs)
    # TODO(synk): real target_embedding comes from a text backbone over a class-name CSV.
    p["target_embedding"] = jax.random.normal(keys[4 + scale], (nc, Qs), jnp.float32)
    return p


def hecto_forward(params, detr_out, labels, cfg):
    pred_logits = detr_out["pred_logits"]        # [B, Qd, Cdet]
    hs = detr_out["hs"]                          # [B, Qd, region_size]
    B, Qd, R = hs.shape

    # ------------------------------------------------ query selection (tiny scalar-ish glue)
    probs = jax.nn.sigmoid(pred_logits)
    sel = jnp.max(probs, axis=-1) > cfg["threshold"]            # [B, Qd]
    has_any = jnp.any(sel, axis=-1, keepdims=True)
    fallback = jnp.zeros_like(sel).at[:, 0].set(True)           # "if mask.sum()==0: use hs_b[0]"
    eff = jnp.where(has_any, sel, fallback)
    eff_f = eff.reshape(B * Qd, 1).astype(jnp.float32)

    # static selector for the cls rows of batches 1..B-1 (the reference prepends every batch's
    # cls query; position 0 is excluded from the prompt mean downstream)
    cls_sel = np.zeros((B * Qd, 1), np.float32)
    cls_sel[np.arange(1, B) * Qd, 0] = 1.0
    cls_sel = jnp.asarray(cls_sel)

    # TODO(synk): HectoEncoder (BERT-style cross-attention stack) is an external module not
    # defined in the source; identity passthrough keeps the head semantics exact.
    hs_bf16 = hs.reshape(B * Qd, R).astype(jnp.bfloat16)
    pred_logits_out, query_pred = query_head(hs_bf16, eff_f, cls_sel, params, B=B, Qd=Qd)

    # ------------------------------------------------ get_ms_context_from_detr (fused per scale)
    ms_context_tokens = []
    for s in range(cfg["image_scale"]):
        tokens = ctx_tokens(detr_out["ms_features"][s], detr_out["ms_pos"][s],
                            detr_out["ms_mask"][s],
                            params["ctx_w"][s], params["ctx_b"][s],
                            params["ctx_ln_g"][s], params["ctx_ln_b"][s],
                            cfg["pool_sizes"][s])
        ms_context_tokens.append(tokens)

    # ------------------------------------------------ make_targets (embedding-table gather)
    query_target = params["target_embedding"][labels]
    targets = {"query_target": query_target,
               "target_labels": labels.astype(jnp.float32)}

    return {"pred_logits": pred_logits_out,
            "query_pred": query_pred,
            "ms_context_tokens": ms_context_tokens,
            "targets": targets}


# ----------------------------------------------------------------------------- config / main

CFG = dict(
    region_size=128,       # DETR hidden size (query_proj in_features)
    query_size=256,
    context_size=256,
    image_size=128,        # channel dim of multi-scale features (conv in_channels)
    image_scale=2,
    num_context_token=8,
    num_classes=384,
    threshold=0.2,
)
CFG["pool_sizes"] = [(max(1, CFG["num_context_token"] // 2 ** i),) * 2
                     for i in range(CFG["image_scale"])]


if __name__ == "__main__":
    key = jax.random.PRNGKey(0)
    kp, kd = jax.random.split(key)
    params = init_params(kp, CFG)

    B, Qd, Cdet = 2, 8, 16
    ks = jax.random.split(kd, 8)
    # TODO(synk): detr_backbone is an external model; its outputs are synthesized deterministically.
    pred_logits = jax.random.normal(ks[0], (B, Qd, Cdet), jnp.float32)
    pred_boxes = jax.random.uniform(ks[1], (B, Qd, 4), jnp.float32)   # unused downstream (as in ref)
    hs = jax.random.normal(ks[2], (B, Qd, CFG["region_size"]), jnp.float32)

    spatial = [(16, 16), (8, 8)]
    ms_features, ms_pos, ms_mask = [], [], []
    for s, (H, W) in enumerate(spatial):
        # backbone features emitted in bf16 (streamed as-is by the ctx kernel, no extra cast pass)
        ms_features.append(jax.random.normal(ks[3 + s], (B, CFG["image_size"], H, W),
                                             jnp.bfloat16))
        ms_pos.append(jax.random.normal(ks[5 + s], (B, CFG["image_size"], H, W), jnp.bfloat16))
        col = jnp.arange(W)[None, None, :]
        ms_mask.append(jnp.broadcast_to(col >= (3 * W) // 4, (B, H, W)))   # right quarter padded

    detr_out = {"pred_logits": pred_logits, "pred_boxes": pred_boxes, "hs": hs,
                "ms_features": ms_features, "ms_pos": ms_pos, "ms_mask": ms_mask}
    labels = jnp.array([3, 7], dtype=jnp.int32)

    forward = jax.jit(functools.partial(hecto_forward, cfg=CFG))
    out = forward(params, detr_out, labels)
    jax.tree_util.tree_map(jax.block_until_ready, out)

    assert out["pred_logits"].shape == (B, CFG["num_classes"])
    assert out["query_pred"].shape == (B, CFG["query_size"])
    assert out["ms_context_tokens"][0].shape == (B, CFG["pool_sizes"][0][0] ** 2, CFG["context_size"])
    assert out["ms_context_tokens"][1].shape == (B, CFG["pool_sizes"][1][0] ** 2, CFG["context_size"])
    print("KERNEL_OK")
</pallas_src>

<mosaic_0001>
module attributes {stable_mosaic.version = 11 : i64} {
  func.func @_ctx_kernel(%arg0: i32, %arg1: i32, %arg2: memref<1x128x256xbf16, #tpu.memory_space<vmem>>, %arg3: memref<1x128x256xbf16, #tpu.memory_space<vmem>>, %arg4: memref<1x1x256xbf16, #tpu.memory_space<vmem>>, %arg5: memref<256x64xbf16, #tpu.memory_space<vmem>>, %arg6: memref<128x256xbf16, #tpu.memory_space<vmem>>, %arg7: memref<1x256xf32, #tpu.memory_space<vmem>>, %arg8: memref<1x256xf32, #tpu.memory_space<vmem>>, %arg9: memref<1x256xf32, #tpu.memory_space<vmem>>, %arg10: memref<1x64x256xf32, #tpu.memory_space<vmem>>, %arg11: memref<128x64xf32, #tpu.memory_space<vmem>>, %arg12: memref<1x64xf32, #tpu.memory_space<vmem>>) attributes {dimension_semantics = [#tpu.dimension_semantics<parallel>, #tpu.dimension_semantics<arbitrary>], iteration_bounds = array<i64: 2, 1>, scalar_prefetch = 0 : i64, scratch_operands = 2 : i64, tpu.core_type = #tpu.core_type<tc>, window_params = [{transform_indices = @transform_0, window_bounds = array<i64: 1, 128, 256>}, {transform_indices = @transform_1, window_bounds = array<i64: 1, 128, 256>}, {transform_indices = @transform_2, window_bounds = array<i64: 1, 1, 256>}, {pipeline_mode = #tpu.pipeline_mode<synchronous>, transform_indices = @transform_3, window_bounds = array<i64: 256, 64>}, {pipeline_mode = #tpu.pipeline_mode<synchronous>, transform_indices = @transform_4, window_bounds = array<i64: 128, 256>}, {pipeline_mode = #tpu.pipeline_mode<synchronous>, transform_indices = @transform_5, window_bounds = array<i64: 1, 256>}, {pipeline_mode = #tpu.pipeline_mode<synchronous>, transform_indices = @transform_6, window_bounds = array<i64: 1, 256>}, {pipeline_mode = #tpu.pipeline_mode<synchronous>, transform_indices = @transform_7, window_bounds = array<i64: 1, 256>}, {transform_indices = @transform_8, window_bounds = array<i64: 1, 64, 256>}]} {
    %c0_i32 = arith.constant 0 : i32
    %0 = arith.cmpi eq, %arg1, %c0_i32 : i32
    %1 = arith.extui %0 : i1 to i32
    %c0_i32_0 = arith.constant 0 : i32
    %2 = arith.cmpi ne, %1, %c0_i32_0 : i32
    scf.if %2 {
      %cst_24 = arith.constant 0.000000e+00 : f32
      %34 = vector.broadcast %cst_24 : f32 to vector<128x64xf32>
      %c0_25 = arith.constant 0 : index
      %c0_26 = arith.constant 0 : index
      %35 = vector.load %arg11[%c0_25, %c0_26] : memref<128x64xf32, #tpu.memory_space<vmem>>, vector<128x64xf32>
      tpu.vector_store %arg11[%c0_25, %c0_26], %34 {strides = array<i32>} : memref<128x64xf32, #tpu.memory_space<vmem>>, vector<128x64xf32>,
      %cst_27 = arith.constant 0.000000e+00 : f32
      %36 = vector.broadcast %cst_27 : f32 to vector<1x64xf32>
      %c0_28 = arith.constant 0 : index
      %c0_29 = arith.constant 0 : index
      %37 = vector.load %arg12[%c0_28, %c0_29] : memref<1x64xf32, #tpu.memory_space<vmem>>, vector<1x64xf32>
      tpu.vector_store %arg12[%c0_28, %c0_29], %36 {strides = array<i32>} : memref<1x64xf32, #tpu.memory_space<vmem>>, vector<1x64xf32>,
    } else {
    }
    %c256_i32 = arith.constant 256 : i32
    %3 = arith.muli %arg1, %c256_i32 : i32
    %4 = tpu.assume_multiple %3, 256 : i32
    %5 = arith.index_cast %4 : i32 to index
    %c0 = arith.constant 0 : index
    %6 = vector.load %arg5[%5, %c0] : memref<256x64xbf16, #tpu.memory_space<vmem>>, vector<256x64xbf16>
    %c0_1 = arith.constant 0 : index
    %c0_2 = arith.constant 0 : index
    %c0_3 = arith.constant 0 : index
    %7 = vector.load %arg4[%c0_1, %c0_2, %c0_3] : memref<1x1x256xbf16, #tpu.memory_space<vmem>>, vector<1x1x256xbf16>
    %8 = vector.shape_cast %7 : vector<1x1x256xbf16> to vector<1x256xbf16>
    %cst = arith.constant 1.000000e+00 : bf16
    %9 = vector.broadcast %cst : bf16 to vector<1x256xbf16>
    %10 = arith.subf %9, %8 : vector<1x256xbf16>
    %cst_4 = arith.constant 0.000000e+00 : bf16
    %11 = vector.broadcast %cst_4 : bf16 to vector<1x256xbf16>
    %12 = arith.cmpf ogt, %10, %11 : vector<1x256xbf16>
    %c0_5 = arith.constant 0 : index
    %c0_6 = arith.constant 0 : index
    %c0_7 = arith.constant 0 : index
    %13 = vector.load %arg2[%c0_5, %c0_6, %c0_7] : memref<1x128x256xbf16, #tpu.memory_space<vmem>>, vector<1x128x256xbf16>
    %14 = vector.shape_cast %13 : vector<1x128x256xbf16> to vector<128x256xbf16>
    %c0_8 = arith.constant 0 : index
    %c0_9 = arith.constant 0 : index
    %c0_10 = arith.constant 0 : index
    %15 = vector.load %arg3[%c0_8, %c0_9, %c0_10] : memref<1x128x256xbf16, #tpu.memory_space<vmem>>, vector<1x128x256xbf16>
    %16 = vector.shape_cast %15 : vector<1x128x256xbf16> to vector<128x256xbf16>
    %17 = arith.addf %14, %16 : vector<128x256xbf16>
    %cst_11 = arith.constant 0.000000e+00 : f32
    %18 = arith.truncf %cst_11 : f32 to bf16
    %19 = vector.shape_cast %12 : vector<1x256xi1> to vector<1x256xi1>
    %20 = vector.broadcast %19 : vector<1x256xi1> to vector<128x256xi1>
    %21 = vector.broadcast %18 : bf16 to vector<128x256xbf16>
    %22 = arith.select %20, %17, %21 : vector<128x256xi1>, vector<128x256xbf16>
    %c0_12 = arith.constant 0 : index
    %c0_13 = arith.constant 0 : index
    %23 = vector.load %arg11[%c0_12, %c0_13] : memref<128x64xf32, #tpu.memory_space<vmem>>, vector<128x64xf32>
    %cst_14 = arith.constant dense<0.000000e+00> : vector<128x64xf32>
    %24 = tpu.matmul %22, %6, %cst_14 {dimension_numbers = #tpu.dot_dimension_numbers<[1], [0], [0], [1], [0, 0, 1, 1], [], []>} : vector<128x256xbf16>, vector<256x64xbf16>, vector<128x64xf32> -> vector<128x64xf32>
    %25 = arith.addf %23, %24 : vector<128x64xf32>
    %c0_15 = arith.constant 0 : index
    %c0_16 = arith.constant 0 : index
    %26 = vector.load %arg11[%c0_15, %c0_16] : memref<128x64xf32, #tpu.memory_space<vmem>>, vector<128x64xf32>
    tpu.vector_store %arg11[%c0_15, %c0_16], %25 {strides = array<i32>} : memref<128x64xf32, #tpu.memory_space<vmem>>, vector<128x64xf32>,
    %c0_17 = arith.constant 0 : index
    %c0_18 = arith.constant 0 : index
    %27 = vector.load %arg12[%c0_17, %c0_18] : memref<1x64xf32, #tpu.memory_space<vmem>>, vector<1x64xf32>
    %cst_19 = arith.constant dense<0.000000e+00> : vector<1x64xf32>
    %28 = tpu.matmul %10, %6, %cst_19 {dimension_numbers = #tpu.dot_dimension_numbers<[1], [0], [0], [1], [0, 0, 1, 1], [], []>} : vector<1x256xbf16>, vector<256x64xbf16>, vector<1x64xf32> -> vector<1x64xf32>
    %29 = arith.addf %27, %28 : vector<1x64xf32>
    %c0_20 = arith.constant 0 : index
    %c0_21 = arith.constant 0 : index
    %30 = vector.load %arg12[%c0_20, %c0_21] : memref<1x64xf32, #tpu.memory_space<vmem>>, vector<1x64xf32>
    tpu.vector_store %arg12[%c0_20, %c0_21], %29 {strides = array<i32>} : memref<1x64xf32, #tpu.memory_space<vmem>>, vector<1x64xf32>,
    %c0_i32_22 = arith.constant 0 : i32
    %31 = arith.cmpi eq, %arg1, %c0_i32_22 : i32
    %32 = arith.extui %31 : i1 to i32
    %c0_i32_23 = arith.constant 0 : i32
    %33 = arith.cmpi ne, %32, %c0_i32_23 : i32
    scf.if %33 {
      %c0_24 = arith.constant 0 : index
      %c0_25 = arith.constant 0 : index
      %34 = vector.load %arg12[%c0_24, %c0_25] : memref<1x64xf32, #tpu.memory_space<vmem>>, vector<1x64xf32>
      %cst_26 = arith.constant 2.500000e-01 : f32
      %35 = vector.broadcast %cst_26 : f32 to vector<1x64xf32>
      %36 = arith.mulf %34, %35 : vector<1x64xf32>
      %cst_27 = arith.constant 9.99999997E-7 : f32
      %37 = vector.broadcast %cst_27 : f32 to vector<1x64xf32>
      %38 = arith.maximumf %36, %37 : vector<1x64xf32>
      %39 = tpu.reciprocal %38 {approx = true} : vector<1x64xf32> -> vector<1x64xf32>
      %c0_28 = arith.constant 0 : index
      %c0_29 = arith.constant 0 : index
      %40 = vector.load %arg11[%c0_28, %c0_29] : memref<128x64xf32, #tpu.memory_space<vmem>>, vector<128x64xf32>
      %cst_30 = arith.constant 2.500000e-01 : f32
      %41 = vector.broadcast %cst_30 : f32 to vector<128x64xf32>
      %42 = arith.mulf %40, %41 : vector<128x64xf32>
      %43 = vector.broadcast %39 : vector<1x64xf32> to vector<128x64xf32>
      %44 = arith.mulf %42, %43 : vector<128x64xf32>
      %45 = arith.truncf %44 : vector<128x64xf32> to vector<128x64xbf16>
      %c0_31 = arith.constant 0 : index
      %c0_32 = arith.constant 0 : index
      %46 = vector.load %arg6[%c0_31, %c0_32] : memref<128x256xbf16, #tpu.memory_space<vmem>>, vector<128x256xbf16>
      %cst_33 = arith.constant dense<0.000000e+00> : vector<64x256xf32>
      %47 = tpu.matmul %45, %46, %cst_33 {dimension_numbers = #tpu.dot_dimension_numbers<[0], [0], [1], [1], [0, 1, 1, 1], [], []>} : vector<128x64xbf16>, vector<128x256xbf16>, vector<64x256xf32> -> vector<64x256xf32>
      %c0_34 = arith.constant 0 : index
      %c0_35 = arith.constant 0 : index
      %48 = vector.load %arg7[%c0_34, %c0_35] : memref<1x256xf32, #tpu.memory_space<vmem>>, vector<1x256xf32>
      %cst_36 = arith.constant dense<0.000000e+00> : vector<64x256xf32>
      %49 = tpu.matmul %39, %48, %cst_36 {dimension_numbers = #tpu.dot_dimension_numbers<[0], [0], [1], [1], [0, 1, 1, 1], [], []>} : vector<1x64xf32>, vector<1x256xf32>, vector<64x256xf32> -> vector<64x256xf32>
      %50 = arith.addf %47, %49 : vector<64x256xf32>
      %cst_37 = arith.constant dense<0.000000e+00> : vector<64xf32>
      %51 = vector.multi_reduction <add>, %50, %cst_37 [1] : vector<64x256xf32> to vector<64xf32>
      %52 = vector.shape_cast %51 : vector<64xf32> to vector<64x1xf32>
      %cst_38 = arith.constant 2.560000e+02 : f32
      %53 = vector.broadcast %cst_38 : f32 to vector<64x1xf32>
      %54 = arith.divf %52, %53 : vector<64x1xf32>
      %55 = vector.broadcast %54 : vector<64x1xf32> to vector<64x256xf32>
      %56 = arith.subf %50, %55 : vector<64x256xf32>
      %57 = arith.mulf %56, %56 : vector<64x256xf32>
      %cst_39 = arith.constant dense<0.000000e+00> : vector<64xf32>
      %58 = vector.multi_reduction <add>, %57, %cst_39 [1] : vector<64x256xf32> to vector<64xf32>
      %59 = vector.shape_cast %58 : vector<64xf32> to vector<64x1xf32>
      %cst_40 = arith.constant 2.560000e+02 : f32
      %60 = vector.broadcast %cst_40 : f32 to vector<64x1xf32>
      %61 = arith.divf %59, %60 : vector<64x1xf32>
      %62 = vector.broadcast %54 : vector<64x1xf32> to vector<64x256xf32>
      %63 = arith.subf %50, %62 : vector<64x256xf32>
      %cst_41 = arith.constant 9.99999974E-6 : f32
      %64 = vector.broadcast %cst_41 : f32 to vector<64x1xf32>
      %65 = arith.addf %61, %64 : vector<64x1xf32>
      %66 = math.rsqrt %65 : vector<64x1xf32>
      %67 = vector.broadcast %66 : vector<64x1xf32> to vector<64x256xf32>
      %68 = arith.mulf %63, %67 : vector<64x256xf32>
      %c0_42 = arith.constant 0 : index
      %c0_43 = arith.constant 0 : index
      %69 = vector.load %arg8[%c0_42, %c0_43] : memref<1x256xf32, #tpu.memory_space<vmem>>, vector<1x256xf32>
      %70 = vector.broadcast %69 : vector<1x256xf32> to vector<64x256xf32>
      %71 = arith.mulf %68, %70 : vector<64x256xf32>
      %c0_44 = arith.constant 0 : index
      %c0_45 = arith.constant 0 : index
      %72 = vector.load %arg9[%c0_44, %c0_45] : memref<1x256xf32, #tpu.memory_space<vmem>>, vector<1x256xf32>
      %73 = vector.broadcast %72 : vector<1x256xf32> to vector<64x256xf32>
      %74 = arith.addf %71, %73 : vector<64x256xf32>
      %c0_46 = arith.constant 0 : index
      %c0_47 = arith.constant 0 : index
      %c0_48 = arith.constant 0 : index
      %75 = vector.load %arg10[%c0_46, %c0_47, %c0_48] : memref<1x64x256xf32, #tpu.memory_space<vmem>>, vector<1x64x256xf32>
      %76 = vector.shape_cast %75 : vector<1x64x256xf32> to vector<64x256xf32>
      %77 = vector.shape_cast %74 : vector<64x256xf32> to vector<1x64x256xf32>
      tpu.vector_store %arg10[%c0_46, %c0_47, %c0_48], %77 {strides = array<i32>} : memref<1x64x256xf32, #tpu.memory_space<vmem>>, vector<1x64x256xf32>,
    } else {
    }
    return
  }
  func.func @transform_0(%arg0: i32, %arg1: i32) -> (i32, i32, i32) {
    %c0_i32 = arith.constant 0 : i32
    %c0_i32_0 = arith.constant 0 : i32
    return %arg0, %c0_i32, %arg1 : i32, i32, i32
  }
  func.func @transform_1(%arg0: i32, %arg1: i32) -> (i32, i32, i32) {
    %c0_i32 = arith.constant 0 : i32
    %c0_i32_0 = arith.constant 0 : i32
    return %arg0, %c0_i32, %arg1 : i32, i32, i32
  }
  func.func @transform_2(%arg0: i32, %arg1: i32) -> (i32, i32, i32) {
    %c0_i32 = arith.constant 0 : i32
    %c0_i32_0 = arith.constant 0 : i32
    return %arg0, %c0_i32, %arg1 : i32, i32, i32
  }
  func.func @transform_3(%arg0: i32, %arg1: i32) -> (i32, i32) {
    %c0_i32 = arith.constant 0 : i32
    %c0_i32_0 = arith.constant 0 : i32
    %c0_i32_1 = arith.constant 0 : i32
    return %c0_i32, %c0_i32_0 : i32, i32
  }
  func.func @transform_4(%arg0: i32, %arg1: i32) -> (i32, i32) {
    %c0_i32 = arith.constant 0 : i32
    %c0_i32_0 = arith.constant 0 : i32
    %c0_i32_1 = arith.constant 0 : i32
    return %c0_i32, %c0_i32_0 : i32, i32
  }
  func.func @transform_5(%arg0: i32, %arg1: i32) -> (i32, i32) {
    %c0_i32 = arith.constant 0 : i32
    %c0_i32_0 = arith.constant 0 : i32
    %c0_i32_1 = arith.constant 0 : i32
    return %c0_i32, %c0_i32_0 : i32, i32
  }
  func.func @transform_6(%arg0: i32, %arg1: i32) -> (i32, i32) {
    %c0_i32 = arith.constant 0 : i32
    %c0_i32_0 = arith.constant 0 : i32
    %c0_i32_1 = arith.constant 0 : i32
    return %c0_i32, %c0_i32_0 : i32, i32
  }
  func.func @transform_7(%arg0: i32, %arg1: i32) -> (i32, i32) {
    %c0_i32 = arith.constant 0 : i32
    %c0_i32_0 = arith.constant 0 : i32
    %c0_i32_1 = arith.constant 0 : i32
    return %c0_i32, %c0_i32_0 : i32, i32
  }
  func.func @transform_8(%arg0: i32, %arg1: i32) -> (i32, i32, i32) {
    %c0_i32 = arith.constant 0 : i32
    %c0_i32_0 = arith.constant 0 : i32
    %c0_i32_1 = arith.constant 0 : i32
    return %arg0, %c0_i32, %c0_i32_0 : i32, i32, i32
  }
}

module attributes {stable_mosaic.version = 11 : i64} {
  func.func @_ctx_kernel(%arg0: i32, %arg1: i32, %arg2: memref<1x128x64xbf16, #tpu.memory_space<vmem>>, %arg3: memref<1x128x64xbf16, #tpu.memory_space<vmem>>, %arg4: memref<1x1x64xbf16, #tpu.memory_space<vmem>>, %arg5: memref<64x16xbf16, #tpu.memory_space<vmem>>, %arg6: memref<128x256xbf16, #tpu.memory_space<vmem>>, %arg7: memref<1x256xf32, #tpu.memory_space<vmem>>, %arg8: memref<1x256xf32, #tpu.memory_space<vmem>>, %arg9: memref<1x256xf32, #tpu.memory_space<vmem>>, %arg10: memref<1x16x256xf32, #tpu.memory_space<vmem>>, %arg11: memref<128x16xf32, #tpu.memory_space<vmem>>, %arg12: memref<1x16xf32, #tpu.memory_space<vmem>>) attributes {dimension_semantics = [#tpu.dimension_semantics<parallel>, #tpu.dimension_semantics<arbitrary>], iteration_bounds = array<i64: 2, 1>, scalar_prefetch = 0 : i64, scratch_operands = 2 : i64, tpu.core_type = #tpu.core_type<tc>, window_params = [{transform_indices = @transform_0, window_bounds = array<i64: 1, 128, 64>}, {transform_indices = @transform_1, window_bounds = array<i64: 1, 128, 64>}, {transform_indices = @transform_2, window_bounds = array<i64: 1, 1, 64>}, {pipeline_mode = #tpu.pipeline_mode<synchronous>, transform_indices = @transform_3, window_bounds = array<i64: 64, 16>}, {pipeline_mode = #tpu.pipeline_mode<synchronous>, transform_indices = @transform_4, window_bounds = array<i64: 128, 256>}, {pipeline_mode = #tpu.pipeline_mode<synchronous>, transform_indices = @transform_5, window_bounds = array<i64: 1, 256>}, {pipeline_mode = #tpu.pipeline_mode<synchronous>, transform_indices = @transform_6, window_bounds = array<i64: 1, 256>}, {pipeline_mode = #tpu.pipeline_mode<synchronous>, transform_indices = @transform_7, window_bounds = array<i64: 1, 256>}, {transform_indices = @transform_8, window_bounds = array<i64: 1, 16, 256>}]} {
    %c0_i32 = arith.constant 0 : i32
    %0 = arith.cmpi eq, %arg1, %c0_i32 : i32
    %1 = arith.extui %0 : i1 to i32
    %c0_i32_0 = arith.constant 0 : i32
    %2 = arith.cmpi ne, %1, %c0_i32_0 : i32
    scf.if %2 {
      %cst_24 = arith.constant 0.000000e+00 : f32
      %34 = vector.broadcast %cst_24 : f32 to vector<128x16xf32>
      %c0_25 = arith.constant 0 : index
      %c0_26 = arith.constant 0 : index
      %35 = vector.load %arg11[%c0_25, %c0_26] : memref<128x16xf32, #tpu.memory_space<vmem>>, vector<128x16xf32>
      tpu.vector_store %arg11[%c0_25, %c0_26], %34 {strides = array<i32>} : memref<128x16xf32, #tpu.memory_space<vmem>>, vector<128x16xf32>,
      %cst_27 = arith.constant 0.000000e+00 : f32
      %36 = vector.broadcast %cst_27 : f32 to vector<1x16xf32>
      %c0_28 = arith.constant 0 : index
      %c0_29 = arith.constant 0 : index
      %37 = vector.load %arg12[%c0_28, %c0_29] : memref<1x16xf32, #tpu.memory_space<vmem>>, vector<1x16xf32>
      tpu.vector_store %arg12[%c0_28, %c0_29], %36 {strides = array<i32>} : memref<1x16xf32, #tpu.memory_space<vmem>>, vector<1x16xf32>,
    } else {
    }
    %c64_i32 = arith.constant 64 : i32
    %3 = arith.muli %arg1, %c64_i32 : i32
    %4 = tpu.assume_multiple %3, 64 : i32
    %5 = arith.index_cast %4 : i32 to index
    %c0 = arith.constant 0 : index
    %6 = vector.load %arg5[%5, %c0] : memref<64x16xbf16, #tpu.memory_space<vmem>>, vector<64x16xbf16>
    %c0_1 = arith.constant 0 : index
    %c0_2 = arith.constant 0 : index
    %c0_3 = arith.constant 0 : index
    %7 = vector.load %arg4[%c0_1, %c0_2, %c0_3] : memref<1x1x64xbf16, #tpu.memory_space<vmem>>, vector<1x1x64xbf16>
    %8 = vector.shape_cast %7 : vector<1x1x64xbf16> to vector<1x64xbf16>
    %cst = arith.constant 1.000000e+00 : bf16
    %9 = vector.broadcast %cst : bf16 to vector<1x64xbf16>
    %10 = arith.subf %9, %8 : vector<1x64xbf16>
    %cst_4 = arith.constant 0.000000e+00 : bf16
    %11 = vector.broadcast %cst_4 : bf16 to vector<1x64xbf16>
    %12 = arith.cmpf ogt, %10, %11 : vector<1x64xbf16>
    %c0_5 = arith.constant 0 : index
    %c0_6 = arith.constant 0 : index
    %c0_7 = arith.constant 0 : index
    %13 = vector.load %arg2[%c0_5, %c0_6, %c0_7] : memref<1x128x64xbf16, #tpu.memory_space<vmem>>, vector<1x128x64xbf16>
    %14 = vector.shape_cast %13 : vector<1x128x64xbf16> to vector<128x64xbf16>
    %c0_8 = arith.constant 0 : index
    %c0_9 = arith.constant 0 : index
    %c0_10 = arith.constant 0 : index
    %15 = vector.load %arg3[%c0_8, %c0_9, %c0_10] : memref<1x128x64xbf16, #tpu.memory_space<vmem>>, vector<1x128x64xbf16>
    %16 = vector.shape_cast %15 : vector<1x128x64xbf16> to vector<128x64xbf16>
    %17 = arith.addf %14, %16 : vector<128x64xbf16>
    %cst_11 = arith.constant 0.000000e+00 : f32
    %18 = arith.truncf %cst_11 : f32 to bf16
    %19 = vector.shape_cast %12 : vector<1x64xi1> to vector<1x64xi1>
    %20 = vector.broadcast %19 : vector<1x64xi1> to vector<128x64xi1>
    %21 = vector.broadcast %18 : bf16 to vector<128x64xbf16>
    %22 = arith.select %20, %17, %21 : vector<128x64xi1>, vector<128x64xbf16>
    %c0_12 = arith.constant 0 : index
    %c0_13 = arith.constant 0 : index
    %23 = vector.load %arg11[%c0_12, %c0_13] : memref<128x16xf32, #tpu.memory_space<vmem>>, vector<128x16xf32>
    %cst_14 = arith.constant dense<0.000000e+00> : vector<128x16xf32>
    %24 = tpu.matmul %22, %6, %cst_14 {dimension_numbers = #tpu.dot_dimension_numbers<[1], [0], [0], [1], [0, 0, 1, 1], [], []>} : vector<128x64xbf16>, vector<64x16xbf16>, vector<128x16xf32> -> vector<128x16xf32>
    %25 = arith.addf %23, %24 : vector<128x16xf32>
    %c0_15 = arith.constant 0 : index
    %c0_16 = arith.constant 0 : index
    %26 = vector.load %arg11[%c0_15, %c0_16] : memref<128x16xf32, #tpu.memory_space<vmem>>, vector<128x16xf32>
    tpu.vector_store %arg11[%c0_15, %c0_16], %25 {strides = array<i32>} : memref<128x16xf32, #tpu.memory_space<vmem>>, vector<128x16xf32>,
    %c0_17 = arith.constant 0 : index
    %c0_18 = arith.constant 0 : index
    %27 = vector.load %arg12[%c0_17, %c0_18] : memref<1x16xf32, #tpu.memory_space<vmem>>, vector<1x16xf32>
    %cst_19 = arith.constant dense<0.000000e+00> : vector<1x16xf32>
    %28 = tpu.matmul %10, %6, %cst_19 {dimension_numbers = #tpu.dot_dimension_numbers<[1], [0], [0], [1], [0, 0, 1, 1], [], []>} : vector<1x64xbf16>, vector<64x16xbf16>, vector<1x16xf32> -> vector<1x16xf32>
    %29 = arith.addf %27, %28 : vector<1x16xf32>
    %c0_20 = arith.constant 0 : index
    %c0_21 = arith.constant 0 : index
    %30 = vector.load %arg12[%c0_20, %c0_21] : memref<1x16xf32, #tpu.memory_space<vmem>>, vector<1x16xf32>
    tpu.vector_store %arg12[%c0_20, %c0_21], %29 {strides = array<i32>} : memref<1x16xf32, #tpu.memory_space<vmem>>, vector<1x16xf32>,
    %c0_i32_22 = arith.constant 0 : i32
    %31 = arith.cmpi eq, %arg1, %c0_i32_22 : i32
    %32 = arith.extui %31 : i1 to i32
    %c0_i32_23 = arith.constant 0 : i32
    %33 = arith.cmpi ne, %32, %c0_i32_23 : i32
    scf.if %33 {
      %c0_24 = arith.constant 0 : index
      %c0_25 = arith.constant 0 : index
      %34 = vector.load %arg12[%c0_24, %c0_25] : memref<1x16xf32, #tpu.memory_space<vmem>>, vector<1x16xf32>
      %cst_26 = arith.constant 2.500000e-01 : f32
      %35 = vector.broadcast %cst_26 : f32 to vector<1x16xf32>
      %36 = arith.mulf %34, %35 : vector<1x16xf32>
      %cst_27 = arith.constant 9.99999997E-7 : f32
      %37 = vector.broadcast %cst_27 : f32 to vector<1x16xf32>
      %38 = arith.maximumf %36, %37 : vector<1x16xf32>
      %39 = tpu.reciprocal %38 {approx = true} : vector<1x16xf32> -> vector<1x16xf32>
      %c0_28 = arith.constant 0 : index
      %c0_29 = arith.constant 0 : index
      %40 = vector.load %arg11[%c0_28, %c0_29] : memref<128x16xf32, #tpu.memory_space<vmem>>, vector<128x16xf32>
      %cst_30 = arith.constant 2.500000e-01 : f32
      %41 = vector.broadcast %cst_30 : f32 to vector<128x16xf32>
      %42 = arith.mulf %40, %41 : vector<128x16xf32>
      %43 = vector.broadcast %39 : vector<1x16xf32> to vector<128x16xf32>
      %44 = arith.mulf %42, %43 : vector<128x16xf32>
      %45 = arith.truncf %44 : vector<128x16xf32> to vector<128x16xbf16>
      %c0_31 = arith.constant 0 : index
      %c0_32 = arith.constant 0 : index
      %46 = vector.load %arg6[%c0_31, %c0_32] : memref<128x256xbf16, #tpu.memory_space<vmem>>, vector<128x256xbf16>
      %cst_33 = arith.constant dense<0.000000e+00> : vector<16x256xf32>
      %47 = tpu.matmul %45, %46, %cst_33 {dimension_numbers = #tpu.dot_dimension_numbers<[0], [0], [1], [1], [0, 1, 1, 1], [], []>} : vector<128x16xbf16>, vector<128x256xbf16>, vector<16x256xf32> -> vector<16x256xf32>
      %c0_34 = arith.constant 0 : index
      %c0_35 = arith.constant 0 : index
      %48 = vector.load %arg7[%c0_34, %c0_35] : memref<1x256xf32, #tpu.memory_space<vmem>>, vector<1x256xf32>
      %cst_36 = arith.constant dense<0.000000e+00> : vector<16x256xf32>
      %49 = tpu.matmul %39, %48, %cst_36 {dimension_numbers = #tpu.dot_dimension_numbers<[0], [0], [1], [1], [0, 1, 1, 1], [], []>} : vector<1x16xf32>, vector<1x256xf32>, vector<16x256xf32> -> vector<16x256xf32>
      %50 = arith.addf %47, %49 : vector<16x256xf32>
      %cst_37 = arith.constant dense<0.000000e+00> : vector<16xf32>
      %51 = vector.multi_reduction <add>, %50, %cst_37 [1] : vector<16x256xf32> to vector<16xf32>
      %52 = vector.shape_cast %51 : vector<16xf32> to vector<16x1xf32>
      %cst_38 = arith.constant 2.560000e+02 : f32
      %53 = vector.broadcast %cst_38 : f32 to vector<16x1xf32>
      %54 = arith.divf %52, %53 : vector<16x1xf32>
      %55 = vector.broadcast %54 : vector<16x1xf32> to vector<16x256xf32>
      %56 = arith.subf %50, %55 : vector<16x256xf32>
      %57 = arith.mulf %56, %56 : vector<16x256xf32>
      %cst_39 = arith.constant dense<0.000000e+00> : vector<16xf32>
      %58 = vector.multi_reduction <add>, %57, %cst_39 [1] : vector<16x256xf32> to vector<16xf32>
      %59 = vector.shape_cast %58 : vector<16xf32> to vector<16x1xf32>
      %cst_40 = arith.constant 2.560000e+02 : f32
      %60 = vector.broadcast %cst_40 : f32 to vector<16x1xf32>
      %61 = arith.divf %59, %60 : vector<16x1xf32>
      %62 = vector.broadcast %54 : vector<16x1xf32> to vector<16x256xf32>
      %63 = arith.subf %50, %62 : vector<16x256xf32>
      %cst_41 = arith.constant 9.99999974E-6 : f32
      %64 = vector.broadcast %cst_41 : f32 to vector<16x1xf32>
      %65 = arith.addf %61, %64 : vector<16x1xf32>
      %66 = math.rsqrt %65 : vector<16x1xf32>
      %67 = vector.broadcast %66 : vector<16x1xf32> to vector<16x256xf32>
      %68 = arith.mulf %63, %67 : vector<16x256xf32>
      %c0_42 = arith.constant 0 : index
      %c0_43 = arith.constant 0 : index
      %69 = vector.load %arg8[%c0_42, %c0_43] : memref<1x256xf32, #tpu.memory_space<vmem>>, vector<1x256xf32>
      %70 = vector.broadcast %69 : vector<1x256xf32> to vector<16x256xf32>
      %71 = arith.mulf %68, %70 : vector<16x256xf32>
      %c0_44 = arith.constant 0 : index
      %c0_45 = arith.constant 0 : index
      %72 = vector.load %arg9[%c0_44, %c0_45] : memref<1x256xf32, #tpu.memory_space<vmem>>, vector<1x256xf32>
      %73 = vector.broadcast %72 : vector<1x256xf32> to vector<16x256xf32>
      %74 = arith.addf %71, %73 : vector<16x256xf32>
      %c0_46 = arith.constant 0 : index
      %c0_47 = arith.constant 0 : index
      %c0_48 = arith.constant 0 : index
      %75 = vector.load %arg10[%c0_46, %c0_47, %c0_48] : memref<1x16x256xf32, #tpu.memory_space<vmem>>, vector<1x16x256xf32>
      %76 = vector.shape_cast %75 : vector<1x16x256xf32> to vector<16x256xf32>
      %77 = vector.shape_cast %74 : vector<16x256xf32> to vector<1x16x256xf32>
      tpu.vector_store %arg10[%c0_46, %c0_47, %c0_48], %77 {strides = array<i32>} : memref<1x16x256xf32, #tpu.memory_space<vmem>>, vector<1x16x256xf32>,
    } else {
    }
    return
  }
  func.func @transform_0(%arg0: i32, %arg1: i32) -> (i32, i32, i32) {
    %c0_i32 = arith.constant 0 : i32
    %c0_i32_0 = arith.constant 0 : i32
    return %arg0, %c0_i32, %arg1 : i32, i32, i32
  }
  func.func @transform_1(%arg0: i32, %arg1: i32) -> (i32, i32, i32) {
    %c0_i32 = arith.constant 0 : i32
    %c0_i32_0 = arith.constant 0 : i32
    return %arg0, %c0_i32, %arg1 : i32, i32, i32
  }
  func.func @transform_2(%arg0: i32, %arg1: i32) -> (i32, i32, i32) {
    %c0_i32 = arith.constant 0 : i32
    %c0_i32_0 = arith.constant 0 : i32
    return %arg0, %c0_i32, %arg1 : i32, i32, i32
  }
  func.func @transform_3(%arg0: i32, %arg1: i32) -> (i32, i32) {
    %c0_i32 = arith.constant 0 : i32
    %c0_i32_0 = arith.constant 0 : i32
    %c0_i32_1 = arith.constant 0 : i32
    return %c0_i32, %c0_i32_0 : i32, i32
  }
  func.func @transform_4(%arg0: i32, %arg1: i32) -> (i32, i32) {
    %c0_i32 = arith.constant 0 : i32
    %c0_i32_0 = arith.constant 0 : i32
    %c0_i32_1 = arith.constant 0 : i32
    return %c0_i32, %c0_i32_0 : i32, i32
  }
  func.func @transform_5(%arg0: i32, %arg1: i32) -> (i32, i32) {
    %c0_i32 = arith.constant 0 : i32
    %c0_i32_0 = arith.constant 0 : i32
    %c0_i32_1 = arith.constant 0 : i32
    return %c0_i32, %c0_i32_0 : i32, i32
  }
  func.func @transform_6(%arg0: i32, %arg1: i32) -> (i32, i32) {
    %c0_i32 = arith.constant 0 : i32
    %c0_i32_0 = arith.constant 0 : i32
    %c0_i32_1 = arith.constant 0 : i32
    return %c0_i32, %c0_i32_0 : i32, i32
  }
  func.func @transform_7(%arg0: i32, %arg1: i32) -> (i32, i32) {
    %c0_i32 = arith.constant 0 : i32
    %c0_i32_0 = arith.constant 0 : i32
    %c0_i32_1 = arith.constant 0 : i32
    return %c0_i32, %c0_i32_0 : i32, i32
  }
  func.func @transform_8(%arg0: i32, %arg1: i32) -> (i32, i32, i32) {
    %c0_i32 = arith.constant 0 : i32
    %c0_i32_0 = arith.constant 0 : i32
    %c0_i32_1 = arith.constant 0 : i32
    return %arg0, %c0_i32, %c0_i32_0 : i32, i32, i32
  }
}

module attributes {stable_mosaic.version = 11 : i64} {
  func.func @_query_head_kernel(%arg0: i32, %arg1: memref<16x128xbf16, #tpu.memory_space<vmem>>, %arg2: memref<16x1xf32, #tpu.memory_space<vmem>>, %arg3: memref<16x1xf32, #tpu.memory_space<vmem>>, %arg4: memref<128x256xbf16, #tpu.memory_space<vmem>>, %arg5: memref<1x256xf32, #tpu.memory_space<vmem>>, %arg6: memref<1x256xf32, #tpu.memory_space<vmem>>, %arg7: memref<1x256xf32, #tpu.memory_space<vmem>>, %arg8: memref<256x256xbf16, #tpu.memory_space<vmem>>, %arg9: memref<1x256xf32, #tpu.memory_space<vmem>>, %arg10: memref<256x384xbf16, #tpu.memory_space<vmem>>, %arg11: memref<1x384xf32, #tpu.memory_space<vmem>>, %arg12: memref<256x256xbf16, #tpu.memory_space<vmem>>, %arg13: memref<1x256xf32, #tpu.memory_space<vmem>>, %arg14: memref<2x384xf32, #tpu.memory_space<vmem>>, %arg15: memref<2x256xf32, #tpu.memory_space<vmem>>) attributes {dimension_semantics = [#tpu.dimension_semantics<arbitrary>], iteration_bounds = array<i64: 1>, scalar_prefetch = 0 : i64, scratch_operands = 0 : i64, tpu.core_type = #tpu.core_type<tc>, window_params = [{pipeline_mode = #tpu.pipeline_mode<synchronous>, transform_indices = @transform_0, window_bounds = array<i64: 16, 128>}, {pipeline_mode = #tpu.pipeline_mode<synchronous>, transform_indices = @transform_1, window_bounds = array<i64: 16, 1>}, {pipeline_mode = #tpu.pipeline_mode<synchronous>, transform_indices = @transform_2, window_bounds = array<i64: 16, 1>}, {pipeline_mode = #tpu.pipeline_mode<synchronous>, transform_indices = @transform_3, window_bounds = array<i64: 128, 256>}, {pipeline_mode = #tpu.pipeline_mode<synchronous>, transform_indices = @transform_4, window_bounds = array<i64: 1, 256>}, {pipeline_mode = #tpu.pipeline_mode<synchronous>, transform_indices = @transform_5, window_bounds = array<i64: 1, 256>}, {pipeline_mode = #tpu.pipeline_mode<synchronous>, transform_indices = @transform_6, window_bounds = array<i64: 1, 256>}, {pipeline_mode = #tpu.pipeline_mode<synchronous>, transform_indices = @transform_7, window_bounds = array<i64: 256, 256>}, {pipeline_mode = #tpu.pipeline_mode<synchronous>, transform_indices = @transform_8, window_bounds = array<i64: 1, 256>}, {pipeline_mode = #tpu.pipeline_mode<synchronous>, transform_indices = @transform_9, window_bounds = array<i64: 256, 384>}, {pipeline_mode = #tpu.pipeline_mode<synchronous>, transform_indices = @transform_10, window_bounds = array<i64: 1, 384>}, {pipeline_mode = #tpu.pipeline_mode<synchronous>, transform_indices = @transform_11, window_bounds = array<i64: 256, 256>}, {pipeline_mode = #tpu.pipeline_mode<synchronous>, transform_indices = @transform_12, window_bounds = array<i64: 1, 256>}, {pipeline_mode = #tpu.pipeline_mode<synchronous>, transform_indices = @transform_13, window_bounds = array<i64: 2, 384>}, {pipeline_mode = #tpu.pipeline_mode<synchronous>, transform_indices = @transform_14, window_bounds = array<i64: 2, 256>}]} {
    %c0 = arith.constant 0 : index
    %c0_0 = arith.constant 0 : index
    %0 = vector.load %arg1[%c0, %c0_0] : memref<16x128xbf16, #tpu.memory_space<vmem>>, vector<16x128xbf16>
    %c0_1 = arith.constant 0 : index
    %c0_2 = arith.constant 0 : index
    %1 = vector.load %arg4[%c0_1, %c0_2] : memref<128x256xbf16, #tpu.memory_space<vmem>>, vector<128x256xbf16>
    %cst = arith.constant dense<0.000000e+00> : vector<16x256xf32>
    %2 = tpu.matmul %0, %1, %cst {dimension_numbers = #tpu.dot_dimension_numbers<[1], [0], [0], [1], [0, 0, 1, 1], [], []>} : vector<16x128xbf16>, vector<128x256xbf16>, vector<16x256xf32> -> vector<16x256xf32>
    %c0_3 = arith.constant 0 : index
    %c0_4 = arith.constant 0 : index
    %3 = vector.load %arg5[%c0_3, %c0_4] : memref<1x256xf32, #tpu.memory_space<vmem>>, vector<1x256xf32>
    %4 = vector.broadcast %3 : vector<1x256xf32> to vector<16x256xf32>
    %5 = arith.addf %2, %4 : vector<16x256xf32>
    %6 = math.absf %5 : vector<16x256xf32>
    %cst_5 = arith.constant dense<0.000000e+00> : vector<16xf32>
    %7 = vector.multi_reduction <add>, %6, %cst_5 [1] : vector<16x256xf32> to vector<16xf32>
    %8 = vector.shape_cast %7 : vector<16xf32> to vector<16x1xf32>
    %cst_6 = arith.constant 0.000000e+00 : f32
    %9 = vector.broadcast %cst_6 : f32 to vector<16x1xf32>
    %10 = arith.cmpf ogt, %8, %9 : vector<16x1xf32>
    %11 = arith.extui %10 : vector<16x1xi1> to vector<16x1xi32>
    %12 = arith.sitofp %11 : vector<16x1xi32> to vector<16x1xf32>
    %cst_7 = arith.constant dense<0.000000e+00> : vector<16xf32>
    %13 = vector.multi_reduction <add>, %5, %cst_7 [1] : vector<16x256xf32> to vector<16xf32>
    %14 = vector.shape_cast %13 : vector<16xf32> to vector<16x1xf32>
    %cst_8 = arith.constant 2.560000e+02 : f32
    %15 = vector.broadcast %cst_8 : f32 to vector<16x1xf32>
    %16 = arith.divf %14, %15 : vector<16x1xf32>
    %17 = vector.broadcast %16 : vector<16x1xf32> to vector<16x256xf32>
    %18 = arith.subf %5, %17 : vector<16x256xf32>
    %19 = arith.mulf %18, %18 : vector<16x256xf32>
    %cst_9 = arith.constant dense<0.000000e+00> : vector<16xf32>
    %20 = vector.multi_reduction <add>, %19, %cst_9 [1] : vector<16x256xf32> to vector<16xf32>
    %21 = vector.shape_cast %20 : vector<16xf32> to vector<16x1xf32>
    %cst_10 = arith.constant 2.560000e+02 : f32
    %22 = vector.broadcast %cst_10 : f32 to vector<16x1xf32>
    %23 = arith.divf %21, %22 : vector<16x1xf32>
    %24 = vector.broadcast %16 : vector<16x1xf32> to vector<16x256xf32>
    %25 = arith.subf %5, %24 : vector<16x256xf32>
    %cst_11 = arith.constant 9.99999974E-6 : f32
    %26 = vector.broadcast %cst_11 : f32 to vector<16x1xf32>
    %27 = arith.addf %23, %26 : vector<16x1xf32>
    %28 = math.rsqrt %27 : vector<16x1xf32>
    %29 = vector.broadcast %28 : vector<16x1xf32> to vector<16x256xf32>
    %30 = arith.mulf %25, %29 : vector<16x256xf32>
    %c0_12 = arith.constant 0 : index
    %c0_13 = arith.constant 0 : index
    %31 = vector.load %arg6[%c0_12, %c0_13] : memref<1x256xf32, #tpu.memory_space<vmem>>, vector<1x256xf32>
    %32 = vector.broadcast %31 : vector<1x256xf32> to vector<16x256xf32>
    %33 = arith.mulf %30, %32 : vector<16x256xf32>
    %c0_14 = arith.constant 0 : index
    %c0_15 = arith.constant 0 : index
    %34 = vector.load %arg7[%c0_14, %c0_15] : memref<1x256xf32, #tpu.memory_space<vmem>>, vector<1x256xf32>
    %35 = vector.broadcast %34 : vector<1x256xf32> to vector<16x256xf32>
    %36 = arith.addf %33, %35 : vector<16x256xf32>
    %c0_16 = arith.constant 0 : index
    %c0_17 = arith.constant 0 : index
    %37 = vector.load %arg2[%c0_16, %c0_17] : memref<16x1xf32, #tpu.memory_space<vmem>>, vector<16x1xf32>
    %38 = arith.mulf %37, %12 : vector<16x1xf32>
    %39 = vector.broadcast %38 : vector<16x1xf32> to vector<16x256xf32>
    %40 = arith.mulf %36, %39 : vector<16x256xf32>
    %41 = vector.shape_cast %40 : vector<16x256xf32> to vector<2x8x256xf32>
    %cst_18 = arith.constant dense<0.000000e+00> : vector<2x256xf32>
    %42 = vector.multi_reduction <add>, %41, %cst_18 [1] : vector<2x8x256xf32> to vector<2x256xf32>
    %43 = vector.shape_cast %38 : vector<16x1xf32> to vector<2x8x1xf32>
    %cst_19 = arith.constant dense<0.000000e+00> : vector<2x1xf32>
    %44 = vector.multi_reduction <add>, %43, %cst_19 [1] : vector<2x8x1xf32> to vector<2x1xf32>
    %c0_20 = arith.constant 0 : index
    %c0_21 = arith.constant 0 : index
    %45 = vector.load %arg3[%c0_20, %c0_21] : memref<16x1xf32, #tpu.memory_space<vmem>>, vector<16x1xf32>
    %46 = arith.mulf %12, %45 : vector<16x1xf32>
    %47 = vector.broadcast %46 : vector<16x1xf32> to vector<16x256xf32>
    %48 = arith.mulf %36, %47 : vector<16x256xf32>
    %cst_22 = arith.constant dense<0.000000e+00> : vector<256xf32>
    %49 = vector.multi_reduction <add>, %48, %cst_22 [0] : vector<16x256xf32> to vector<256xf32>
    %50 = vector.shape_cast %49 : vector<256xf32> to vector<1x256xf32>
    %cst_23 = arith.constant dense<0.000000e+00> : vector<1xf32>
    %51 = vector.multi_reduction <add>, %46, %cst_23 [0] : vector<16x1xf32> to vector<1xf32>
    %52 = vector.shape_cast %51 : vector<1xf32> to vector<1x1xf32>
    %53 = vector.broadcast %52 : vector<1x1xf32> to vector<2x1xf32>
    %54 = arith.addf %44, %53 : vector<2x1xf32>
    %cst_24 = arith.constant 9.99999997E-7 : f32
    %55 = vector.broadcast %cst_24 : f32 to vector<2x1xf32>
    %56 = arith.maximumf %54, %55 : vector<2x1xf32>
    %57 = tpu.reciprocal %56 {approx = true} : vector<2x1xf32> -> vector<2x1xf32>
    %58 = vector.broadcast %50 : vector<1x256xf32> to vector<2x256xf32>
    %59 = arith.addf %42, %58 : vector<2x256xf32>
    %60 = vector.broadcast %57 : vector<2x1xf32> to vector<2x256xf32>
    %61 = arith.mulf %59, %60 : vector<2x256xf32>
    %62 = vector.extract_strided_slice %36 {offsets = [0, 0], sizes = [1, 256], strides = [1, 1]} : vector<16x256xf32> to vector<1x256xf32>
    %63 = vector.broadcast %62 : vector<1x256xf32> to vector<2x256xf32>
    %64 = arith.addf %63, %61 : vector<2x256xf32>
    %65 = arith.truncf %64 : vector<2x256xf32> to vector<2x256xbf16>
    %c0_25 = arith.constant 0 : index
    %c0_26 = arith.constant 0 : index
    %66 = vector.load %arg8[%c0_25, %c0_26] : memref<256x256xbf16, #tpu.memory_space<vmem>>, vector<256x256xbf16>
    %cst_27 = arith.constant dense<0.000000e+00> : vector<2x256xf32>
    %67 = tpu.matmul %65, %66, %cst_27 {dimension_numbers = #tpu.dot_dimension_numbers<[1], [0], [0], [1], [0, 0, 1, 1], [], []>} : vector<2x256xbf16>, vector<256x256xbf16>, vector<2x256xf32> -> vector<2x256xf32>
    %c0_28 = arith.constant 0 : index
    %c0_29 = arith.constant 0 : index
    %68 = vector.load %arg9[%c0_28, %c0_29] : memref<1x256xf32, #tpu.memory_space<vmem>>, vector<1x256xf32>
    %69 = vector.broadcast %68 : vector<1x256xf32> to vector<2x256xf32>
    %70 = arith.addf %67, %69 : vector<2x256xf32>
    %cst_30 = arith.constant 0.000000e+00 : f32
    %71 = vector.broadcast %cst_30 : f32 to vector<2x256xf32>
    %72 = arith.maximumf %70, %71 : vector<2x256xf32>
    %73 = arith.truncf %72 : vector<2x256xf32> to vector<2x256xbf16>
    %c0_31 = arith.constant 0 : index
    %c0_32 = arith.constant 0 : index
    %74 = vector.load %arg10[%c0_31, %c0_32] : memref<256x384xbf16, #tpu.memory_space<vmem>>, vector<256x384xbf16>
    %cst_33 = arith.constant dense<0.000000e+00> : vector<2x384xf32>
    %75 = tpu.matmul %73, %74, %cst_33 {dimension_numbers = #tpu.dot_dimension_numbers<[1], [0], [0], [1], [0, 0, 1, 1], [], []>} : vector<2x256xbf16>, vector<256x384xbf16>, vector<2x384xf32> -> vector<2x384xf32>
    %c0_34 = arith.constant 0 : index
    %c0_35 = arith.constant 0 : index
    %76 = vector.load %arg11[%c0_34, %c0_35] : memref<1x384xf32, #tpu.memory_space<vmem>>, vector<1x384xf32>
    %77 = vector.broadcast %76 : vector<1x384xf32> to vector<2x384xf32>
    %78 = arith.addf %75, %77 : vector<2x384xf32>
    %c0_36 = arith.constant 0 : index
    %c0_37 = arith.constant 0 : index
    %79 = vector.load %arg14[%c0_36, %c0_37] : memref<2x384xf32, #tpu.memory_space<vmem>>, vector<2x384xf32>
    tpu.vector_store %arg14[%c0_36, %c0_37], %78 {strides = array<i32>} : memref<2x384xf32, #tpu.memory_space<vmem>>, vector<2x384xf32>,
    %c0_38 = arith.constant 0 : index
    %c0_39 = arith.constant 0 : index
    %80 = vector.load %arg12[%c0_38, %c0_39] : memref<256x256xbf16, #tpu.memory_space<vmem>>, vector<256x256xbf16>
    %cst_40 = arith.constant dense<0.000000e+00> : vector<2x256xf32>
    %81 = tpu.matmul %65, %80, %cst_40 {dimension_numbers = #tpu.dot_dimension_numbers<[1], [0], [0], [1], [0, 0, 1, 1], [], []>} : vector<2x256xbf16>, vector<256x256xbf16>, vector<2x256xf32> -> vector<2x256xf32>
    %c0_41 = arith.constant 0 : index
    %c0_42 = arith.constant 0 : index
    %82 = vector.load %arg13[%c0_41, %c0_42] : memref<1x256xf32, #tpu.memory_space<vmem>>, vector<1x256xf32>
    %83 = vector.broadcast %82 : vector<1x256xf32> to vector<2x256xf32>
    %84 = arith.addf %81, %83 : vector<2x256xf32>
    %c0_43 = arith.constant 0 : index
    %c0_44 = arith.constant 0 : index
    %85 = vector.load %arg15[%c0_43, %c0_44] : memref<2x256xf32, #tpu.memory_space<vmem>>, vector<2x256xf32>
    tpu.vector_store %arg15[%c0_43, %c0_44], %84 {strides = array<i32>} : memref<2x256xf32, #tpu.memory_space<vmem>>, vector<2x256xf32>,
    return
  }
  func.func @transform_0(%arg0: i32) -> (i32, i32) {
    %c0_i32 = arith.constant 0 : i32
    %c0_i32_0 = arith.constant 0 : i32
    %c0_i32_1 = arith.constant 0 : i32
    return %c0_i32, %c0_i32_0 : i32, i32
  }
  func.func @transform_1(%arg0: i32) -> (i32, i32) {
    %c0_i32 = arith.constant 0 : i32
    %c0_i32_0 = arith.constant 0 : i32
    %c0_i32_1 = arith.constant 0 : i32
    return %c0_i32, %c0_i32_0 : i32, i32
  }
  func.func @transform_2(%arg0: i32) -> (i32, i32) {
    %c0_i32 = arith.constant 0 : i32
    %c0_i32_0 = arith.constant 0 : i32
    %c0_i32_1 = arith.constant 0 : i32
    return %c0_i32, %c0_i32_0 : i32, i32
  }
  func.func @transform_3(%arg0: i32) -> (i32, i32) {
    %c0_i32 = arith.constant 0 : i32
    %c0_i32_0 = arith.constant 0 : i32
    %c0_i32_1 = arith.constant 0 : i32
    return %c0_i32, %c0_i32_0 : i32, i32
  }
  func.func @transform_4(%arg0: i32) -> (i32, i32) {
    %c0_i32 = arith.constant 0 : i32
    %c0_i32_0 = arith.constant 0 : i32
    %c0_i32_1 = arith.constant 0 : i32
    return %c0_i32, %c0_i32_0 : i32, i32
  }
  func.func @transform_5(%arg0: i32) -> (i32, i32) {
    %c0_i32 = arith.constant 0 : i32
    %c0_i32_0 = arith.constant 0 : i32
    %c0_i32_1 = arith.constant 0 : i32
    return %c0_i32, %c0_i32_0 : i32, i32
  }
  func.func @transform_6(%arg0: i32) -> (i32, i32) {
    %c0_i32 = arith.constant 0 : i32
    %c0_i32_0 = arith.constant 0 : i32
    %c0_i32_1 = arith.constant 0 : i32
    return %c0_i32, %c0_i32_0 : i32, i32
  }
  func.func @transform_7(%arg0: i32) -> (i32, i32) {
    %c0_i32 = arith.constant 0 : i32
    %c0_i32_0 = arith.constant 0 : i32
    %c0_i32_1 = arith.constant 0 : i32
    return %c0_i32, %c0_i32_0 : i32, i32
  }
  func.func @transform_8(%arg0: i32) -> (i32, i32) {
    %c0_i32 = arith.constant 0 : i32
    %c0_i32_0 = arith.constant 0 : i32
    %c0_i32_1 = arith.constant 0 : i32
    return %c0_i32, %c0_i32_0 : i32, i32
  }
  func.func @transform_9(%arg0: i32) -> (i32, i32) {
    %c0_i32 = arith.constant 0 : i32
    %c0_i32_0 = arith.constant 0 : i32
    %c0_i32_1 = arith.constant 0 : i32
    return %c0_i32, %c0_i32_0 : i32, i32
  }
  func.func @transform_10(%arg0: i32) -> (i32, i32) {
    %c0_i32 = arith.constant 0 : i32
    %c0_i32_0 = arith.constant 0 : i32
    %c0_i32_1 = arith.constant 0 : i32
    return %c0_i32, %c0_i32_0 : i32, i32
  }
  func.func @transform_11(%arg0: i32) -> (i32, i32) {
    %c0_i32 = arith.constant 0 : i32
    %c0_i32_0 = arith.constant 0 : i32
    %c0_i32_1 = arith.constant 0 : i32
    return %c0_i32, %c0_i32_0 : i32, i32
  }
  func.func @transform_12(%arg0: i32) -> (i32, i32) {
    %c0_i32 = arith.constant 0 : i32
    %c0_i32_0 = arith.constant 0 : i32
    %c0_i32_1 = arith.constant 0 : i32
    return %c0_i32, %c0_i32_0 : i32, i32
  }
  func.func @transform_13(%arg0: i32) -> (i32, i32) {
    %c0_i32 = arith.constant 0 : i32
    %c0_i32_0 = arith.constant 0 : i32
    %c0_i32_1 = arith.constant 0 : i32
    return %c0_i32, %c0_i32_0 : i32, i32
  }
  func.func @transform_14(%arg0: i32) -> (i32, i32) {
    %c0_i32 = arith.constant 0 : i32
    %c0_i32_0 = arith.constant 0 : i32
    %c0_i32_1 = arith.constant 0 : i32
    return %c0_i32, %c0_i32_0 : i32, i32
  }
}

</mosaic_0001>

<llo_original>
// kernel: hecto_forward.4
$region0: #{hecto_forward.4}
  #allocation0 [shape = 'u32[]', space=smem, size = 0x4, offset = 0x4, fixed_abs, tag = 'smem constant byte address 0x4 - core index']
  #allocation1 [shape = 'u32[144,128]{1,0:T(1,128)}', space=vmem, size = 0x12000, scoped, tag = 'internal scratch']
  #allocation2 [shape = 'f32[128,64]{1,0:T(8,128)}', space=vmem, size = 0x10000, scoped, tag = 'scratch operand']
  #allocation3 [shape = 'f32[1,64]{1,0:T(1,128)}', space=vmem, size = 0x200, scoped, tag = 'scratch operand']
  %s0 = inlined_call_operand.vmem [shape: bf16[2,128,256], index: 0, kind: input, shape index: {}]
  %s1 = inlined_call_operand.vmem [shape: bf16[2,128,256], index: 1, kind: input, shape index: {}]
  %s2 = inlined_call_operand.vmem [shape: bf16[2,1,256], index: 2, kind: input, shape index: {}]
  %s3 = inlined_call_operand.vmem [shape: bf16[256,64], index: 3, kind: input, shape index: {}]
  %s4 = inlined_call_operand.vmem [shape: bf16[128,256], index: 4, kind: input, shape index: {}]
  %s5 = inlined_call_operand.vmem [shape: f32[1,256], index: 5, kind: input, shape index: {}]
  %s6 = inlined_call_operand.vmem [shape: f32[1,256], index: 6, kind: input, shape index: {}]
  %s7 = inlined_call_operand.vmem [shape: f32[1,256], index: 7, kind: input, shape index: {}]
  %s8 = inlined_call_operand.hbm [shape: f32[2,64,256], index: 8, kind: output, shape index: {}]
  %s9 = sld [smem:[#allocation0]]
  $region73: #{hecto_forward.4} parent=0
    _
  %s11 = ssub.s32 1, %s9
  %s12 = scalar_select 0, %s11, %s9
  $region1: #{hecto_forward.4} parent=0
    #allocation4 [shape = 'u8[131072]{0}', space=vmem, size = 0x20000, scoped, tag = 'output window, operand 0']
    #allocation5 [shape = 's32[2]{0}', space=sflag, size = 0x8, scoped, tag = 'scoped memory for hecto_forward.4']
    %13 = vsyncpa [#allocation5], 0
    %s14 = scalar_lea.sflag [#allocation5], 1
    %15 = vsyncpa %s14, 0
    loop: start=0, step=1, limit=4
    $region2: #{hecto_forward.4} parent=1 // loop_pre_header
      _
    $region3: #{hecto_forward.4} parent=1 // loop_header
      %s17 = sphi 0, %s21
      %p18 = scmp.ge.s32.totalorder %s17, 4
      %s24 = sphi 0, %s36
      %s25 = sphi 0, %s32
      %s26 = sphi 0, %s24
      %s27 = sphi 0, %s25
      %s28 = sphi 0, %s26
      %s29 = sphi 0, %s27
      %s41 = sphi 0, %s43
      %s44 = sphi 0, %s41
      %s45 = sphi 0, %s44
      %s61 = sphi 0, %s45
      %s69 = sphi 0, %s71
      %s72 = sphi 0, %s69
      %s73 = sphi 0, %s72
      %s89 = sphi 0, %s73
      %s97 = sphi 0, %s99
      %s100 = sphi 0, %s97
      %s101 = sphi 0, %s100
      %s117 = sphi 0, %s101
      %s121 = sphi 0, %s121
      %s123 = sphi 0, %s121
      %s124 = sphi 0, %s123
      %s138 = sphi 0, %s124
      %s142 = sphi 0, %s142
      %s144 = sphi 0, %s142
      %s145 = sphi 0, %s144
      %s159 = sphi 0, %s145
      %s163 = sphi 0, %s163
      %s165 = sphi 0, %s163
      %s166 = sphi 0, %s165
      %s180 = sphi 0, %s166
      %s184 = sphi 0, %s184
      %s186 = sphi 0, %s184
      %s187 = sphi 0, %s186
      %s201 = sphi 0, %s187
      %s205 = sphi 0, %s205
      %s207 = sphi 0, %s205
      %s208 = sphi 0, %s207
      %s222 = sphi 0, %s208
      %s228 = sphi 0, %s230
      %s231 = sphi 0, %s228
      %s232 = sphi 0, %s231
      %s248 = sphi 0, %s232
    $region4: #{hecto_forward.4} parent=1 // loop_header_branch
      %20 = sbr.rel (%p18) target = $region8
    $region5: #{hecto_forward.4} parent=1 // loop_body
      %s22 = ssub.s32 %s17, 1
      %s23 = ssub.s32 %s17, 2
      %s30 = sadd.s32 1, %s25
      %p31 = scmp.ge.s32.totalorder %s30, 1
      %s32 = scalar_select %p31, 0, %s30
      %s33 = sadd.s32 1, %s24
      %s34 = scalar_select %p31, %s33, %s24
      %p35 = scmp.ge.s32.totalorder %s34, 2
      %s36 = scalar_select %p35, 0, %s34
      %s37 = ssub.s32 %s24, %s36
      %s38 = ssub.s32 %s25, %s32
      %s39 = sor.u32 %s37, %s38
      %p40 = scmp.eq.s32.totalorder %s39, 0
      %s42 = sadd.s32 %s41, 1
      %s43 = scalar_select %p40, %s41, %s42
      %p46 = pneg %p40
      %p47 = scmp.eq.s32.totalorder %s17, 1
      %p48 = por %p46, %p47
      %p49 = scmp.ne.s32.totalorder %s41, %s44
      %p50 = scmp.eq.s32.totalorder %s17, 0
      %p51 = por %p49, %p50
      %p52 = scmp.ne.s32.totalorder %s41, %s44
      %p53 = scmp.eq.s32.totalorder %s22, 1
      %p54 = por %p52, %p53
      %p55 = scmp.ne.s32.totalorder %s44, %s45
      %p56 = scmp.eq.s32.totalorder %s22, 0
      %p57 = por %p55, %p56
      %p58 = scmp.ne.s32.totalorder %s44, %s45
      %p59 = scmp.eq.s32.totalorder %s23, 1
      %p60 = por %p58, %p59
      %p62 = scmp.ne.s32.totalorder %s45, %s61
      %p63 = scmp.eq.s32.totalorder %s23, 0
      %p64 = por %p62, %p63
      %s65 = ssub.s32 %s24, %s36
      %s66 = ssub.s32 %s25, %s32
      %s67 = sor.u32 %s65, %s66
      %p68 = scmp.eq.s32.totalorder %s67, 0
      %s70 = sadd.s32 %s69, 1
      %s71 = scalar_select %p68, %s69, %s70
      %p74 = pneg %p68
      %p75 = scmp.eq.s32.totalorder %s17, 1
      %p76 = por %p74, %p75
      %p77 = scmp.ne.s32.totalorder %s69, %s72
      %p78 = scmp.eq.s32.totalorder %s17, 0
      %p79 = por %p77, %p78
      %p80 = scmp.ne.s32.totalorder %s69, %s72
      %p81 = scmp.eq.s32.totalorder %s22, 1
      %p82 = por %p80, %p81
      %p83 = scmp.ne.s32.totalorder %s72, %s73
      %p84 = scmp.eq.s32.totalorder %s22, 0
      %p85 = por %p83, %p84
      %p86 = scmp.ne.s32.totalorder %s72, %s73
      %p87 = scmp.eq.s32.totalorder %s23, 1
      %p88 = por %p86, %p87
      %p90 = scmp.ne.s32.totalorder %s73, %s89
      %p91 = scmp.eq.s32.totalorder %s23, 0
      %p92 = por %p90, %p91
      %s93 = ssub.s32 %s24, %s36
      %s94 = ssub.s32 %s25, %s32
      %s95 = sor.u32 %s93, %s94
      %p96 = scmp.eq.s32.totalorder %s95, 0
      %s98 = sadd.s32 %s97, 1
      %s99 = scalar_select %p96, %s97, %s98
      %p102 = pneg %p96
      %p103 = scmp.eq.s32.totalorder %s17, 1
      %p104 = por %p102, %p103
      %p105 = scmp.ne.s32.totalorder %s97, %s100
      %p106 = scmp.eq.s32.totalorder %s17, 0
      %p107 = por %p105, %p106
      %p108 = scmp.ne.s32.totalorder %s97, %s100
      %p109 = scmp.eq.s32.totalorder %s22, 1
      %p110 = por %p108, %p109
      %p111 = scmp.ne.s32.totalorder %s100, %s101
      %p112 = scmp.eq.s32.totalorder %s22, 0
      %p113 = por %p111, %p112
      %p114 = scmp.ne.s32.totalorder %s100, %s101
      %p115 = scmp.eq.s32.totalorder %s23, 1
      %p116 = por %p114, %p115
      %p118 = scmp.ne.s32.totalorder %s101, %s117
      %p119 = scmp.eq.s32.totalorder %s23, 0
      %p120 = por %p118, %p119
      %s122 = sadd.s32 %s121, 1
      %p125 = scmp.eq.s32.totalorder %s17, 1
      %p126 = scmp.ne.s32.totalorder %s121, %s123
      %p127 = scmp.eq.s32.totalorder %s17, 0
      %p128 = por %p126, %p127
      %p129 = scmp.ne.s32.totalorder %s121, %s123
      %p130 = scmp.eq.s32.totalorder %s22, 1
      %p131 = por %p129, %p130
      %p132 = scmp.ne.s32.totalorder %s123, %s124
      %p133 = scmp.eq.s32.totalorder %s22, 0
      %p134 = por %p132, %p133
      %p135 = scmp.ne.s32.totalorder %s123, %s124
      %p136 = scmp.eq.s32.totalorder %s23, 1
      %p137 = por %p135, %p136
      %p139 = scmp.ne.s32.totalorder %s124, %s138
      %p140 = scmp.eq.s32.totalorder %s23, 0
      %p141 = por %p139, %p140
      %s143 = sadd.s32 %s142, 1
      %p146 = scmp.eq.s32.totalorder %s17, 1
      %p147 = scmp.ne.s32.totalorder %s142, %s144
      %p148 = scmp.eq.s32.totalorder %s17, 0
      %p149 = por %p147, %p148
      %p150 = scmp.ne.s32.totalorder %s142, %s144
      %p151 = scmp.eq.s32.totalorder %s22, 1
      %p152 = por %p150, %p151
      %p153 = scmp.ne.s32.totalorder %s144, %s145
      %p154 = scmp.eq.s32.totalorder %s22, 0
      %p155 = por %p153, %p154
      %p156 = scmp.ne.s32.totalorder %s144, %s145
      %p157 = scmp.eq.s32.totalorder %s23, 1
      %p158 = por %p156, %p157
      %p160 = scmp.ne.s32.totalorder %s145, %s159
      %p161 = scmp.eq.s32.totalorder %s23, 0
      %p162 = por %p160, %p161
      %s164 = sadd.s32 %s163, 1
      %p167 = scmp.eq.s32.totalorder %s17, 1
      %p168 = scmp.ne.s32.totalorder %s163, %s165
      %p169 = scmp.eq.s32.totalorder %s17, 0
      %p170 = por %p168, %p169
      %p171 = scmp.ne.s32.totalorder %s163, %s165
      %p172 = scmp.eq.s32.totalorder %s22, 1
      %p173 = por %p171, %p172
      %p174 = scmp.ne.s32.totalorder %s165, %s166
      %p175 = scmp.eq.s32.totalorder %s22, 0
      %p176 = por %p174, %p175
      %p177 = scmp.ne.s32.totalorder %s165, %s166
      %p178 = scmp.eq.s32.totalorder %s23, 1
      %p179 = por %p177, %p178
      %p181 = scmp.ne.s32.totalorder %s166, %s180
      %p182 = scmp.eq.s32.totalorder %s23, 0
      %p183 = por %p181, %p182
      %s185 = sadd.s32 %s184, 1
      %p188 = scmp.eq.s32.totalorder %s17, 1
      %p189 = scmp.ne.s32.totalorder %s184, %s186
      %p190 = scmp.eq.s32.totalorder %s17, 0
      %p191 = por %p189, %p190
      %p192 = scmp.ne.s32.totalorder %s184, %s186
      %p193 = scmp.eq.s32.totalorder %s22, 1
      %p194 = por %p192, %p193
      %p195 = scmp.ne.s32.totalorder %s186, %s187
      %p196 = scmp.eq.s32.totalorder %s22, 0
      %p197 = por %p195, %p196
      %p198 = scmp.ne.s32.totalorder %s186, %s187
      %p199 = scmp.eq.s32.totalorder %s23, 1
      %p200 = por %p198, %p199
      %p202 = scmp.ne.s32.totalorder %s187, %s201
      %p203 = scmp.eq.s32.totalorder %s23, 0
      %p204 = por %p202, %p203
      %s206 = sadd.s32 %s205, 1
      %p209 = scmp.eq.s32.totalorder %s17, 1
      %p210 = scmp.ne.s32.totalorder %s205, %s207
      %p211 = scmp.eq.s32.totalorder %s17, 0
      %p212 = por %p210, %p211
      %p213 = scmp.ne.s32.totalorder %s205, %s207
      %p214 = scmp.eq.s32.totalorder %s22, 1
      %p215 = por %p213, %p214
      %p216 = scmp.ne.s32.totalorder %s207, %s208
      %p217 = scmp.eq.s32.totalorder %s22, 0
      %p218 = por %p216, %p217
      %p219 = scmp.ne.s32.totalorder %s207, %s208
      %p220 = scmp.eq.s32.totalorder %s23, 1
      %p221 = por %p219, %p220
      %p223 = scmp.ne.s32.totalorder %s208, %s222
      %p224 = scmp.eq.s32.totalorder %s23, 0
      %p225 = por %p223, %p224
      %s226 = ssub.s32 %s24, %s36
      %p227 = scmp.eq.s32.totalorder %s226, 0
      %s229 = sadd.s32 %s228, 1
      %s230 = scalar_select %p227, %s228, %s229
      %p233 = pneg %p227
      %p234 = scmp.eq.s32.totalorder %s17, 1
      %p235 = por %p233, %p234
      %p236 = scmp.ne.s32.totalorder %s228, %s231
      %p237 = scmp.eq.s32.totalorder %s17, 0
      %p238 = por %p236, %p237
      %p239 = scmp.ne.s32.totalorder %s228, %s231
      %p240 = scmp.eq.s32.totalorder %s22, 1
      %p241 = por %p239, %p240
      %p242 = scmp.ne.s32.totalorder %s231, %s232
      %p243 = scmp.eq.s32.totalorder %s22, 0
      %p244 = por %p242, %p243
      %p245 = scmp.ne.s32.totalorder %s231, %s232
      %p246 = scmp.eq.s32.totalorder %s23, 1
      %p247 = por %p245, %p246
      %p249 = scmp.ne.s32.totalorder %s232, %s248
      %p250 = scmp.eq.s32.totalorder %s23, 0
      %p251 = por %p249, %p250
      %p252 = scmp.le.s32.totalorder 1, %s17
      %p253 = scmp.lt.s32.totalorder %s17, 3
      %p254 = pnand %p252, %p253
      %p255 = pneg %p254
      // Predicated region
      $region9: #{hecto_forward.4} parent=5 // pred_check
        _
      $region10: #{hecto_forward.4} parent=5 // pred_check_branch
        %257 = sbr.rel (%p254) target = $region12
      $region11: #{hecto_forward.4} parent=5 // pred_region
        %s258 = ssub.s32 %s17, 1
        // Predicated region
        $region13: #{hecto_forward.4} parent=11 // pred_check
          %p259 = pneg %p134
        $region14: #{hecto_forward.4} parent=11 // pred_check_branch
          %261 = sbr.rel (%p259) target = $region16
        $region15: #{hecto_forward.4} parent=11 // pred_region
          _
        $region16: #{hecto_forward.4} parent=11 // pred_fallthru
          _
        // Predicated region
        $region17: #{hecto_forward.4} parent=11 // pred_check
          %p262 = pneg %p155
        $region18: #{hecto_forward.4} parent=11 // pred_check_branch
          %264 = sbr.rel (%p262) target = $region20
        $region19: #{hecto_forward.4} parent=11 // pred_region
          _
        $region20: #{hecto_forward.4} parent=11 // pred_fallthru
          _
        // Predicated region
        $region21: #{hecto_forward.4} parent=11 // pred_check
          %p265 = pneg %p176
        $region22: #{hecto_forward.4} parent=11 // pred_check_branch
          %267 = sbr.rel (%p265) target = $region24
        $region23: #{hecto_forward.4} parent=11 // pred_region
          _
        $region24: #{hecto_forward.4} parent=11 // pred_fallthru
          _
        // Predicated region
        $region25: #{hecto_forward.4} parent=11 // pred_check
          %p268 = pneg %p197
        $region26: #{hecto_forward.4} parent=11 // pred_check_branch
          %270 = sbr.rel (%p268) target = $region28
        $region27: #{hecto_forward.4} parent=11 // pred_region
          _
        $region28: #{hecto_forward.4} parent=11 // pred_fallthru
          _
        // Predicated region
        $region29: #{hecto_forward.4} parent=11 // pred_check
          %p271 = pneg %p218
        $region30: #{hecto_forward.4} parent=11 // pred_check_branch
          %273 = sbr.rel (%p271) target = $region32
        $region31: #{hecto_forward.4} parent=11 // pred_region
          _
        $region32: #{hecto_forward.4} parent=11 // pred_fallthru
          _
      $region12: #{hecto_forward.4} parent=5 // pred_fallthru
        _
      %p274 = scmp.lt.s32.totalorder %s17, 2
      // Predicated region
      $region33: #{hecto_forward.4} parent=5 // pred_check
        %p275 = pneg %p274
      $region34: #{hecto_forward.4} parent=5 // pred_check_branch
        %277 = sbr.rel (%p275) target = $region36
      $region35: #{hecto_forward.4} parent=5 // pred_region
        // Predicated region
        $region37: #{hecto_forward.4} parent=35 // pred_check
          %p278 = pneg %p51
        $region38: #{hecto_forward.4} parent=35 // pred_check_branch
          %280 = sbr.rel (%p278) target = $region40
        $region39: #{hecto_forward.4} parent=35 // pred_region
          %s281 = smul.u32 2, %s25
          %p282 = scmp.lt.s32.totalorder %s24, 1
          %s283 = scalar_select %p282, %s24, 1
          %p284 = scmp.lt.s32.totalorder %s281, 1
          %s285 = scalar_select %p284, %s281, 1
          %s286 = smul.addr %s283, 32
          %s287 = sadd.s32 %s285, %s286
          %s288 = smul.addr %s287, 4
          %s289 = scalar_lea.vmem %s0, %s288
          %s290 = smul.u32 2, %s25
        $region40: #{hecto_forward.4} parent=35 // pred_fallthru
          _
        // Predicated region
        $region41: #{hecto_forward.4} parent=35 // pred_check
          %p291 = pneg %p79
        $region42: #{hecto_forward.4} parent=35 // pred_check_branch
          %293 = sbr.rel (%p291) target = $region44
        $region43: #{hecto_forward.4} parent=35 // pred_region
          %s294 = smul.u32 2, %s25
          %p295 = scmp.lt.s32.totalorder %s24, 1
          %s296 = scalar_select %p295, %s24, 1
          %p297 = scmp.lt.s32.totalorder %s294, 1
          %s298 = scalar_select %p297, %s294, 1
          %s299 = smul.addr %s296, 32
          %s300 = sadd.s32 %s298, %s299
          %s301 = smul.addr %s300, 4
          %s302 = scalar_lea.vmem %s1, %s301
          %s303 = smul.u32 2, %s25
        $region44: #{hecto_forward.4} parent=35 // pred_fallthru
          _
        // Predicated region
        $region45: #{hecto_forward.4} parent=35 // pred_check
          %p304 = pneg %p107
        $region46: #{hecto_forward.4} parent=35 // pred_check_branch
          %306 = sbr.rel (%p304) target = $region48
        $region47: #{hecto_forward.4} parent=35 // pred_region
          %s307 = smul.u32 2, %s25
          %p308 = scmp.lt.s32.totalorder %s24, 1
          %s309 = scalar_select %p308, %s24, 1
          %p310 = scmp.lt.s32.totalorder %s307, 1
          %s311 = scalar_select %p310, %s307, 1
          %s312 = smul.addr %s309, 2
          %s313 = sadd.s32 %s311, %s312
          %s314 = scalar_lea.vmem %s2, %s313
          %s315 = smul.u32 2, %s25
        $region48: #{hecto_forward.4} parent=35 // pred_fallthru
          _
      $region36: #{hecto_forward.4} parent=5 // pred_fallthru
        _
      %p316 = scmp.le.s32.totalorder 1, %s17
      %p317 = scmp.lt.s32.totalorder %s17, 3
      %p318 = pnand %p316, %p317
      %p319 = pneg %p318
      // Predicated region
      $region49: #{hecto_forward.4} parent=5 // pred_check
        _
      $region50: #{hecto_forward.4} parent=5 // pred_check_branch
        %321 = sbr.rel (%p318) target = $region52
      $region51: #{hecto_forward.4} parent=5 // pred_region
        %s322 = ssub.s32 %s17, 1
        %s323 = smul.u32 2, %s27
        %p324 = scmp.lt.s32.totalorder %s26, 1
        %s325 = scalar_select %p324, %s26, 1
        %p326 = scmp.lt.s32.totalorder %s323, 1
        %s327 = scalar_select %p326, %s323, 1
        %s328 = smul.addr %s325, 32
        %s329 = sadd.s32 %s327, %s328
        %s330 = smul.addr %s329, 4
        %s331 = scalar_lea.vmem %s0, %s330
        %p332 = pneg %p57
        %p333 = pneg %p54
        %s334 = smul.u32 2, %s27
        %p335 = scmp.lt.s32.totalorder %s26, 1
        %s336 = scalar_select %p335, %s26, 1
        %p337 = scmp.lt.s32.totalorder %s334, 1
        %s338 = scalar_select %p337, %s334, 1
        %s339 = smul.addr %s336, 32
        %s340 = sadd.s32 %s338, %s339
        %s341 = smul.addr %s340, 4
        %s342 = scalar_lea.vmem %s1, %s341
        %p343 = pneg %p85
        %p344 = pneg %p82
        %s345 = smul.u32 2, %s27
        %p346 = scmp.lt.s32.totalorder %s26, 1
        %s347 = scalar_select %p346, %s26, 1
        %p348 = scmp.lt.s32.totalorder %s345, 1
        %s349 = scalar_select %p348, %s345, 1
        %s350 = smul.addr %s347, 2
        %s351 = sadd.s32 %s349, %s350
        %s352 = scalar_lea.vmem %s2, %s351
        %p353 = pneg %p113
        %p354 = pneg %p110
        %p355 = pneg %p134
        %p356 = pneg %p131
        %p357 = pneg %p155
        %p358 = pneg %p152
        %p359 = pneg %p176
        %p360 = pneg %p173
        %p361 = pneg %p197
        %p362 = pneg %p194
        %p363 = pneg %p218
        %p364 = pneg %p215
        %p365 = pneg %p244
        %p366 = pneg %p241
        %s367 = sand.u32 %s231, 1
        %s368 = scalar_lea.sflag [#allocation5], %s367
        %s369 = sand.u32 %s231, 1
        %s370 = smul.addr %s369, 128
        %s371 = scalar_lea.vmem [#allocation4], %s370
        %s372 = smul.u32 2, %s27
        %p373 = scmp.lt.s32.totalorder %s26, 1
        %s374 = scalar_select %p373, %s26, 1
        %p375 = scmp.lt.s32.totalorder %s372, 1
        %s376 = scalar_select %p375, %s372, 1
        %s377 = smul.addr %s374, 32
        %s378 = sadd.s32 %s376, %s377
        %s379 = smul.addr %s378, 4
        %s380 = scalar_lea.vmem %s0, %s379
        %s381 = smul.u32 2, %s27
        %s382 = smul.u32 2, %s27
        %p383 = scmp.lt.s32.totalorder %s26, 1
        %s384 = scalar_select %p383, %s26, 1
        %p385 = scmp.lt.s32.totalorder %s382, 1
        %s386 = scalar_select %p385, %s382, 1
        %s387 = smul.addr %s384, 32
        %s388 = sadd.s32 %s386, %s387
        %s389 = smul.addr %s388, 4
        %s390 = scalar_lea.vmem %s1, %s389
        %s391 = smul.u32 2, %s27
        %s392 = smul.u32 2, %s27
        %p393 = scmp.lt.s32.totalorder %s26, 1
        %s394 = scalar_select %p393, %s26, 1
        %p395 = scmp.lt.s32.totalorder %s392, 1
        %s396 = scalar_select %p395, %s392, 1
        %s397 = smul.addr %s394, 2
        %s398 = sadd.s32 %s396, %s397
        %s399 = scalar_lea.vmem %s2, %s398
        %s400 = smul.u32 2, %s27
        %p405 = scmp.eq.s32.totalorder %s27, 0
        // Predicated region
        $region53: #{hecto_forward.4} parent=51 // pred_check
          %p406 = pneg %p405
        $region54: #{hecto_forward.4} parent=51 // pred_check_branch
          %408 = sbr.rel (%p406) target = $region56
        $region55: #{hecto_forward.4} parent=51 // pred_region
          %vm409 = vcmask 523264
          %410 = vst.msk [vmem:[#allocation2] sm:$0xff] %vm409, 0.0
          %411 = vst.msk [vmem:[#allocation2 + $0x8] sm:$0xff] %vm409, 0.0
          %412 = vst.msk [vmem:[#allocation2 + $0x10] sm:$0xff] %vm409, 0.0
          %413 = vst.msk [vmem:[#allocation2 + $0x18] sm:$0xff] %vm409, 0.0
          %414 = vst.msk [vmem:[#allocation2 + $0x20] sm:$0xff] %vm409, 0.0
          %415 = vst.msk [vmem:[#allocation2 + $0x28] sm:$0xff] %vm409, 0.0
          %416 = vst.msk [vmem:[#allocation2 + $0x30] sm:$0xff] %vm409, 0.0
          %417 = vst.msk [vmem:[#allocation2 + $0x38] sm:$0xff] %vm409, 0.0
          %418 = vst.msk [vmem:[#allocation2 + $0x40] sm:$0xff] %vm409, 0.0
          %419 = vst.msk [vmem:[#allocation2 + $0x48] sm:$0xff] %vm409, 0.0
          %420 = vst.msk [vmem:[#allocation2 + $0x50] sm:$0xff] %vm409, 0.0
          %421 = vst.msk [vmem:[#allocation2 + $0x58] sm:$0xff] %vm409, 0.0
          %422 = vst.msk [vmem:[#allocation2 + $0x60] sm:$0xff] %vm409, 0.0
          %423 = vst.msk [vmem:[#allocation2 + $0x68] sm:$0xff] %vm409, 0.0
          %424 = vst.msk [vmem:[#allocation2 + $0x70] sm:$0xff] %vm409, 0.0
          %425 = vst.msk [vmem:[#allocation2 + $0x78] sm:$0xff] %vm409, 0.0
          %vm426 = vcmask 516096
          %427 = vst.msk [vmem:[#allocation3] sm:$0x1] %vm426, 0.0
        $region56: #{hecto_forward.4} parent=51 // pred_fallthru
          _
        %s428 = smul.u32 %s27, 256
        %s429 = sshra.s32 %s428, 3
        %s430 = sand.u32 %s428, 7
        %s431 = smul.addr %s429, 4
        %s432 = scalar_lea.vmem %s3, %s431
        %v433 = vld [vmem:[%s432] sm:$0xf]
        %v434 = vld [vmem:[%s432 + $0x4] sm:$0xf]
        %v435 = vld [vmem:[%s432 + $0x8] sm:$0xf]
        %v436 = vld [vmem:[%s432 + $0xc] sm:$0xf]
        %v437 = vld [vmem:[%s432 + $0x10] sm:$0xf]
        %v438 = vld [vmem:[%s432 + $0x14] sm:$0xf]
        %v439 = vld [vmem:[%s432 + $0x18] sm:$0xf]
        %v440 = vld [vmem:[%s432 + $0x1c] sm:$0xf]
        %v441 = vld [vmem:[%s432 + $0x20] sm:$0xf]
        %v442 = vld [vmem:[%s432 + $0x24] sm:$0xf]
        %v443 = vld [vmem:[%s432 + $0x28] sm:$0xf]
        %v444 = vld [vmem:[%s432 + $0x2c] sm:$0xf]
        %v445 = vld [vmem:[%s432 + $0x30] sm:$0xf]
        %v446 = vld [vmem:[%s432 + $0x34] sm:$0xf]
        %v447 = vld [vmem:[%s432 + $0x38] sm:$0xf]
        %v448 = vld [vmem:[%s432 + $0x3c] sm:$0xf]
        %v449 = vld [vmem:[%s432 + $0x40] sm:$0xf]
        %v450 = vld [vmem:[%s432 + $0x44] sm:$0xf]
        %v451 = vld [vmem:[%s432 + $0x48] sm:$0xf]
        %v452 = vld [vmem:[%s432 + $0x4c] sm:$0xf]
        %v453 = vld [vmem:[%s432 + $0x50] sm:$0xf]
        %v454 = vld [vmem:[%s432 + $0x54] sm:$0xf]
        %v455 = vld [vmem:[%s432 + $0x58] sm:$0xf]
        %v456 = vld [vmem:[%s432 + $0x5c] sm:$0xf]
        %v457 = vld [vmem:[%s432 + $0x60] sm:$0xf]
        %v458 = vld [vmem:[%s432 + $0x64] sm:$0xf]
        %v459 = vld [vmem:[%s432 + $0x68] sm:$0xf]
        %v460 = vld [vmem:[%s432 + $0x6c] sm:$0xf]
        %v461 = vld [vmem:[%s432 + $0x70] sm:$0xf]
        %v462 = vld [vmem:[%s432 + $0x74] sm:$0xf]
        %v463 = vld [vmem:[%s432 + $0x78] sm:$0xf]
        %v464 = vld [vmem:[%s432 + $0x7c] sm:$0xf]
        %v465 = vld [vmem:[%s399] sm:$0x3]
        %v466 = vsub.bf16 1065369472, %v465
        %vm467 = vcmp.gt.bf16.partialorder %v466, 0
        %v468 = vld [vmem:[%s380] sm:$0xff]
        %v469 = vld [vmem:[%s380 + $0x8] sm:$0xff]
        %v470 = vld [vmem:[%s380 + $0x10] sm:$0xff]
        %v471 = vld [vmem:[%s380 + $0x18] sm:$0xff]
        %v472 = vld [vmem:[%s380 + $0x20] sm:$0xff]
        %v473 = vld [vmem:[%s380 + $0x28] sm:$0xff]
        %v474 = vld [vmem:[%s380 + $0x30] sm:$0xff]
        %v475 = vld [vmem:[%s380 + $0x38] sm:$0xff]
        %v476 = vld [vmem:[%s380 + $0x40] sm:$0xff]
        %v477 = vld [vmem:[%s380 + $0x48] sm:$0xff]
        %v478 = vld [vmem:[%s380 + $0x50] sm:$0xff]
        %v479 = vld [vmem:[%s380 + $0x58] sm:$0xff]
        %v480 = vld [vmem:[%s380 + $0x60] sm:$0xff]
        %v481 = vld [vmem:[%s380 + $0x68] sm:$0xff]
        %v482 = vld [vmem:[%s380 + $0x70] sm:$0xff]
        %v483 = vld [vmem:[%s380 + $0x78] sm:$0xff]
        %v484 = vld [vmem:[%s390] sm:$0xff]
        %v485 = vld [vmem:[%s390 + $0x8] sm:$0xff]
        %v486 = vld [vmem:[%s390 + $0x10] sm:$0xff]
        %v487 = vld [vmem:[%s390 + $0x18] sm:$0xff]
        %v488 = vld [vmem:[%s390 + $0x20] sm:$0xff]
        %v489 = vld [vmem:[%s390 + $0x28] sm:$0xff]
        %v490 = vld [vmem:[%s390 + $0x30] sm:$0xff]
        %v491 = vld [vmem:[%s390 + $0x38] sm:$0xff]
        %v492 = vld [vmem:[%s390 + $0x40] sm:$0xff]
        %v493 = vld [vmem:[%s390 + $0x48] sm:$0xff]
        %v494 = vld [vmem:[%s390 + $0x50] sm:$0xff]
        %v495 = vld [vmem:[%s390 + $0x58] sm:$0xff]
        %v496 = vld [vmem:[%s390 + $0x60] sm:$0xff]
        %v497 = vld [vmem:[%s390 + $0x68] sm:$0xff]
        %v498 = vld [vmem:[%s390 + $0x70] sm:$0xff]
        %v499 = vld [vmem:[%s390 + $0x78] sm:$0xff]
        %v500 = vadd.bf16 %v468, %v484
        %v501 = vadd.bf16 %v469, %v485
        %v502 = vadd.bf16 %v470, %v486
        %v503 = vadd.bf16 %v471, %v487
        %v504 = vadd.bf16 %v472, %v488
        %v505 = vadd.bf16 %v473, %v489
        %v506 = vadd.bf16 %v474, %v490
        %v507 = vadd.bf16 %v475, %v491
        %v508 = vadd.bf16 %v476, %v492
        %v509 = vadd.bf16 %v477, %v493
        %v510 = vadd.bf16 %v478, %v494
        %v511 = vadd.bf16 %v479, %v495
        %v512 = vadd.bf16 %v480, %v496
        %v513 = vadd.bf16 %v481, %v497
        %v514 = vadd.bf16 %v482, %v498
        %v515 = vadd.bf16 %v483, %v499
        %v516 = vsel %vm467, 65537, 0
        %v517 = vunpack.c.l.b16 %v516
        %vm518 = vcmp.ne.s32.totalorder %v517, 0
        %v519 = vsel %vm518, 1, 0
        %v520 = vlaneseq
        %v521 = vshrl.u32 %v520, 7
        %v522 = vsub.s32 0, %v521
        %v523 = vrot.slane %v519, %v522
        %v524 = vlaneseq
        %v525 = vshrl.u32 %v524, 7
        %v526 = vsub.s32 2, %v525
        %v527 = vrot.slane %v519, %v526
        %vm528 = vcmp.ne.s32.totalorder %v523, 0
        %vm529 = vcmp.ne.s32.totalorder %v527, 0
        %v530 = vsel %vm528, 1, 0
        %v531 = vsel %vm529, 1, 0
        %v532 = vlaneseq
        %v533 = vshrl.u32 %v532, 7
        %v534 = vsub.s32 0, %v533
        %v535 = vrot.slane %v530, %v534
        %v536 = vlaneseq
        %v537 = vshrl.u32 %v536, 7
        %v538 = vsub.s32 0, %v537
        %v539 = vrot.slane %v531, %v538
        %vm540 = vcmp.eq.s32.totalorder %v535, 1
        %vm541 = vcmp.eq.s32.totalorder %v539, 1
        %vm542 = vmpackc.low %vm541, %vm540
        %v543 = vsel %vm542, %v500, 0
        %v544 = vsel %vm542, %v501, 0
        %v545 = vsel %vm542, %v502, 0
        %v546 = vsel %vm542, %v503, 0
        %v547 = vsel %vm542, %v504, 0
        %v548 = vsel %vm542, %v505, 0
        %v549 = vsel %vm542, %v506, 0
        %v550 = vsel %vm542, %v507, 0
        %v551 = vsel %vm542, %v508, 0
        %v552 = vsel %vm542, %v509, 0
        %v553 = vsel %vm542, %v510, 0
        %v554 = vsel %vm542, %v511, 0
        %v555 = vsel %vm542, %v512, 0
        %v556 = vsel %vm542, %v513, 0
        %v557 = vsel %vm542, %v514, 0
        %v558 = vsel %vm542, %v515, 0
        %v559 = vld [vmem:[#allocation2] sm:$0xff]
        %v560 = vld [vmem:[#allocation2 + $0x8] sm:$0xff]
        %v561 = vld [vmem:[#allocation2 + $0x10] sm:$0xff]
        %v562 = vld [vmem:[#allocation2 + $0x18] sm:$0xff]
        %v563 = vld [vmem:[#allocation2 + $0x20] sm:$0xff]
        %v564 = vld [vmem:[#allocation2 + $0x28] sm:$0xff]
        %v565 = vld [vmem:[#allocation2 + $0x30] sm:$0xff]
        %v566 = vld [vmem:[#allocation2 + $0x38] sm:$0xff]
        %v567 = vld [vmem:[#allocation2 + $0x40] sm:$0xff]
        %v568 = vld [vmem:[#allocation2 + $0x48] sm:$0xff]
        %v569 = vld [vmem:[#allocation2 + $0x50] sm:$0xff]
        %v570 = vld [vmem:[#allocation2 + $0x58] sm:$0xff]
        %v571 = vld [vmem:[#allocation2 + $0x60] sm:$0xff]
        %v572 = vld [vmem:[#allocation2 + $0x68] sm:$0xff]
        %v573 = vld [vmem:[#allocation2 + $0x70] sm:$0xff]
        %v574 = vld [vmem:[#allocation2 + $0x78] sm:$0xff]
        %v591 = vunpack.c.l.b16 %v543
        %v592 = vunpack.c.h.b16 %v543
        %v593 = vunpack.c.l.b16 %v544
        %v594 = vunpack.c.h.b16 %v544
        %v595 = vunpack.c.l.b16 %v545
        %v596 = vunpack.c.h.b16 %v545
        %v597 = vunpack.c.l.b16 %v546
        %v598 = vunpack.c.h.b16 %v546
        %v599 = vunpack.c.l.b16 %v547
        %v600 = vunpack.c.h.b16 %v547
        %v601 = vunpack.c.l.b16 %v548
        %v602 = vunpack.c.h.b16 %v548
        %v603 = vunpack.c.l.b16 %v549
        %v604 = vunpack.c.h.b16 %v549
        %v605 = vunpack.c.l.b16 %v550
        %v606 = vunpack.c.h.b16 %v550
        %v607 = vunpack.c.l.b16 %v551
        %v608 = vunpack.c.h.b16 %v551
        %v609 = vunpack.c.l.b16 %v552
        %v610 = vunpack.c.h.b16 %v552
        %v611 = vunpack.c.l.b16 %v553
        %v612 = vunpack.c.h.b16 %v553
        %v613 = vunpack.c.l.b16 %v554
        %v614 = vunpack.c.h.b16 %v554
        %v615 = vunpack.c.l.b16 %v555
        %v616 = vunpack.c.h.b16 %v555
        %v617 = vunpack.c.l.b16 %v556
        %v618 = vunpack.c.h.b16 %v556
        %v619 = vunpack.c.l.b16 %v557
        %v620 = vunpack.c.h.b16 %v557
        %v621 = vunpack.c.l.b16 %v558
        %v622 = vunpack.c.h.b16 %v558
        %v623 = vpack.c.b16 %v593, %v591
        %v624 = vpack.c.b16 %v594, %v592
        %v625 = vpack.c.b16 %v597, %v595
        %v626 = vpack.c.b16 %v598, %v596
        %v627 = vpack.c.b16 %v601, %v599
        %v628 = vpack.c.b16 %v602, %v600
        %v629 = vpack.c.b16 %v605, %v603
        %v630 = vpack.c.b16 %v606, %v604
        %v631 = vpack.c.b16 %v609, %v607
        %v632 = vpack.c.b16 %v610, %v608
        %v633 = vpack.c.b16 %v613, %v611
        %v634 = vpack.c.b16 %v614, %v612
        %v635 = vpack.c.b16 %v617, %v615
        %v636 = vpack.c.b16 %v618, %v616
        %v637 = vpack.c.b16 %v621, %v619
        %v638 = vpack.c.b16 %v622, %v620
        %v687 = vunpack.c.l.b16 %v433
        %v688 = vunpack.c.l.b16 %v434
        %v689 = vunpack.c.l.b16 %v435
        %v690 = vunpack.c.l.b16 %v436
        %v691 = vunpack.c.l.b16 %v437
        %v692 = vunpack.c.l.b16 %v438
        %v693 = vunpack.c.l.b16 %v439
        %v694 = vunpack.c.l.b16 %v440
        %v695 = vunpack.c.l.b16 %v441
        %v696 = vunpack.c.l.b16 %v442
        %v697 = vunpack.c.l.b16 %v443
        %v698 = vunpack.c.l.b16 %v444
        %v699 = vunpack.c.l.b16 %v445
        %v700 = vunpack.c.l.b16 %v446
        %v701 = vunpack.c.l.b16 %v447
        %v702 = vunpack.c.l.b16 %v448
        %v703 = vunpack.c.l.b16 %v449
        %v704 = vunpack.c.l.b16 %v450
        %v705 = vunpack.c.l.b16 %v451
        %v706 = vunpack.c.l.b16 %v452
        %v707 = vunpack.c.l.b16 %v453
        %v708 = vunpack.c.l.b16 %v454
        %v709 = vunpack.c.l.b16 %v455
        %v710 = vunpack.c.l.b16 %v456
        %v711 = vunpack.c.l.b16 %v457
        %v712 = vunpack.c.l.b16 %v458
        %v713 = vunpack.c.l.b16 %v459
        %v714 = vunpack.c.l.b16 %v460
        %v715 = vunpack.c.l.b16 %v461
        %v716 = vunpack.c.l.b16 %v462
        %v717 = vunpack.c.l.b16 %v463
        %v718 = vunpack.c.l.b16 %v464
        %v719 = vpack.c.b16 %v688, %v687
        %v720 = vpack.c.b16 %v690, %v689
        %v721 = vpack.c.b16 %v692, %v691
        %v722 = vpack.c.b16 %v694, %v693
        %v723 = vpack.c.b16 %v696, %v695
        %v724 = vpack.c.b16 %v698, %v697
        %v725 = vpack.c.b16 %v700, %v699
        %v726 = vpack.c.b16 %v702, %v701
        %v727 = vpack.c.b16 %v704, %v703
        %v728 = vpack.c.b16 %v706, %v705
        %v729 = vpack.c.b16 %v708, %v707
        %v730 = vpack.c.b16 %v710, %v709
        %v731 = vpack.c.b16 %v712, %v711
        %v732 = vpack.c.b16 %v714, %v713
        %v733 = vpack.c.b16 %v716, %v715
        %v734 = vpack.c.b16 %v718, %v717
        %751 = vmatprep.subr.bf16.mxu0 0
        %752 = vmatpush1.bf16.msra.mxu0 %v719
        %753 = vmatprep.subr.bf16.mxu0 0
        %754 = vmatpush1.bf16.msra.mxu0 %v720
        %755 = vmatprep.subr.bf16.mxu0 0
        %756 = vmatpush1.bf16.msra.mxu0 %v721
        %757 = vmatprep.subr.bf16.mxu0 0
        %758 = vmatpush1.bf16.msra.mxu0 %v722
        %759 = vmatprep.subr.bf16.mxu0 0
        %760 = vmatpush1.bf16.msra.mxu0 %v723
        %761 = vmatprep.subr.bf16.mxu0 0
        %762 = vmatpush1.bf16.msra.mxu0 %v724
        %763 = vmatprep.subr.bf16.mxu0 0
        %764 = vmatpush1.bf16.msra.mxu0 %v725
        %765 = vmatprep.subr.bf16.mxu0 0
        %766 = vmatpush1.bf16.msra.mxu0 %v726
        %767 = vmatprep.subr.bf16.mxu0 0
        %768 = vmatpush1.bf16.msra.mxu0 %v727
        %769 = vmatprep.subr.bf16.mxu0 0
        %770 = vmatpush1.bf16.msra.mxu0 %v728
        %771 = vmatprep.subr.bf16.mxu0 0
        %772 = vmatpush1.bf16.msra.mxu0 %v729
        %773 = vmatprep.subr.bf16.mxu0 0
        %774 = vmatpush1.bf16.msra.mxu0 %v730
        %775 = vmatprep.subr.bf16.mxu0 0
        %776 = vmatpush1.bf16.msra.mxu0 %v731
        %777 = vmatprep.subr.bf16.mxu0 0
        %778 = vmatpush1.bf16.msra.mxu0 %v732
        %779 = vmatprep.subr.bf16.mxu0 0
        %780 = vmatpush1.bf16.msra.mxu0 %v733
        %781 = vmatprep.subr.bf16.mxu0 0
        %782 = vmatpush1.bf16.msra.mxu0 %v734
        %783 = vmatprep.mubr.bf16.mxu0 %v624
        %784 = vmatmul.mubr.bf16.gmra.mrb[0].mxu0 %v623
        %v785 = vpop.f32.mrb[0].mxu0
        %v786 = vadd.f32 0.0, %v785
        %v787 = vpop.f32.mrb[0].mxu0
        %v788 = vpop.f32.mrb[0].mxu0
        %v789 = vadd.f32 0.0, %v788
        %v790 = vpop.f32.mrb[0].mxu0
        %791 = vmatprep.mubr.bf16.mxu0 %v626
        %792 = vmatmul.mubr.bf16.gmra.mrb[0].mxu0 %v625
        %v793 = vpop.f32.mrb[0].mxu0
        %v794 = vadd.f32 0.0, %v793
        %v795 = vpop.f32.mrb[0].mxu0
        %v796 = vpop.f32.mrb[0].mxu0
        %v797 = vadd.f32 0.0, %v796
        %v798 = vpop.f32.mrb[0].mxu0
        %799 = vmatprep.mubr.bf16.mxu0 %v628
        %800 = vmatmul.mubr.bf16.gmra.mrb[0].mxu0 %v627
        %v801 = vpop.f32.mrb[0].mxu0
        %v802 = vadd.f32 0.0, %v801
        %v803 = vpop.f32.mrb[0].mxu0
        %v804 = vpop.f32.mrb[0].mxu0
        %v805 = vadd.f32 0.0, %v804
        %v806 = vpop.f32.mrb[0].mxu0
        %807 = vmatprep.mubr.bf16.mxu0 %v630
        %808 = vmatmul.mubr.bf16.gmra.mrb[0].mxu0 %v629
        %v809 = vpop.f32.mrb[0].mxu0
        %v810 = vadd.f32 0.0, %v809
        %v811 = vpop.f32.mrb[0].mxu0
        %v812 = vpop.f32.mrb[0].mxu0
        %v813 = vadd.f32 0.0, %v812
        %v814 = vpop.f32.mrb[0].mxu0
        %815 = vmatprep.mubr.bf16.mxu0 %v632
        %816 = vmatmul.mubr.bf16.gmra.mrb[0].mxu0 %v631
        %v817 = vpop.f32.mrb[0].mxu0
        %v818 = vadd.f32 0.0, %v817
        %v819 = vpop.f32.mrb[0].mxu0
        %v820 = vpop.f32.mrb[0].mxu0
        %v821 = vadd.f32 0.0, %v820
        %v822 = vpop.f32.mrb[0].mxu0
        %823 = vmatprep.mubr.bf16.mxu0 %v634
        %824 = vmatmul.mubr.bf16.gmra.mrb[0].mxu0 %v633
        %v825 = vpop.f32.mrb[0].mxu0
        %v826 = vadd.f32 0.0, %v825
        %v827 = vpop.f32.mrb[0].mxu0
        %v828 = vpop.f32.mrb[0].mxu0
        %v829 = vadd.f32 0.0, %v828
        %v830 = vpop.f32.mrb[0].mxu0
        %831 = vmatprep.mubr.bf16.mxu0 %v636
        %832 = vmatmul.mubr.bf16.gmra.mrb[0].mxu0 %v635
        %v833 = vpop.f32.mrb[0].mxu0
        %v834 = vadd.f32 0.0, %v833
        %v835 = vpop.f32.mrb[0].mxu0
        %v836 = vpop.f32.mrb[0].mxu0
        %v837 = vadd.f32 0.0, %v836
        %v838 = vpop.f32.mrb[0].mxu0
        %839 = vmatprep.mubr.bf16.mxu0 %v638
        %840 = vmatmul.mubr.bf16.gmra.mrb[0].mxu0 %v637
        %v841 = vpop.f32.mrb[0].mxu0
        %v842 = vadd.f32 0.0, %v841
        %v843 = vpop.f32.mrb[0].mxu0
        %v844 = vpop.f32.mrb[0].mxu0
        %v845 = vadd.f32 0.0, %v844
        %v846 = vpop.f32.mrb[0].mxu0
        %847 = vdwg.mxu0
        %v848 = vadd.f32 %v559, %v786
        %v849 = vadd.f32 %v560, %v789
        %v850 = vadd.f32 %v561, %v794
        %v851 = vadd.f32 %v562, %v797
        %v852 = vadd.f32 %v563, %v802
        %v853 = vadd.f32 %v564, %v805
        %v854 = vadd.f32 %v565, %v810
        %v855 = vadd.f32 %v566, %v813
        %v856 = vadd.f32 %v567, %v818
        %v857 = vadd.f32 %v568, %v821
        %v858 = vadd.f32 %v569, %v826
        %v859 = vadd.f32 %v570, %v829
        %v860 = vadd.f32 %v571, %v834
        %v861 = vadd.f32 %v572, %v837
        %v862 = vadd.f32 %v573, %v842
        %v863 = vadd.f32 %v574, %v845
        %vm864 = vcmask 523264
        %865 = vst.msk [vmem:[#allocation2] sm:$0xff] %vm864, %v848
        %866 = vst.msk [vmem:[#allocation2 + $0x8] sm:$0xff] %vm864, %v849
        %867 = vst.msk [vmem:[#allocation2 + $0x10] sm:$0xff] %vm864, %v850
        %868 = vst.msk [vmem:[#allocation2 + $0x18] sm:$0xff] %vm864, %v851
        %869 = vst.msk [vmem:[#allocation2 + $0x20] sm:$0xff] %vm864, %v852
        %870 = vst.msk [vmem:[#allocation2 + $0x28] sm:$0xff] %vm864, %v853
        %871 = vst.msk [vmem:[#allocation2 + $0x30] sm:$0xff] %vm864, %v854
        %872 = vst.msk [vmem:[#allocation2 + $0x38] sm:$0xff] %vm864, %v855
        %873 = vst.msk [vmem:[#allocation2 + $0x40] sm:$0xff] %vm864, %v856
        %874 = vst.msk [vmem:[#allocation2 + $0x48] sm:$0xff] %vm864, %v857
        %875 = vst.msk [vmem:[#allocation2 + $0x50] sm:$0xff] %vm864, %v858
        %876 = vst.msk [vmem:[#allocation2 + $0x58] sm:$0xff] %vm864, %v859
        %877 = vst.msk [vmem:[#allocation2 + $0x60] sm:$0xff] %vm864, %v860
        %878 = vst.msk [vmem:[#allocation2 + $0x68] sm:$0xff] %vm864, %v861
        %879 = vst.msk [vmem:[#allocation2 + $0x70] sm:$0xff] %vm864, %v862
        %880 = vst.msk [vmem:[#allocation2 + $0x78] sm:$0xff] %vm864, %v863
        %v881 = vld [vmem:[#allocation3] sm:$0x1]
        %v884 = vunpack.c.l.s4 1966171168
        %v885 = vunpack.c.0.s8 %v884
        %v886 = vlaneseq
        %v887 = vshrl.u32 %v886, 7
        %v888 = vsub.s32 %v885, %v887
        %v889 = vrot.slane %v466, %v888
        %v890 = vcombine.high %v889, %v889
        %v892 = vunpack.c.l.s4 1966171168
        %v893 = vunpack.c.0.s8 %v892
        %v894 = vlaneseq
        %v895 = vshrl.u32 %v894, 7
        %v896 = vsub.s32 %v893, %v895
        %v897 = vrot.slane %v889, %v896
        %v899 = vunpack.c.l.s4 1966171168
        %v900 = vunpack.c.0.s8 %v899
        %v901 = vlaneseq
        %v902 = vshrl.u32 %v901, 7
        %v903 = vsub.s32 %v900, %v902
        %v904 = vrot.slane %v890, %v903
        %907 = vmatprep.subr.bf16.mxu0 0
        %908 = vmatpush1.bf16.msra.mxu0 %v719
        %909 = vmatprep.subr.bf16.mxu0 0
        %910 = vmatpush1.bf16.msra.mxu0 %v720
        %911 = vmatprep.subr.bf16.mxu0 0
        %912 = vmatpush1.bf16.msra.mxu0 %v721
        %913 = vmatprep.subr.bf16.mxu0 0
        %914 = vmatpush1.bf16.msra.mxu0 %v722
        %915 = vmatprep.subr.bf16.mxu0 0
        %916 = vmatpush1.bf16.msra.mxu0 %v723
        %917 = vmatprep.subr.bf16.mxu0 0
        %918 = vmatpush1.bf16.msra.mxu0 %v724
        %919 = vmatprep.subr.bf16.mxu0 0
        %920 = vmatpush1.bf16.msra.mxu0 %v725
        %921 = vmatprep.subr.bf16.mxu0 0
        %922 = vmatpush1.bf16.msra.mxu0 %v726
        %923 = vmatprep.subr.bf16.mxu0 0
        %924 = vmatpush1.bf16.msra.mxu0 %v727
        %925 = vmatprep.subr.bf16.mxu0 0
        %926 = vmatpush1.bf16.msra.mxu0 %v728
        %927 = vmatprep.subr.bf16.mxu0 0
        %928 = vmatpush1.bf16.msra.mxu0 %v729
        %929 = vmatprep.subr.bf16.mxu0 0
        %930 = vmatpush1.bf16.msra.mxu0 %v730
        %931 = vmatprep.subr.bf16.mxu0 0
        %932 = vmatpush1.bf16.msra.mxu0 %v731
        %933 = vmatprep.subr.bf16.mxu0 0
        %934 = vmatpush1.bf16.msra.mxu0 %v732
        %935 = vmatprep.subr.bf16.mxu0 0
        %936 = vmatpush1.bf16.msra.mxu0 %v733
        %937 = vmatprep.subr.bf16.mxu0 0
        %938 = vmatpush1.bf16.msra.mxu0 %v734
        %939 = vmatprep.mubr.bf16.mxu0 %v904
        %940 = vmatmul.mubr.bf16.gmra.mrb[0].mxu0 %v897
        %v941 = vpop.f32.mrb[0].mxu0
        %v942 = vadd.f32 0.0, %v941
        %v943 = vpop.f32.mrb[0].mxu0
        %v944 = vpop.f32.mrb[0].mxu0
        %v945 = vpop.f32.mrb[0].mxu0
        %946 = vdwg.mxu0
        %v947 = vadd.f32 %v881, %v942
        %vm948 = vcmask 516096
        %949 = vst.msk [vmem:[#allocation3] sm:$0x1] %vm948, %v947
        // Predicated region
        $region57: #{hecto_forward.4} parent=51 // pred_check
          %p950 = pneg %p405
        $region58: #{hecto_forward.4} parent=51 // pred_check_branch
          %952 = sbr.rel (%p950) target = $region60
        $region59: #{hecto_forward.4} parent=51 // pred_region
          %v953 = vld [vmem:[#allocation3] sm:$0x1]
          %v954 = vmul.f32 %v953, 0.25
          %v955 = vmax.f32 %v954, 1e-06
          %v956 = vrcp.pop %v955
          %v957 = vld [vmem:[#allocation2] sm:$0xff]
          %v958 = vld [vmem:[#allocation2 + $0x8] sm:$0xff]
          %v959 = vld [vmem:[#allocation2 + $0x10] sm:$0xff]
          %v960 = vld [vmem:[#allocation2 + $0x18] sm:$0xff]
          %v961 = vld [vmem:[#allocation2 + $0x20] sm:$0xff]
          %v962 = vld [vmem:[#allocation2 + $0x28] sm:$0xff]
          %v963 = vld [vmem:[#allocation2 + $0x30] sm:$0xff]
          %v964 = vld [vmem:[#allocation2 + $0x38] sm:$0xff]
          %v965 = vld [vmem:[#allocation2 + $0x40] sm:$0xff]
          %v966 = vld [vmem:[#allocation2 + $0x48] sm:$0xff]
          %v967 = vld [vmem:[#allocation2 + $0x50] sm:$0xff]
          %v968 = vld [vmem:[#allocation2 + $0x58] sm:$0xff]
          %v969 = vld [vmem:[#allocation2 + $0x60] sm:$0xff]
          %v970 = vld [vmem:[#allocation2 + $0x68] sm:$0xff]
          %v971 = vld [vmem:[#allocation2 + $0x70] sm:$0xff]
          %v972 = vld [vmem:[#allocation2 + $0x78] sm:$0xff]
          %v973 = vmul.f32 %v957, 0.25
          %v974 = vmul.f32 %v958, 0.25
          %v975 = vmul.f32 %v959, 0.25
          %v976 = vmul.f32 %v960, 0.25
          %v977 = vmul.f32 %v961, 0.25
          %v978 = vmul.f32 %v962, 0.25
          %v979 = vmul.f32 %v963, 0.25
          %v980 = vmul.f32 %v964, 0.25
          %v981 = vmul.f32 %v965, 0.25
          %v982 = vmul.f32 %v966, 0.25
          %v983 = vmul.f32 %v967, 0.25
          %v984 = vmul.f32 %v968, 0.25
          %v985 = vmul.f32 %v969, 0.25
          %v986 = vmul.f32 %v970, 0.25
          %v987 = vmul.f32 %v971, 0.25
          %v988 = vmul.f32 %v972, 0.25
          %v990 = vlaneseq
          %v991 = vshrl.u32 %v990, 7
          %v992 = vsub.s32 0, %v991
          %v993 = vrot.slane %v956, %v992
          %v995 = vmul.f32 %v973, %v993
          %v996 = vmul.f32 %v974, %v993
          %v997 = vmul.f32 %v975, %v993
          %v998 = vmul.f32 %v976, %v993
          %v999 = vmul.f32 %v977, %v993
          %v1000 = vmul.f32 %v978, %v993
          %v1001 = vmul.f32 %v979, %v993
          %v1002 = vmul.f32 %v980, %v993
          %v1003 = vmul.f32 %v981, %v993
          %v1004 = vmul.f32 %v982, %v993
          %v1005 = vmul.f32 %v983, %v993
          %v1006 = vmul.f32 %v984, %v993
          %v1007 = vmul.f32 %v985, %v993
          %v1008 = vmul.f32 %v986, %v993
          %v1009 = vmul.f32 %v987, %v993
          %v1010 = vmul.f32 %v988, %v993
          %v1011 = vpack.c.bf16 %v996, %v995
          %v1012 = vpack.c.bf16 %v998, %v997
          %v1013 = vpack.c.bf16 %v1000, %v999
          %v1014 = vpack.c.bf16 %v1002, %v1001
          %v1015 = vpack.c.bf16 %v1004, %v1003
          %v1016 = vpack.c.bf16 %v1006, %v1005
          %v1017 = vpack.c.bf16 %v1008, %v1007
          %v1018 = vpack.c.bf16 %v1010, %v1009
          %v1019 = vld [vmem:[%s4] sm:$0xff]
          %v1020 = vld [vmem:[%s4 + $0x8] sm:$0xff]
          %v1021 = vld [vmem:[%s4 + $0x10] sm:$0xff]
          %v1022 = vld [vmem:[%s4 + $0x18] sm:$0xff]
          %v1023 = vld [vmem:[%s4 + $0x20] sm:$0xff]
          %v1024 = vld [vmem:[%s4 + $0x28] sm:$0xff]
          %v1025 = vld [vmem:[%s4 + $0x30] sm:$0xff]
          %v1026 = vld [vmem:[%s4 + $0x38] sm:$0xff]
          %v1027 = vld [vmem:[%s4 + $0x40] sm:$0xff]
          %v1028 = vld [vmem:[%s4 + $0x48] sm:$0xff]
          %v1029 = vld [vmem:[%s4 + $0x50] sm:$0xff]
          %v1030 = vld [vmem:[%s4 + $0x58] sm:$0xff]
          %v1031 = vld [vmem:[%s4 + $0x60] sm:$0xff]
          %v1032 = vld [vmem:[%s4 + $0x68] sm:$0xff]
          %v1033 = vld [vmem:[%s4 + $0x70] sm:$0xff]
          %v1034 = vld [vmem:[%s4 + $0x78] sm:$0xff]
          %v1035 = vld [vmem:[%s5] sm:$0x3]
          %1036 = vxpose.xlu0.b32.start [1/16] %v956, 128
          %1037 = vxpose.xlu0.b32.cont [2/16] 0.0, 128
          %1038 = vxpose.xlu0.b32.cont [3/16] 0.0, 128
          %1039 = vxpose.xlu0.b32.cont [4/16] 0.0, 128
          %1040 = vxpose.xlu0.b32.cont [5/16] 0.0, 128
          %1041 = vxpose.xlu0.b32.cont [6/16] 0.0, 128
          %1042 = vxpose.xlu0.b32.cont [7/16] 0.0, 128
          %1043 = vxpose.xlu0.b32.cont [8/16] 0.0, 128
          %1044 = vxpose.xlu0.b32.cont [9/16] 0.0, 128
          %1045 = vxpose.xlu0.b32.cont [10/16] 0.0, 128
          %1046 = vxpose.xlu0.b32.cont [11/16] 0.0, 128
          %1047 = vxpose.xlu0.b32.cont [12/16] 0.0, 128
          %1048 = vxpose.xlu0.b32.cont [13/16] 0.0, 128
          %1049 = vxpose.xlu0.b32.cont [14/16] 0.0, 128
          %1050 = vxpose.xlu0.b32.cont [15/16] 0.0, 128
          %1051 = vxpose.xlu0.b32.end [16/16] 0.0, 128
          %v1052 = vpop.trf.xlu0
          %v1053 = vpop.trf.xlu0
          %v1054 = vpop.trf.xlu0
          %v1055 = vpop.trf.xlu0
          %v1056 = vpop.trf.xlu0
          %v1057 = vpop.trf.xlu0
          %v1058 = vpop.trf.xlu0
          %v1059 = vpop.trf.xlu0
          %v1060 = vpop.trf.xlu0
          %v1061 = vpop.trf.xlu0
          %v1062 = vpop.trf.xlu0
          %v1063 = vpop.trf.xlu0
          %v1064 = vpop.trf.xlu0
          %v1065 = vpop.trf.xlu0
          %v1066 = vpop.trf.xlu0
          %v1067 = vpop.trf.xlu0
          %v1069 = vlaneseq
          %v1070 = vshrl.u32 %v1069, 7
          %v1071 = vsub.s32 0, %v1070
          %v1072 = vrot.slane %v1035, %v1071
          %v1073 = vlaneseq
          %v1074 = vshrl.u32 %v1073, 7
          %v1075 = vsub.s32 1, %v1074
          %v1076 = vrot.slane %v1035, %v1075
          %vm1077 = vcmask 7168
          %v1079 = vsel %vm1077, %v1052, 0
          %v1082 = vsel %vm1077, %v1053, 0
          %v1085 = vsel %vm1077, %v1054, 0
          %v1088 = vsel %vm1077, %v1055, 0
          %v1091 = vsel %vm1077, %v1056, 0
          %v1094 = vsel %vm1077, %v1057, 0
          %v1097 = vsel %vm1077, %v1058, 0
          %v1100 = vsel %vm1077, %v1059, 0
          %vm1102 = vcmask 1040384
          %v1103 = vsel %vm1102, %v1072, 0
          %v1105 = vsel %vm1102, %v1076, 0
          %1107 = vmatprep.subr.mxu0 %v1105
          %1108 = vmatpush1.msra.mxu0 %v1103
          %1109 = vmatprep.subr.mxu0 0.0
          %1110 = vmatpush1.msra.mxu0 0.0
          %1111 = vmatprep.subr.mxu0 0.0
          %1112 = vmatpush1.msra.mxu0 0.0
          %1113 = vmatprep.subr.mxu0 0.0
          %1114 = vmatpush1.msra.mxu0 0.0
          %1115 = vmatprep.subr.mxu0 0.0
          %1116 = vmatpush1.msra.mxu0 0.0
          %1117 = vmatprep.subr.mxu0 0.0
          %1118 = vmatpush1.msra.mxu0 0.0
          %1119 = vmatprep.subr.mxu0 0.0
          %1120 = vmatpush1.msra.mxu0 0.0
          %1121 = vmatprep.subr.mxu0 0.0
          %1122 = vmatpush1.msra.mxu0 0.0
          %1123 = vmatprep.subr.mxu0 0.0
          %1124 = vmatpush1.msra.mxu0 0.0
          %1125 = vmatprep.subr.mxu0 0.0
          %1126 = vmatpush1.msra.mxu0 0.0
          %1127 = vmatprep.subr.mxu0 0.0
          %1128 = vmatpush1.msra.mxu0 0.0
          %1129 = vmatprep.subr.mxu0 0.0
          %1130 = vmatpush1.msra.mxu0 0.0
          %1131 = vmatprep.subr.mxu0 0.0
          %1132 = vmatpush1.msra.mxu0 0.0
          %1133 = vmatprep.subr.mxu0 0.0
          %1134 = vmatpush1.msra.mxu0 0.0
          %1135 = vmatprep.subr.mxu0 0.0
          %1136 = vmatpush1.msra.mxu0 0.0
          %1137 = vmatprep.subr.mxu0 0.0
          %1138 = vmatpush1.msra.mxu0 0.0
          %1139 = vmatprep.subr.mxu0 0.0
          %1140 = vmatpush1.msra.mxu0 0.0
          %1141 = vmatprep.subr.mxu0 0.0
          %1142 = vmatpush1.msra.mxu0 0.0
          %1143 = vmatprep.subr.mxu0 0.0
          %1144 = vmatpush1.msra.mxu0 0.0
          %1145 = vmatprep.subr.mxu0 0.0
          %1146 = vmatpush1.msra.mxu0 0.0
          %1147 = vmatprep.subr.mxu0 0.0
          %1148 = vmatpush1.msra.mxu0 0.0
          %1149 = vmatprep.subr.mxu0 0.0
          %1150 = vmatpush1.msra.mxu0 0.0
          %1151 = vmatprep.subr.mxu0 0.0
          %1152 = vmatpush1.msra.mxu0 0.0
          %1153 = vmatprep.subr.mxu0 0.0
          %1154 = vmatpush1.msra.mxu0 0.0
          %1155 = vmatprep.subr.mxu0 0.0
          %1156 = vmatpush1.msra.mxu0 0.0
          %1157 = vmatprep.subr.mxu0 0.0
          %1158 = vmatpush1.msra.mxu0 0.0
          %1159 = vmatprep.subr.mxu0 0.0
          %1160 = vmatpush1.msra.mxu0 0.0
          %1161 = vmatprep.subr.mxu0 0.0
          %1162 = vmatpush1.msra.mxu0 0.0
          %1163 = vmatprep.subr.mxu0 0.0
          %1164 = vmatpush1.msra.mxu0 0.0
          %1165 = vmatprep.subr.mxu0 0.0
          %1166 = vmatpush1.msra.mxu0 0.0
          %1167 = vmatprep.subr.mxu0 0.0
          %1168 = vmatpush1.msra.mxu0 0.0
          %1169 = vmatprep.subr.mxu0 0.0
          %1170 = vmatpush1.msra.mxu0 0.0
          %1171 = vmatprep.mubr.f32.mxu0 0.0
          %1172 = vmatmul.mubr.f32.gmra.mrb[0].mxu0 %v1079
          %v1173 = vpop.f32.mrb[0].mxu0
          %v1174 = vadd.f32 0.0, %v1173
          %v1175 = vpop.f32.mrb[0].mxu0
          %v1176 = vadd.f32 0.0, %v1175
          %1177 = vmatprep.mubr.f32.mxu0 0.0
          %1178 = vmatmul.mubr.f32.gmra.mrb[0].mxu0 %v1082
          %v1179 = vpop.f32.mrb[0].mxu0
          %v1180 = vadd.f32 0.0, %v1179
          %v1181 = vpop.f32.mrb[0].mxu0
          %v1182 = vadd.f32 0.0, %v1181
          %1183 = vmatprep.mubr.f32.mxu0 0.0
          %1184 = vmatmul.mubr.f32.gmra.mrb[0].mxu0 %v1085
          %v1185 = vpop.f32.mrb[0].mxu0
          %v1186 = vadd.f32 0.0, %v1185
          %v1187 = vpop.f32.mrb[0].mxu0
          %v1188 = vadd.f32 0.0, %v1187
          %1189 = vmatprep.mubr.f32.mxu0 0.0
          %1190 = vmatmul.mubr.f32.gmra.mrb[0].mxu0 %v1088
          %v1191 = vpop.f32.mrb[0].mxu0
          %v1192 = vadd.f32 0.0, %v1191
          %v1193 = vpop.f32.mrb[0].mxu0
          %v1194 = vadd.f32 0.0, %v1193
          %1195 = vmatprep.mubr.f32.mxu0 0.0
          %1196 = vmatmul.mubr.f32.gmra.mrb[0].mxu0 %v1091
          %v1197 = vpop.f32.mrb[0].mxu0
          %v1198 = vadd.f32 0.0, %v1197
          %v1199 = vpop.f32.mrb[0].mxu0
          %v1200 = vadd.f32 0.0, %v1199
          %1201 = vmatprep.mubr.f32.mxu0 0.0
          %1202 = vmatmul.mubr.f32.gmra.mrb[0].mxu0 %v1094
          %v1203 = vpop.f32.mrb[0].mxu0
          %v1204 = vadd.f32 0.0, %v1203
          %v1205 = vpop.f32.mrb[0].mxu0
          %v1206 = vadd.f32 0.0, %v1205
          %1207 = vmatprep.mubr.f32.mxu0 0.0
          %1208 = vmatmul.mubr.f32.gmra.mrb[0].mxu0 %v1097
          %v1209 = vpop.f32.mrb[0].mxu0
          %v1210 = vadd.f32 0.0, %v1209
          %v1211 = vpop.f32.mrb[0].mxu0
          %v1212 = vadd.f32 0.0, %v1211
          %1213 = vmatprep.mubr.f32.mxu0 0.0
          %1214 = vmatmul.mubr.f32.gmra.mrb[0].mxu0 %v1100
          %v1215 = vpop.f32.mrb[0].mxu0
          %v1216 = vadd.f32 0.0, %v1215
          %v1217 = vpop.f32.mrb[0].mxu0
          %v1218 = vadd.f32 0.0, %v1217
          %1219 = vdwg.mxu0
          %1220 = vxpose.xlu0.c.b16.start [1/8] %v1011, 128
          %1221 = vxpose.xlu0.c.b16.cont [2/8] %v1012, 128
          %1222 = vxpose.xlu0.c.b16.cont [3/8] %v1013, 128
          %1223 = vxpose.xlu0.c.b16.cont [4/8] %v1014, 128
          %1224 = vxpose.xlu0.c.b16.cont [5/8] %v1015, 128
          %1225 = vxpose.xlu0.c.b16.cont [6/8] %v1016, 128
          %1226 = vxpose.xlu0.c.b16.cont [7/8] %v1017, 128
          %1227 = vxpose.xlu0.c.b16.end [8/8] %v1018, 128
          %v1228 = vpop.trf.xlu0
          %v1229 = vpop.trf.xlu0
          %v1230 = vpop.trf.xlu0
          %v1231 = vpop.trf.xlu0
          %v1232 = vpop.trf.xlu0
          %v1233 = vpop.trf.xlu0
          %v1234 = vpop.trf.xlu0
          %v1235 = vpop.trf.xlu0
          %v1252 = vunpack.c.l.b16 %v1019
          %v1253 = vunpack.c.h.b16 %v1019
          %v1254 = vunpack.c.l.b16 %v1020
          %v1255 = vunpack.c.h.b16 %v1020
          %v1256 = vunpack.c.l.b16 %v1021
          %v1257 = vunpack.c.h.b16 %v1021
          %v1258 = vunpack.c.l.b16 %v1022
          %v1259 = vunpack.c.h.b16 %v1022
          %v1260 = vunpack.c.l.b16 %v1023
          %v1261 = vunpack.c.h.b16 %v1023
          %v1262 = vunpack.c.l.b16 %v1024
          %v1263 = vunpack.c.h.b16 %v1024
          %v1264 = vunpack.c.l.b16 %v1025
          %v1265 = vunpack.c.h.b16 %v1025
          %v1266 = vunpack.c.l.b16 %v1026
          %v1267 = vunpack.c.h.b16 %v1026
          %v1268 = vunpack.c.l.b16 %v1027
          %v1269 = vunpack.c.h.b16 %v1027
          %v1270 = vunpack.c.l.b16 %v1028
          %v1271 = vunpack.c.h.b16 %v1028
          %v1272 = vunpack.c.l.b16 %v1029
          %v1273 = vunpack.c.h.b16 %v1029
          %v1274 = vunpack.c.l.b16 %v1030
          %v1275 = vunpack.c.h.b16 %v1030
          %v1276 = vunpack.c.l.b16 %v1031
          %v1277 = vunpack.c.h.b16 %v1031
          %v1278 = vunpack.c.l.b16 %v1032
          %v1279 = vunpack.c.h.b16 %v1032
          %v1280 = vunpack.c.l.b16 %v1033
          %v1281 = vunpack.c.h.b16 %v1033
          %v1282 = vunpack.c.l.b16 %v1034
          %v1283 = vunpack.c.h.b16 %v1034
          %v1284 = vpack.c.b16 %v1254, %v1252
          %v1285 = vpack.c.b16 %v1255, %v1253
          %v1286 = vpack.c.b16 %v1258, %v1256
          %v1287 = vpack.c.b16 %v1259, %v1257
          %v1288 = vpack.c.b16 %v1262, %v1260
          %v1289 = vpack.c.b16 %v1263, %v1261
          %v1290 = vpack.c.b16 %v1266, %v1264
          %v1291 = vpack.c.b16 %v1267, %v1265
          %v1292 = vpack.c.b16 %v1270, %v1268
          %v1293 = vpack.c.b16 %v1271, %v1269
          %v1294 = vpack.c.b16 %v1274, %v1272
          %v1295 = vpack.c.b16 %v1275, %v1273
          %v1296 = vpack.c.b16 %v1278, %v1276
          %v1297 = vpack.c.b16 %v1279, %v1277
          %v1298 = vpack.c.b16 %v1282, %v1280
          %v1299 = vpack.c.b16 %v1283, %v1281
          %1316 = vmatprep.subr.bf16.mxu0 %v1285
          %1317 = vmatpush1.bf16.msra.mxu0 %v1284
          %1318 = vmatprep.subr.bf16.mxu0 %v1287
          %1319 = vmatpush1.bf16.msra.mxu0 %v1286
          %1320 = vmatprep.subr.bf16.mxu0 %v1289
          %1321 = vmatpush1.bf16.msra.mxu0 %v1288
          %1322 = vmatprep.subr.bf16.mxu0 %v1291
          %1323 = vmatpush1.bf16.msra.mxu0 %v1290
          %1324 = vmatprep.subr.bf16.mxu0 %v1293
          %1325 = vmatpush1.bf16.msra.mxu0 %v1292
          %1326 = vmatprep.subr.bf16.mxu0 %v1295
          %1327 = vmatpush1.bf16.msra.mxu0 %v1294
          %1328 = vmatprep.subr.bf16.mxu0 %v1297
          %1329 = vmatpush1.bf16.msra.mxu0 %v1296
          %1330 = vmatprep.subr.bf16.mxu0 %v1299
          %1331 = vmatpush1.bf16.msra.mxu0 %v1298
          %1332 = vmatprep.subr.bf16.mxu0 0
          %1333 = vmatpush1.bf16.msra.mxu0 0
          %1334 = vmatprep.subr.bf16.mxu0 0
          %1335 = vmatpush1.bf16.msra.mxu0 0
          %1336 = vmatprep.subr.bf16.mxu0 0
          %1337 = vmatpush1.bf16.msra.mxu0 0
          %1338 = vmatprep.subr.bf16.mxu0 0
          %1339 = vmatpush1.bf16.msra.mxu0 0
          %1340 = vmatprep.subr.bf16.mxu0 0
          %1341 = vmatpush1.bf16.msra.mxu0 0
          %1342 = vmatprep.subr.bf16.mxu0 0
          %1343 = vmatpush1.bf16.msra.mxu0 0
          %1344 = vmatprep.subr.bf16.mxu0 0
          %1345 = vmatpush1.bf16.msra.mxu0 0
          %1346 = vmatprep.subr.bf16.mxu0 0
          %1347 = vmatpush1.bf16.msra.mxu0 0
          %1348 = vmatprep.mubr.bf16.mxu0 0
          %1349 = vmatmul.mubr.bf16.gmra.mrb[0].mxu0 %v1228
          %v1350 = vpop.f32.mrb[0].mxu0
          %v1351 = vadd.f32 %v1174, %v1350
          %v1352 = vpop.f32.mrb[0].mxu0
          %v1353 = vadd.f32 %v1176, %v1352
          %v1354 = vpop.f32.mrb[0].mxu0
          %v1355 = vadd.f32 %v1180, %v1354
          %v1356 = vpop.f32.mrb[0].mxu0
          %v1357 = vadd.f32 %v1182, %v1356
          %1358 = vmatprep.mubr.bf16.mxu0 0
          %1359 = vmatmul.mubr.bf16.gmra.mrb[0].mxu0 %v1229
          %v1360 = vpop.f32.mrb[0].mxu0
          %v1361 = vadd.f32 %v1186, %v1360
          %v1362 = vpop.f32.mrb[0].mxu0
          %v1363 = vadd.f32 %v1188, %v1362
          %v1364 = vpop.f32.mrb[0].mxu0
          %v1365 = vadd.f32 %v1192, %v1364
          %v1366 = vpop.f32.mrb[0].mxu0
          %v1367 = vadd.f32 %v1194, %v1366
          %1368 = vmatprep.mubr.bf16.mxu0 0
          %1369 = vmatmul.mubr.bf16.gmra.mrb[0].mxu0 %v1230
          %v1370 = vpop.f32.mrb[0].mxu0
          %v1371 = vadd.f32 %v1198, %v1370
          %v1372 = vpop.f32.mrb[0].mxu0
          %v1373 = vadd.f32 %v1200, %v1372
          %v1374 = vpop.f32.mrb[0].mxu0
          %v1375 = vadd.f32 %v1204, %v1374
          %v1376 = vpop.f32.mrb[0].mxu0
          %v1377 = vadd.f32 %v1206, %v1376
          %1378 = vmatprep.mubr.bf16.mxu0 0
          %1379 = vmatmul.mubr.bf16.gmra.mrb[0].mxu0 %v1231
          %v1380 = vpop.f32.mrb[0].mxu0
          %v1381 = vadd.f32 %v1210, %v1380
          %v1382 = vpop.f32.mrb[0].mxu0
          %v1383 = vadd.f32 %v1212, %v1382
          %v1384 = vpop.f32.mrb[0].mxu0
          %v1385 = vadd.f32 %v1216, %v1384
          %v1386 = vpop.f32.mrb[0].mxu0
          %v1387 = vadd.f32 %v1218, %v1386
          %1388 = vdwg.mxu0
          %v1389 = vadd.f32 %v1351, %v1353
          %1390 = vadd.xlane.f32.xlu0 %v1389
          %v1391 = vpop.xlane.xlu0 %1390
          %v1392 = vadd.f32 %v1355, %v1357
          %1393 = vadd.xlane.f32.xlu0 %v1392
          %v1394 = vpop.xlane.xlu0 %1393
          %v1395 = vadd.f32 %v1361, %v1363
          %1396 = vadd.xlane.f32.xlu0 %v1395
          %v1397 = vpop.xlane.xlu0 %1396
          %v1398 = vadd.f32 %v1365, %v1367
          %1399 = vadd.xlane.f32.xlu0 %v1398
          %v1400 = vpop.xlane.xlu0 %1399
          %v1401 = vadd.f32 %v1371, %v1373
          %1402 = vadd.xlane.f32.xlu0 %v1401
          %v1403 = vpop.xlane.xlu0 %1402
          %v1404 = vadd.f32 %v1375, %v1377
          %1405 = vadd.xlane.f32.xlu0 %v1404
          %v1406 = vpop.xlane.xlu0 %1405
          %v1407 = vadd.f32 %v1381, %v1383
          %1408 = vadd.xlane.f32.xlu0 %v1407
          %v1409 = vpop.xlane.xlu0 %1408
          %v1410 = vadd.f32 %v1385, %v1387
          %1411 = vadd.xlane.f32.xlu0 %v1410
          %v1412 = vpop.xlane.xlu0 %1411
          %v1413 = vrcp.pop 256.0
          %v1414 = vmul.f32 %v1391, %v1413
          %v1415 = vmul.f32 %v1394, %v1413
          %v1416 = vmul.f32 %v1397, %v1413
          %v1417 = vmul.f32 %v1400, %v1413
          %v1418 = vmul.f32 %v1403, %v1413
          %v1419 = vmul.f32 %v1406, %v1413
          %v1420 = vmul.f32 %v1409, %v1413
          %v1421 = vmul.f32 %v1412, %v1413
          %v1422 = vsub.f32 %v1351, %v1414
          %v1423 = vsub.f32 %v1353, %v1414
          %v1424 = vsub.f32 %v1355, %v1415
          %v1425 = vsub.f32 %v1357, %v1415
          %v1426 = vsub.f32 %v1361, %v1416
          %v1427 = vsub.f32 %v1363, %v1416
          %v1428 = vsub.f32 %v1365, %v1417
          %v1429 = vsub.f32 %v1367, %v1417
          %v1430 = vsub.f32 %v1371, %v1418
          %v1431 = vsub.f32 %v1373, %v1418
          %v1432 = vsub.f32 %v1375, %v1419
          %v1433 = vsub.f32 %v1377, %v1419
          %v1434 = vsub.f32 %v1381, %v1420
          %v1435 = vsub.f32 %v1383, %v1420
          %v1436 = vsub.f32 %v1385, %v1421
          %v1437 = vsub.f32 %v1387, %v1421
          %v1438 = vmul.f32 %v1422, %v1422
          %v1439 = vmul.f32 %v1423, %v1423
          %v1440 = vmul.f32 %v1424, %v1424
          %v1441 = vmul.f32 %v1425, %v1425
          %v1442 = vmul.f32 %v1426, %v1426
          %v1443 = vmul.f32 %v1427, %v1427
          %v1444 = vmul.f32 %v1428, %v1428
          %v1445 = vmul.f32 %v1429, %v1429
          %v1446 = vmul.f32 %v1430, %v1430
          %v1447 = vmul.f32 %v1431, %v1431
          %v1448 = vmul.f32 %v1432, %v1432
          %v1449 = vmul.f32 %v1433, %v1433
          %v1450 = vmul.f32 %v1434, %v1434
          %v1451 = vmul.f32 %v1435, %v1435
          %v1452 = vmul.f32 %v1436, %v1436
          %v1453 = vmul.f32 %v1437, %v1437
          %v1454 = vadd.f32 %v1438, %v1439
          %1455 = vadd.xlane.f32.xlu0 %v1454
          %v1456 = vpop.xlane.xlu0 %1455
          %v1457 = vadd.f32 %v1440, %v1441
          %1458 = vadd.xlane.f32.xlu0 %v1457
          %v1459 = vpop.xlane.xlu0 %1458
          %v1460 = vadd.f32 %v1442, %v1443
          %1461 = vadd.xlane.f32.xlu0 %v1460
          %v1462 = vpop.xlane.xlu0 %1461
          %v1463 = vadd.f32 %v1444, %v1445
          %1464 = vadd.xlane.f32.xlu0 %v1463
          %v1465 = vpop.xlane.xlu0 %1464
          %v1466 = vadd.f32 %v1446, %v1447
          %1467 = vadd.xlane.f32.xlu0 %v1466
          %v1468 = vpop.xlane.xlu0 %1467
          %v1469 = vadd.f32 %v1448, %v1449
          %1470 = vadd.xlane.f32.xlu0 %v1469
          %v1471 = vpop.xlane.xlu0 %1470
          %v1472 = vadd.f32 %v1450, %v1451
          %1473 = vadd.xlane.f32.xlu0 %v1472
          %v1474 = vpop.xlane.xlu0 %1473
          %v1475 = vadd.f32 %v1452, %v1453
          %1476 = vadd.xlane.f32.xlu0 %v1475
          %v1477 = vpop.xlane.xlu0 %1476
          %v1478 = vmul.f32 %v1456, %v1413
          %v1479 = vmul.f32 %v1459, %v1413
          %v1480 = vmul.f32 %v1462, %v1413
          %v1481 = vmul.f32 %v1465, %v1413
          %v1482 = vmul.f32 %v1468, %v1413
          %v1483 = vmul.f32 %v1471, %v1413
          %v1484 = vmul.f32 %v1474, %v1413
          %v1485 = vmul.f32 %v1477, %v1413
          %v1486 = vadd.f32 %v1478, 1e-05
          %v1487 = vadd.f32 %v1479, 1e-05
          %v1488 = vadd.f32 %v1480, 1e-05
          %v1489 = vadd.f32 %v1481, 1e-05
          %v1490 = vadd.f32 %v1482, 1e-05
          %v1491 = vadd.f32 %v1483, 1e-05
          %v1492 = vadd.f32 %v1484, 1e-05
          %v1493 = vadd.f32 %v1485, 1e-05
          %v1494 = vrsqrt.pop %v1486
          %v1495 = vrsqrt.pop %v1487
          %v1496 = vrsqrt.pop %v1488
          %v1497 = vrsqrt.pop %v1489
          %v1498 = vrsqrt.pop %v1490
          %v1499 = vrsqrt.pop %v1491
          %v1500 = vrsqrt.pop %v1492
          %v1501 = vrsqrt.pop %v1493
          %v1502 = vmul.f32 %v1422, %v1494
          %v1503 = vmul.f32 %v1423, %v1494
          %v1504 = vmul.f32 %v1424, %v1495
          %v1505 = vmul.f32 %v1425, %v1495
          %v1506 = vmul.f32 %v1426, %v1496
          %v1507 = vmul.f32 %v1427, %v1496
          %v1508 = vmul.f32 %v1428, %v1497
          %v1509 = vmul.f32 %v1429, %v1497
          %v1510 = vmul.f32 %v1430, %v1498
          %v1511 = vmul.f32 %v1431, %v1498
          %v1512 = vmul.f32 %v1432, %v1499
          %v1513 = vmul.f32 %v1433, %v1499
          %v1514 = vmul.f32 %v1434, %v1500
          %v1515 = vmul.f32 %v1435, %v1500
          %v1516 = vmul.f32 %v1436, %v1501
          %v1517 = vmul.f32 %v1437, %v1501
          %v1518 = vld [vmem:[%s6] sm:$0x3]
          %v1520 = vlaneseq
          %v1521 = vshrl.u32 %v1520, 7
          %v1522 = vsub.s32 0, %v1521
          %v1523 = vrot.slane %v1518, %v1522
          %v1524 = vlaneseq
          %v1525 = vshrl.u32 %v1524, 7
          %v1526 = vsub.s32 1, %v1525
          %v1527 = vrot.slane %v1518, %v1526
          %v1530 = vmul.f32 %v1502, %v1523
          %v1531 = vmul.f32 %v1503, %v1527
          %v1532 = vmul.f32 %v1504, %v1523
          %v1533 = vmul.f32 %v1505, %v1527
          %v1534 = vmul.f32 %v1506, %v1523
          %v1535 = vmul.f32 %v1507, %v1527
          %v1536 = vmul.f32 %v1508, %v1523
          %v1537 = vmul.f32 %v1509, %v1527
          %v1538 = vmul.f32 %v1510, %v1523
          %v1539 = vmul.f32 %v1511, %v1527
          %v1540 = vmul.f32 %v1512, %v1523
          %v1541 = vmul.f32 %v1513, %v1527
          %v1542 = vmul.f32 %v1514, %v1523
          %v1543 = vmul.f32 %v1515, %v1527
          %v1544 = vmul.f32 %v1516, %v1523
          %v1545 = vmul.f32 %v1517, %v1527
          %v1546 = vld [vmem:[%s7] sm:$0x3]
          %v1548 = vlaneseq
          %v1549 = vshrl.u32 %v1548, 7
          %v1550 = vsub.s32 0, %v1549
          %v1551 = vrot.slane %v1546, %v1550
          %v1552 = vlaneseq
          %v1553 = vshrl.u32 %v1552, 7
          %v1554 = vsub.s32 1, %v1553
          %v1555 = vrot.slane %v1546, %v1554
          %v1558 = vadd.f32 %v1530, %v1551
          %v1559 = vadd.f32 %v1531, %v1555
          %v1560 = vadd.f32 %v1532, %v1551
          %v1561 = vadd.f32 %v1533, %v1555
          %v1562 = vadd.f32 %v1534, %v1551
          %v1563 = vadd.f32 %v1535, %v1555
          %v1564 = vadd.f32 %v1536, %v1551
          %v1565 = vadd.f32 %v1537, %v1555
          %v1566 = vadd.f32 %v1538, %v1551
          %v1567 = vadd.f32 %v1539, %v1555
          %v1568 = vadd.f32 %v1540, %v1551
          %v1569 = vadd.f32 %v1541, %v1555
          %v1570 = vadd.f32 %v1542, %v1551
          %v1571 = vadd.f32 %v1543, %v1555
          %v1572 = vadd.f32 %v1544, %v1551
          %v1573 = vadd.f32 %v1545, %v1555
          %1574 = vst [vmem:[%s371] sm:$0xff] %v1558
          %1575 = vst [vmem:[%s371 + $0x8] sm:$0xff] %v1559
          %1576 = vst [vmem:[%s371 + $0x10] sm:$0xff] %v1560
          %1577 = vst [vmem:[%s371 + $0x18] sm:$0xff] %v1561
          %1578 = vst [vmem:[%s371 + $0x20] sm:$0xff] %v1562
          %1579 = vst [vmem:[%s371 + $0x28] sm:$0xff] %v1563
          %1580 = vst [vmem:[%s371 + $0x30] sm:$0xff] %v1564
          %1581 = vst [vmem:[%s371 + $0x38] sm:$0xff] %v1565
          %1582 = vst [vmem:[%s371 + $0x40] sm:$0xff] %v1566
          %1583 = vst [vmem:[%s371 + $0x48] sm:$0xff] %v1567
          %1584 = vst [vmem:[%s371 + $0x50] sm:$0xff] %v1568
          %1585 = vst [vmem:[%s371 + $0x58] sm:$0xff] %v1569
          %1586 = vst [vmem:[%s371 + $0x60] sm:$0xff] %v1570
          %1587 = vst [vmem:[%s371 + $0x68] sm:$0xff] %v1571
          %1588 = vst [vmem:[%s371 + $0x70] sm:$0xff] %v1572
          %1589 = vst [vmem:[%s371 + $0x78] sm:$0xff] %v1573
        $region60: #{hecto_forward.4} parent=51 // pred_fallthru
          _
        %s1590 = sand.u32 %s231, 1
        %s1591 = scalar_lea.sflag [#allocation5], %s1590
        %s1592 = sand.u32 %s231, 1
        %s1593 = smul.addr %s1592, 128
        %s1594 = scalar_lea.vmem [#allocation4], %s1593
        // Predicated region
        $region61: #{hecto_forward.4} parent=51 // pred_check
          %p1595 = pneg %p241
        $region62: #{hecto_forward.4} parent=51 // pred_check_branch
          %1597 = sbr.rel (%p1595) target = $region64
        $region63: #{hecto_forward.4} parent=51 // pred_region
          %s1599 = ssub.s32 2048, 2048
          %1600 = vsyncadd %s1591, %s1599
          %s1601 = smul.addr %s26, 16
          %s1602 = smul.addr %s1601, 128
          %s1603 = scalar_lea.hbm %s8, %s1602
          %s1604 = sshll.u32 %s1594, 4
          %s1605 = int_to_ptr.vmem [resolvable:$true] %s1604
          %1610 = dma.vmem_to_hbm [thread:$0]  %s1605, 2048, %s1603, %s1591, 256, 256, 16
        $region64: #{hecto_forward.4} parent=51 // pred_fallthru
          _
      $region52: #{hecto_forward.4} parent=5 // pred_fallthru
        _
      %p1611 = scmp.le.s32.totalorder 2, %s17
      // Predicated region
      $region65: #{hecto_forward.4} parent=5 // pred_check
        %p1612 = pneg %p1611
      $region66: #{hecto_forward.4} parent=5 // pred_check_branch
        %1614 = sbr.rel (%p1612) target = $region68
      $region67: #{hecto_forward.4} parent=5 // pred_region
        %s1615 = ssub.s32 %s17, 2
        // Predicated region
        $region69: #{hecto_forward.4} parent=67 // pred_check
          %p1616 = pneg %p247
        $region70: #{hecto_forward.4} parent=67 // pred_check_branch
          %1618 = sbr.rel (%p1616) target = $region72
        $region71: #{hecto_forward.4} parent=67 // pred_region
          %s1619 = sand.u32 %s232, 1
          %s1620 = scalar_lea.sflag [#allocation5], %s1619
          %s1621 = sand.u32 %s232, 1
          %s1622 = smul.addr %s1621, 128
          %s1623 = scalar_lea.vmem [#allocation4], %s1622
          %1624 = dma.done %s1620, 2048
        $region72: #{hecto_forward.4} parent=67 // pred_fallthru
          _
      $region68: #{hecto_forward.4} parent=5 // pred_fallthru
        _
    $region6: #{hecto_forward.4} parent=1 // loop_footer
      %s21 = sadd.s32 1, %s17
    $region7: #{hecto_forward.4} parent=1 // loop_footer_branch
      %16 = sbr.rel target = $region3
    $region8: #{hecto_forward.4} parent=1 // loop_exit
      _
    %1625 = vsyncpa [#allocation5], 1
    %s1626 = scalar_lea.sflag [#allocation5], 1
    %1627 = vsyncpa %s1626, 1

// kernel: hecto_forward.5
$region0: #{hecto_forward.5}
  #allocation0 [shape = 'u32[]', space=smem, size = 0x4, offset = 0x4, fixed_abs, tag = 'smem constant byte address 0x4 - core index']
  #allocation1 [shape = 'u32[144,128]{1,0:T(1,128)}', space=vmem, size = 0x12000, scoped, tag = 'internal scratch']
  #allocation2 [shape = 'f32[128,16]{1,0:T(8,128)}', space=vmem, size = 0x10000, scoped, tag = 'scratch operand']
  #allocation3 [shape = 'f32[1,16]{1,0:T(1,128)}', space=vmem, size = 0x200, scoped, tag = 'scratch operand']
  %s0 = inlined_call_operand.vmem [shape: bf16[2,128,64], index: 0, kind: input, shape index: {}]
  %s1 = inlined_call_operand.vmem [shape: bf16[2,128,64], index: 1, kind: input, shape index: {}]
  %s2 = inlined_call_operand.vmem [shape: bf16[2,1,64], index: 2, kind: input, shape index: {}]
  %s3 = inlined_call_operand.vmem [shape: bf16[64,16], index: 3, kind: input, shape index: {}]
  %s4 = inlined_call_operand.vmem [shape: bf16[128,256], index: 4, kind: input, shape index: {}]
  %s5 = inlined_call_operand.vmem [shape: f32[1,256], index: 5, kind: input, shape index: {}]
  %s6 = inlined_call_operand.vmem [shape: f32[1,256], index: 6, kind: input, shape index: {}]
  %s7 = inlined_call_operand.vmem [shape: f32[1,256], index: 7, kind: input, shape index: {}]
  %s8 = inlined_call_operand.hbm [shape: f32[2,16,256], index: 8, kind: output, shape index: {}]
  %s9 = sld [smem:[#allocation0]]
  $region73: #{hecto_forward.5} parent=0
    _
  %s11 = ssub.s32 1, %s9
  %s12 = scalar_select 0, %s11, %s9
  $region1: #{hecto_forward.5} parent=0
    #allocation4 [shape = 'u8[32768]{0}', space=vmem, size = 0x8000, scoped, tag = 'output window, operand 0']
    #allocation5 [shape = 's32[2]{0}', space=sflag, size = 0x8, scoped, tag = 'scoped memory for hecto_forward.5']
    %13 = vsyncpa [#allocation5], 0
    %s14 = scalar_lea.sflag [#allocation5], 1
    %15 = vsyncpa %s14, 0
    loop: start=0, step=1, limit=4
    $region2: #{hecto_forward.5} parent=1 // loop_pre_header
      _
    $region3: #{hecto_forward.5} parent=1 // loop_header
      %s17 = sphi 0, %s21
      %p18 = scmp.ge.s32.totalorder %s17, 4
      %s24 = sphi 0, %s36
      %s25 = sphi 0, %s32
      %s26 = sphi 0, %s24
      %s27 = sphi 0, %s25
      %s28 = sphi 0, %s26
      %s29 = sphi 0, %s27
      %s41 = sphi 0, %s43
      %s44 = sphi 0, %s41
      %s45 = sphi 0, %s44
      %s61 = sphi 0, %s45
      %s69 = sphi 0, %s71
      %s72 = sphi 0, %s69
      %s73 = sphi 0, %s72
      %s89 = sphi 0, %s73
      %s97 = sphi 0, %s99
      %s100 = sphi 0, %s97
      %s101 = sphi 0, %s100
      %s117 = sphi 0, %s101
      %s121 = sphi 0, %s121
      %s123 = sphi 0, %s121
      %s124 = sphi 0, %s123
      %s138 = sphi 0, %s124
      %s142 = sphi 0, %s142
      %s144 = sphi 0, %s142
      %s145 = sphi 0, %s144
      %s159 = sphi 0, %s145
      %s163 = sphi 0, %s163
      %s165 = sphi 0, %s163
      %s166 = sphi 0, %s165
      %s180 = sphi 0, %s166
      %s184 = sphi 0, %s184
      %s186 = sphi 0, %s184
      %s187 = sphi 0, %s186
      %s201 = sphi 0, %s187
      %s205 = sphi 0, %s205
      %s207 = sphi 0, %s205
      %s208 = sphi 0, %s207
      %s222 = sphi 0, %s208
      %s228 = sphi 0, %s230
      %s231 = sphi 0, %s228
      %s232 = sphi 0, %s231
      %s248 = sphi 0, %s232
    $region4: #{hecto_forward.5} parent=1 // loop_header_branch
      %20 = sbr.rel (%p18) target = $region8
    $region5: #{hecto_forward.5} parent=1 // loop_body
      %s22 = ssub.s32 %s17, 1
      %s23 = ssub.s32 %s17, 2
      %s30 = sadd.s32 1, %s25
      %p31 = scmp.ge.s32.totalorder %s30, 1
      %s32 = scalar_select %p31, 0, %s30
      %s33 = sadd.s32 1, %s24
      %s34 = scalar_select %p31, %s33, %s24
      %p35 = scmp.ge.s32.totalorder %s34, 2
      %s36 = scalar_select %p35, 0, %s34
      %s37 = ssub.s32 %s24, %s36
      %s38 = ssub.s32 %s25, %s32
      %s39 = sor.u32 %s37, %s38
      %p40 = scmp.eq.s32.totalorder %s39, 0
      %s42 = sadd.s32 %s41, 1
      %s43 = scalar_select %p40, %s41, %s42
      %p46 = pneg %p40
      %p47 = scmp.eq.s32.totalorder %s17, 1
      %p48 = por %p46, %p47
      %p49 = scmp.ne.s32.totalorder %s41, %s44
      %p50 = scmp.eq.s32.totalorder %s17, 0
      %p51 = por %p49, %p50
      %p52 = scmp.ne.s32.totalorder %s41, %s44
      %p53 = scmp.eq.s32.totalorder %s22, 1
      %p54 = por %p52, %p53
      %p55 = scmp.ne.s32.totalorder %s44, %s45
      %p56 = scmp.eq.s32.totalorder %s22, 0
      %p57 = por %p55, %p56
      %p58 = scmp.ne.s32.totalorder %s44, %s45
      %p59 = scmp.eq.s32.totalorder %s23, 1
      %p60 = por %p58, %p59
      %p62 = scmp.ne.s32.totalorder %s45, %s61
      %p63 = scmp.eq.s32.totalorder %s23, 0
      %p64 = por %p62, %p63
      %s65 = ssub.s32 %s24, %s36
      %s66 = ssub.s32 %s25, %s32
      %s67 = sor.u32 %s65, %s66
      %p68 = scmp.eq.s32.totalorder %s67, 0
      %s70 = sadd.s32 %s69, 1
      %s71 = scalar_select %p68, %s69, %s70
      %p74 = pneg %p68
      %p75 = scmp.eq.s32.totalorder %s17, 1
      %p76 = por %p74, %p75
      %p77 = scmp.ne.s32.totalorder %s69, %s72
      %p78 = scmp.eq.s32.totalorder %s17, 0
      %p79 = por %p77, %p78
      %p80 = scmp.ne.s32.totalorder %s69, %s72
      %p81 = scmp.eq.s32.totalorder %s22, 1
      %p82 = por %p80, %p81
      %p83 = scmp.ne.s32.totalorder %s72, %s73
      %p84 = scmp.eq.s32.totalorder %s22, 0
      %p85 = por %p83, %p84
      %p86 = scmp.ne.s32.totalorder %s72, %s73
      %p87 = scmp.eq.s32.totalorder %s23, 1
      %p88 = por %p86, %p87
      %p90 = scmp.ne.s32.totalorder %s73, %s89
      %p91 = scmp.eq.s32.totalorder %s23, 0
      %p92 = por %p90, %p91
      %s93 = ssub.s32 %s24, %s36
      %s94 = ssub.s32 %s25, %s32
      %s95 = sor.u32 %s93, %s94
      %p96 = scmp.eq.s32.totalorder %s95, 0
      %s98 = sadd.s32 %s97, 1
      %s99 = scalar_select %p96, %s97, %s98
      %p102 = pneg %p96
      %p103 = scmp.eq.s32.totalorder %s17, 1
      %p104 = por %p102, %p103
      %p105 = scmp.ne.s32.totalorder %s97, %s100
      %p106 = scmp.eq.s32.totalorder %s17, 0
      %p107 = por %p105, %p106
      %p108 = scmp.ne.s32.totalorder %s97, %s100
      %p109 = scmp.eq.s32.totalorder %s22, 1
      %p110 = por %p108, %p109
      %p111 = scmp.ne.s32.totalorder %s100, %s101
      %p112 = scmp.eq.s32.totalorder %s22, 0
      %p113 = por %p111, %p112
      %p114 = scmp.ne.s32.totalorder %s100, %s101
      %p115 = scmp.eq.s32.totalorder %s23, 1
      %p116 = por %p114, %p115
      %p118 = scmp.ne.s32.totalorder %s101, %s117
      %p119 = scmp.eq.s32.totalorder %s23, 0
      %p120 = por %p118, %p119
      %s122 = sadd.s32 %s121, 1
      %p125 = scmp.eq.s32.totalorder %s17, 1
      %p126 = scmp.ne.s32.totalorder %s121, %s123
      %p127 = scmp.eq.s32.totalorder %s17, 0
      %p128 = por %p126, %p127
      %p129 = scmp.ne.s32.totalorder %s121, %s123
      %p130 = scmp.eq.s32.totalorder %s22, 1
      %p131 = por %p129, %p130
      %p132 = scmp.ne.s32.totalorder %s123, %s124
      %p133 = scmp.eq.s32.totalorder %s22, 0
      %p134 = por %p132, %p133
      %p135 = scmp.ne.s32.totalorder %s123, %s124
      %p136 = scmp.eq.s32.totalorder %s23, 1
      %p137 = por %p135, %p136
      %p139 = scmp.ne.s32.totalorder %s124, %s138
      %p140 = scmp.eq.s32.totalorder %s23, 0
      %p141 = por %p139, %p140
      %s143 = sadd.s32 %s142, 1
      %p146 = scmp.eq.s32.totalorder %s17, 1
      %p147 = scmp.ne.s32.totalorder %s142, %s144
      %p148 = scmp.eq.s32.totalorder %s17, 0
      %p149 = por %p147, %p148
      %p150 = scmp.ne.s32.totalorder %s142, %s144
      %p151 = scmp.eq.s32.totalorder %s22, 1
      %p152 = por %p150, %p151
      %p153 = scmp.ne.s32.totalorder %s144, %s145
      %p154 = scmp.eq.s32.totalorder %s22, 0
      %p155 = por %p153, %p154
      %p156 = scmp.ne.s32.totalorder %s144, %s145
      %p157 = scmp.eq.s32.totalorder %s23, 1
      %p158 = por %p156, %p157
      %p160 = scmp.ne.s32.totalorder %s145, %s159
      %p161 = scmp.eq.s32.totalorder %s23, 0
      %p162 = por %p160, %p161
      %s164 = sadd.s32 %s163, 1
      %p167 = scmp.eq.s32.totalorder %s17, 1
      %p168 = scmp.ne.s32.totalorder %s163, %s165
      %p169 = scmp.eq.s32.totalorder %s17, 0
      %p170 = por %p168, %p169
      %p171 = scmp.ne.s32.totalorder %s163, %s165
      %p172 = scmp.eq.s32.totalorder %s22, 1
      %p173 = por %p171, %p172
      %p174 = scmp.ne.s32.totalorder %s165, %s166
      %p175 = scmp.eq.s32.totalorder %s22, 0
      %p176 = por %p174, %p175
      %p177 = scmp.ne.s32.totalorder %s165, %s166
      %p178 = scmp.eq.s32.totalorder %s23, 1
      %p179 = por %p177, %p178
      %p181 = scmp.ne.s32.totalorder %s166, %s180
      %p182 = scmp.eq.s32.totalorder %s23, 0
      %p183 = por %p181, %p182
      %s185 = sadd.s32 %s184, 1
      %p188 = scmp.eq.s32.totalorder %s17, 1
      %p189 = scmp.ne.s32.totalorder %s184, %s186
      %p190 = scmp.eq.s32.totalorder %s17, 0
      %p191 = por %p189, %p190
      %p192 = scmp.ne.s32.totalorder %s184, %s186
      %p193 = scmp.eq.s32.totalorder %s22, 1
      %p194 = por %p192, %p193
      %p195 = scmp.ne.s32.totalorder %s186, %s187
      %p196 = scmp.eq.s32.totalorder %s22, 0
      %p197 = por %p195, %p196
      %p198 = scmp.ne.s32.totalorder %s186, %s187
      %p199 = scmp.eq.s32.totalorder %s23, 1
      %p200 = por %p198, %p199
      %p202 = scmp.ne.s32.totalorder %s187, %s201
      %p203 = scmp.eq.s32.totalorder %s23, 0
      %p204 = por %p202, %p203
      %s206 = sadd.s32 %s205, 1
      %p209 = scmp.eq.s32.totalorder %s17, 1
      %p210 = scmp.ne.s32.totalorder %s205, %s207
      %p211 = scmp.eq.s32.totalorder %s17, 0
      %p212 = por %p210, %p211
      %p213 = scmp.ne.s32.totalorder %s205, %s207
      %p214 = scmp.eq.s32.totalorder %s22, 1
      %p215 = por %p213, %p214
      %p216 = scmp.ne.s32.totalorder %s207, %s208
      %p217 = scmp.eq.s32.totalorder %s22, 0
      %p218 = por %p216, %p217
      %p219 = scmp.ne.s32.totalorder %s207, %s208
      %p220 = scmp.eq.s32.totalorder %s23, 1
      %p221 = por %p219, %p220
      %p223 = scmp.ne.s32.totalorder %s208, %s222
      %p224 = scmp.eq.s32.totalorder %s23, 0
      %p225 = por %p223, %p224
      %s226 = ssub.s32 %s24, %s36
      %p227 = scmp.eq.s32.totalorder %s226, 0
      %s229 = sadd.s32 %s228, 1
      %s230 = scalar_select %p227, %s228, %s229
      %p233 = pneg %p227
      %p234 = scmp.eq.s32.totalorder %s17, 1
      %p235 = por %p233, %p234
      %p236 = scmp.ne.s32.totalorder %s228, %s231
      %p237 = scmp.eq.s32.totalorder %s17, 0
      %p238 = por %p236, %p237
      %p239 = scmp.ne.s32.totalorder %s228, %s231
      %p240 = scmp.eq.s32.totalorder %s22, 1
      %p241 = por %p239, %p240
      %p242 = scmp.ne.s32.totalorder %s231, %s232
      %p243 = scmp.eq.s32.totalorder %s22, 0
      %p244 = por %p242, %p243
      %p245 = scmp.ne.s32.totalorder %s231, %s232
      %p246 = scmp.eq.s32.totalorder %s23, 1
      %p247 = por %p245, %p246
      %p249 = scmp.ne.s32.totalorder %s232, %s248
      %p250 = scmp.eq.s32.totalorder %s23, 0
      %p251 = por %p249, %p250
      %p252 = scmp.le.s32.totalorder 1, %s17
      %p253 = scmp.lt.s32.totalorder %s17, 3
      %p254 = pnand %p252, %p253
      %p255 = pneg %p254
      // Predicated region
      $region9: #{hecto_forward.5} parent=5 // pred_check
        _
      $region10: #{hecto_forward.5} parent=5 // pred_check_branch
        %257 = sbr.rel (%p254) target = $region12
      $region11: #{hecto_forward.5} parent=5 // pred_region
        %s258 = ssub.s32 %s17, 1
        // Predicated region
        $region13: #{hecto_forward.5} parent=11 // pred_check
          %p259 = pneg %p134
        $region14: #{hecto_forward.5} parent=11 // pred_check_branch
          %261 = sbr.rel (%p259) target = $region16
        $region15: #{hecto_forward.5} parent=11 // pred_region
          _
        $region16: #{hecto_forward.5} parent=11 // pred_fallthru
          _
        // Predicated region
        $region17: #{hecto_forward.5} parent=11 // pred_check
          %p262 = pneg %p155
        $region18: #{hecto_forward.5} parent=11 // pred_check_branch
          %264 = sbr.rel (%p262) target = $region20
        $region19: #{hecto_forward.5} parent=11 // pred_region
          _
        $region20: #{hecto_forward.5} parent=11 // pred_fallthru
          _
        // Predicated region
        $region21: #{hecto_forward.5} parent=11 // pred_check
          %p265 = pneg %p176
        $region22: #{hecto_forward.5} parent=11 // pred_check_branch
          %267 = sbr.rel (%p265) target = $region24
        $region23: #{hecto_forward.5} parent=11 // pred_region
          _
        $region24: #{hecto_forward.5} parent=11 // pred_fallthru
          _
        // Predicated region
        $region25: #{hecto_forward.5} parent=11 // pred_check
          %p268 = pneg %p197
        $region26: #{hecto_forward.5} parent=11 // pred_check_branch
          %270 = sbr.rel (%p268) target = $region28
        $region27: #{hecto_forward.5} parent=11 // pred_region
          _
        $region28: #{hecto_forward.5} parent=11 // pred_fallthru
          _
        // Predicated region
        $region29: #{hecto_forward.5} parent=11 // pred_check
          %p271 = pneg %p218
        $region30: #{hecto_forward.5} parent=11 // pred_check_branch
          %273 = sbr.rel (%p271) target = $region32
        $region31: #{hecto_forward.5} parent=11 // pred_region
          _
        $region32: #{hecto_forward.5} parent=11 // pred_fallthru
          _
      $region12: #{hecto_forward.5} parent=5 // pred_fallthru
        _
      %p274 = scmp.lt.s32.totalorder %s17, 2
      // Predicated region
      $region33: #{hecto_forward.5} parent=5 // pred_check
        %p275 = pneg %p274
      $region34: #{hecto_forward.5} parent=5 // pred_check_branch
        %277 = sbr.rel (%p275) target = $region36
      $region35: #{hecto_forward.5} parent=5 // pred_region
        // Predicated region
        $region37: #{hecto_forward.5} parent=35 // pred_check
          %p278 = pneg %p51
        $region38: #{hecto_forward.5} parent=35 // pred_check_branch
          %280 = sbr.rel (%p278) target = $region40
        $region39: #{hecto_forward.5} parent=35 // pred_region
          %p281 = scmp.lt.s32.totalorder %s24, 1
          %s282 = scalar_select %p281, %s24, 1
          %p283 = scmp.lt.s32.totalorder %s25, 0
          %s284 = scalar_select %p283, %s25, 0
          %s285 = smul.addr %s282, 16
          %s286 = sadd.s32 %s284, %s285
          %s287 = smul.addr %s286, 4
          %s288 = scalar_lea.vmem %s0, %s287
        $region40: #{hecto_forward.5} parent=35 // pred_fallthru
          _
        // Predicated region
        $region41: #{hecto_forward.5} parent=35 // pred_check
          %p289 = pneg %p79
        $region42: #{hecto_forward.5} parent=35 // pred_check_branch
          %291 = sbr.rel (%p289) target = $region44
        $region43: #{hecto_forward.5} parent=35 // pred_region
          %p292 = scmp.lt.s32.totalorder %s24, 1
          %s293 = scalar_select %p292, %s24, 1
          %p294 = scmp.lt.s32.totalorder %s25, 0
          %s295 = scalar_select %p294, %s25, 0
          %s296 = smul.addr %s293, 16
          %s297 = sadd.s32 %s295, %s296
          %s298 = smul.addr %s297, 4
          %s299 = scalar_lea.vmem %s1, %s298
        $region44: #{hecto_forward.5} parent=35 // pred_fallthru
          _
        // Predicated region
        $region45: #{hecto_forward.5} parent=35 // pred_check
          %p300 = pneg %p107
        $region46: #{hecto_forward.5} parent=35 // pred_check_branch
          %302 = sbr.rel (%p300) target = $region48
        $region47: #{hecto_forward.5} parent=35 // pred_region
          %p303 = scmp.lt.s32.totalorder %s24, 1
          %s304 = scalar_select %p303, %s24, 1
          %p305 = scmp.lt.s32.totalorder %s25, 0
          %s306 = scalar_select %p305, %s25, 0
          %s307 = sadd.s32 %s306, %s304
          %s308 = scalar_lea.vmem %s2, %s307
        $region48: #{hecto_forward.5} parent=35 // pred_fallthru
          _
      $region36: #{hecto_forward.5} parent=5 // pred_fallthru
        _
      %p309 = scmp.le.s32.totalorder 1, %s17
      %p310 = scmp.lt.s32.totalorder %s17, 3
      %p311 = pnand %p309, %p310
      %p312 = pneg %p311
      // Predicated region
      $region49: #{hecto_forward.5} parent=5 // pred_check
        _
      $region50: #{hecto_forward.5} parent=5 // pred_check_branch
        %314 = sbr.rel (%p311) target = $region52
      $region51: #{hecto_forward.5} parent=5 // pred_region
        %s315 = ssub.s32 %s17, 1
        %p316 = scmp.lt.s32.totalorder %s26, 1
        %s317 = scalar_select %p316, %s26, 1
        %p318 = scmp.lt.s32.totalorder %s27, 0
        %s319 = scalar_select %p318, %s27, 0
        %s320 = smul.addr %s317, 16
        %s321 = sadd.s32 %s319, %s320
        %s322 = smul.addr %s321, 4
        %s323 = scalar_lea.vmem %s0, %s322
        %p324 = pneg %p57
        %p325 = pneg %p54
        %p326 = scmp.lt.s32.totalorder %s26, 1
        %s327 = scalar_select %p326, %s26, 1
        %p328 = scmp.lt.s32.totalorder %s27, 0
        %s329 = scalar_select %p328, %s27, 0
        %s330 = smul.addr %s327, 16
        %s331 = sadd.s32 %s329, %s330
        %s332 = smul.addr %s331, 4
        %s333 = scalar_lea.vmem %s1, %s332
        %p334 = pneg %p85
        %p335 = pneg %p82
        %p336 = scmp.lt.s32.totalorder %s26, 1
        %s337 = scalar_select %p336, %s26, 1
        %p338 = scmp.lt.s32.totalorder %s27, 0
        %s339 = scalar_select %p338, %s27, 0
        %s340 = sadd.s32 %s339, %s337
        %s341 = scalar_lea.vmem %s2, %s340
        %p342 = pneg %p113
        %p343 = pneg %p110
        %p344 = pneg %p134
        %p345 = pneg %p131
        %p346 = pneg %p155
        %p347 = pneg %p152
        %p348 = pneg %p176
        %p349 = pneg %p173
        %p350 = pneg %p197
        %p351 = pneg %p194
        %p352 = pneg %p218
        %p353 = pneg %p215
        %p354 = pneg %p244
        %p355 = pneg %p241
        %s356 = sand.u32 %s231, 1
        %s357 = scalar_lea.sflag [#allocation5], %s356
        %s358 = sand.u32 %s231, 1
        %s359 = smul.addr %s358, 32
        %s360 = scalar_lea.vmem [#allocation4], %s359
        %p361 = scmp.lt.s32.totalorder %s26, 1
        %s362 = scalar_select %p361, %s26, 1
        %p363 = scmp.lt.s32.totalorder %s27, 0
        %s364 = scalar_select %p363, %s27, 0
        %s365 = smul.addr %s362, 16
        %s366 = sadd.s32 %s364, %s365
        %s367 = smul.addr %s366, 4
        %s368 = scalar_lea.vmem %s0, %s367
        %p369 = scmp.lt.s32.totalorder %s26, 1
        %s370 = scalar_select %p369, %s26, 1
        %p371 = scmp.lt.s32.totalorder %s27, 0
        %s372 = scalar_select %p371, %s27, 0
        %s373 = smul.addr %s370, 16
        %s374 = sadd.s32 %s372, %s373
        %s375 = smul.addr %s374, 4
        %s376 = scalar_lea.vmem %s1, %s375
        %p377 = scmp.lt.s32.totalorder %s26, 1
        %s378 = scalar_select %p377, %s26, 1
        %p379 = scmp.lt.s32.totalorder %s27, 0
        %s380 = scalar_select %p379, %s27, 0
        %s381 = sadd.s32 %s380, %s378
        %s382 = scalar_lea.vmem %s2, %s381
        %p387 = scmp.eq.s32.totalorder %s27, 0
        // Predicated region
        $region53: #{hecto_forward.5} parent=51 // pred_check
          %p388 = pneg %p387
        $region54: #{hecto_forward.5} parent=51 // pred_check_branch
          %390 = sbr.rel (%p388) target = $region56
        $region55: #{hecto_forward.5} parent=51 // pred_region
          %vm391 = vcmask 130048
          %392 = vst.msk [vmem:[#allocation2] sm:$0xff] %vm391, 0.0
          %393 = vst.msk [vmem:[#allocation2 + $0x8] sm:$0xff] %vm391, 0.0
          %394 = vst.msk [vmem:[#allocation2 + $0x10] sm:$0xff] %vm391, 0.0
          %395 = vst.msk [vmem:[#allocation2 + $0x18] sm:$0xff] %vm391, 0.0
          %396 = vst.msk [vmem:[#allocation2 + $0x20] sm:$0xff] %vm391, 0.0
          %397 = vst.msk [vmem:[#allocation2 + $0x28] sm:$0xff] %vm391, 0.0
          %398 = vst.msk [vmem:[#allocation2 + $0x30] sm:$0xff] %vm391, 0.0
          %399 = vst.msk [vmem:[#allocation2 + $0x38] sm:$0xff] %vm391, 0.0
          %400 = vst.msk [vmem:[#allocation2 + $0x40] sm:$0xff] %vm391, 0.0
          %401 = vst.msk [vmem:[#allocation2 + $0x48] sm:$0xff] %vm391, 0.0
          %402 = vst.msk [vmem:[#allocation2 + $0x50] sm:$0xff] %vm391, 0.0
          %403 = vst.msk [vmem:[#allocation2 + $0x58] sm:$0xff] %vm391, 0.0
          %404 = vst.msk [vmem:[#allocation2 + $0x60] sm:$0xff] %vm391, 0.0
          %405 = vst.msk [vmem:[#allocation2 + $0x68] sm:$0xff] %vm391, 0.0
          %406 = vst.msk [vmem:[#allocation2 + $0x70] sm:$0xff] %vm391, 0.0
          %407 = vst.msk [vmem:[#allocation2 + $0x78] sm:$0xff] %vm391, 0.0
          %vm408 = vcmask 122880
          %409 = vst.msk [vmem:[#allocation3] sm:$0x1] %vm408, 0.0
        $region56: #{hecto_forward.5} parent=51 // pred_fallthru
          _
        %s410 = smul.u32 %s27, 64
        %s411 = sshra.s32 %s410, 3
        %s412 = sand.u32 %s410, 7
        %s413 = smul.addr %s411, 4
        %s414 = scalar_lea.vmem %s3, %s413
        %v415 = vld [vmem:[%s414] sm:$0xf]
        %v416 = vld [vmem:[%s414 + $0x4] sm:$0xf]
        %v417 = vld [vmem:[%s414 + $0x8] sm:$0xf]
        %v418 = vld [vmem:[%s414 + $0xc] sm:$0xf]
        %v419 = vld [vmem:[%s414 + $0x10] sm:$0xf]
        %v420 = vld [vmem:[%s414 + $0x14] sm:$0xf]
        %v421 = vld [vmem:[%s414 + $0x18] sm:$0xf]
        %v422 = vld [vmem:[%s414 + $0x1c] sm:$0xf]
        %v423 = vld [vmem:[%s382] sm:$0x1]
        %v424 = vsub.bf16 1065369472, %v423
        %vm425 = vcmp.gt.bf16.partialorder %v424, 0
        %v426 = vld [vmem:[%s368] sm:$0xf]
        %v427 = vld [vmem:[%s368 + $0x4] sm:$0xf]
        %v428 = vld [vmem:[%s368 + $0x8] sm:$0xf]
        %v429 = vld [vmem:[%s368 + $0xc] sm:$0xf]
        %v430 = vld [vmem:[%s368 + $0x10] sm:$0xf]
        %v431 = vld [vmem:[%s368 + $0x14] sm:$0xf]
        %v432 = vld [vmem:[%s368 + $0x18] sm:$0xf]
        %v433 = vld [vmem:[%s368 + $0x1c] sm:$0xf]
        %v434 = vld [vmem:[%s368 + $0x20] sm:$0xf]
        %v435 = vld [vmem:[%s368 + $0x24] sm:$0xf]
        %v436 = vld [vmem:[%s368 + $0x28] sm:$0xf]
        %v437 = vld [vmem:[%s368 + $0x2c] sm:$0xf]
        %v438 = vld [vmem:[%s368 + $0x30] sm:$0xf]
        %v439 = vld [vmem:[%s368 + $0x34] sm:$0xf]
        %v440 = vld [vmem:[%s368 + $0x38] sm:$0xf]
        %v441 = vld [vmem:[%s368 + $0x3c] sm:$0xf]
        %v442 = vld [vmem:[%s376] sm:$0xf]
        %v443 = vld [vmem:[%s376 + $0x4] sm:$0xf]
        %v444 = vld [vmem:[%s376 + $0x8] sm:$0xf]
        %v445 = vld [vmem:[%s376 + $0xc] sm:$0xf]
        %v446 = vld [vmem:[%s376 + $0x10] sm:$0xf]
        %v447 = vld [vmem:[%s376 + $0x14] sm:$0xf]
        %v448 = vld [vmem:[%s376 + $0x18] sm:$0xf]
        %v449 = vld [vmem:[%s376 + $0x1c] sm:$0xf]
        %v450 = vld [vmem:[%s376 + $0x20] sm:$0xf]
        %v451 = vld [vmem:[%s376 + $0x24] sm:$0xf]
        %v452 = vld [vmem:[%s376 + $0x28] sm:$0xf]
        %v453 = vld [vmem:[%s376 + $0x2c] sm:$0xf]
        %v454 = vld [vmem:[%s376 + $0x30] sm:$0xf]
        %v455 = vld [vmem:[%s376 + $0x34] sm:$0xf]
        %v456 = vld [vmem:[%s376 + $0x38] sm:$0xf]
        %v457 = vld [vmem:[%s376 + $0x3c] sm:$0xf]
        %v458 = vadd.bf16 %v426, %v442
        %v459 = vadd.bf16 %v427, %v443
        %v460 = vadd.bf16 %v428, %v444
        %v461 = vadd.bf16 %v429, %v445
        %v462 = vadd.bf16 %v430, %v446
        %v463 = vadd.bf16 %v431, %v447
        %v464 = vadd.bf16 %v432, %v448
        %v465 = vadd.bf16 %v433, %v449
        %v466 = vadd.bf16 %v434, %v450
        %v467 = vadd.bf16 %v435, %v451
        %v468 = vadd.bf16 %v436, %v452
        %v469 = vadd.bf16 %v437, %v453
        %v470 = vadd.bf16 %v438, %v454
        %v471 = vadd.bf16 %v439, %v455
        %v472 = vadd.bf16 %v440, %v456
        %v473 = vadd.bf16 %v441, %v457
        %v474 = vsel %vm425, 65537, 0
        %v475 = vunpack.c.l.b16 %v474
        %vm476 = vcmp.ne.s32.totalorder %v475, 0
        %v477 = vsel %vm476, 1, 0
        %v478 = vlaneseq
        %v479 = vshrl.u32 %v478, 7
        %v480 = vsub.s32 0, %v479
        %v481 = vrot.slane %v477, %v480
        %vm482 = vcmp.eq.s32.totalorder %v481, 1
        %vm483 = vmpackc.low %vm482, %vm482
        %v484 = vsel %vm483, %v458, 0
        %v485 = vsel %vm483, %v459, 0
        %v486 = vsel %vm483, %v460, 0
        %v487 = vsel %vm483, %v461, 0
        %v488 = vsel %vm483, %v462, 0
        %v489 = vsel %vm483, %v463, 0
        %v490 = vsel %vm483, %v464, 0
        %v491 = vsel %vm483, %v465, 0
        %v492 = vsel %vm483, %v466, 0
        %v493 = vsel %vm483, %v467, 0
        %v494 = vsel %vm483, %v468, 0
        %v495 = vsel %vm483, %v469, 0
        %v496 = vsel %vm483, %v470, 0
        %v497 = vsel %vm483, %v471, 0
        %v498 = vsel %vm483, %v472, 0
        %v499 = vsel %vm483, %v473, 0
        %v500 = vld [vmem:[#allocation2] sm:$0xff]
        %v501 = vld [vmem:[#allocation2 + $0x8] sm:$0xff]
        %v502 = vld [vmem:[#allocation2 + $0x10] sm:$0xff]
        %v503 = vld [vmem:[#allocation2 + $0x18] sm:$0xff]
        %v504 = vld [vmem:[#allocation2 + $0x20] sm:$0xff]
        %v505 = vld [vmem:[#allocation2 + $0x28] sm:$0xff]
        %v506 = vld [vmem:[#allocation2 + $0x30] sm:$0xff]
        %v507 = vld [vmem:[#allocation2 + $0x38] sm:$0xff]
        %v508 = vld [vmem:[#allocation2 + $0x40] sm:$0xff]
        %v509 = vld [vmem:[#allocation2 + $0x48] sm:$0xff]
        %v510 = vld [vmem:[#allocation2 + $0x50] sm:$0xff]
        %v511 = vld [vmem:[#allocation2 + $0x58] sm:$0xff]
        %v512 = vld [vmem:[#allocation2 + $0x60] sm:$0xff]
        %v513 = vld [vmem:[#allocation2 + $0x68] sm:$0xff]
        %v514 = vld [vmem:[#allocation2 + $0x70] sm:$0xff]
        %v515 = vld [vmem:[#allocation2 + $0x78] sm:$0xff]
        %v532 = vunpack.c.l.b16 %v484
        %v533 = vunpack.c.l.b16 %v485
        %v534 = vunpack.c.l.b16 %v486
        %v535 = vunpack.c.l.b16 %v487
        %v536 = vunpack.c.l.b16 %v488
        %v537 = vunpack.c.l.b16 %v489
        %v538 = vunpack.c.l.b16 %v490
        %v539 = vunpack.c.l.b16 %v491
        %v540 = vunpack.c.l.b16 %v492
        %v541 = vunpack.c.l.b16 %v493
        %v542 = vunpack.c.l.b16 %v494
        %v543 = vunpack.c.l.b16 %v495
        %v544 = vunpack.c.l.b16 %v496
        %v545 = vunpack.c.l.b16 %v497
        %v546 = vunpack.c.l.b16 %v498
        %v547 = vunpack.c.l.b16 %v499
        %v548 = vpack.c.b16 %v533, %v532
        %v549 = vpack.c.b16 %v535, %v534
        %v550 = vpack.c.b16 %v537, %v536
        %v551 = vpack.c.b16 %v539, %v538
        %v552 = vpack.c.b16 %v541, %v540
        %v553 = vpack.c.b16 %v543, %v542
        %v554 = vpack.c.b16 %v545, %v544
        %v555 = vpack.c.b16 %v547, %v546
        %v564 = vunpack.c.l.b16 %v415
        %v565 = vunpack.c.l.b16 %v416
        %v566 = vunpack.c.l.b16 %v417
        %v567 = vunpack.c.l.b16 %v418
        %v568 = vunpack.c.l.b16 %v419
        %v569 = vunpack.c.l.b16 %v420
        %v570 = vunpack.c.l.b16 %v421
        %v571 = vunpack.c.l.b16 %v422
        %v572 = vpack.c.b16 %v565, %v564
        %v573 = vpack.c.b16 %v567, %v566
        %v574 = vpack.c.b16 %v569, %v568
        %v575 = vpack.c.b16 %v571, %v570
        %vm580 = vcmask 523264
        %v582 = vsel %vm580, %v548, 0
        %v585 = vsel %vm580, %v549, 0
        %v588 = vsel %vm580, %v550, 0
        %v591 = vsel %vm580, %v551, 0
        %v594 = vsel %vm580, %v552, 0
        %v597 = vsel %vm580, %v553, 0
        %v600 = vsel %vm580, %v554, 0
        %v603 = vsel %vm580, %v555, 0
        %605 = vmatprep.subr.bf16.mxu0 0
        %606 = vmatpush1.bf16.msra.mxu0 %v572
        %607 = vmatprep.subr.bf16.mxu0 0
        %608 = vmatpush1.bf16.msra.mxu0 %v573
        %609 = vmatprep.subr.bf16.mxu0 0
        %610 = vmatpush1.bf16.msra.mxu0 %v574
        %611 = vmatprep.subr.bf16.mxu0 0
        %612 = vmatpush1.bf16.msra.mxu0 %v575
        %613 = vmatprep.subr.bf16.mxu0 0
        %614 = vmatpush1.bf16.msra.mxu0 0
        %615 = vmatprep.subr.bf16.mxu0 0
        %616 = vmatpush1.bf16.msra.mxu0 0
        %617 = vmatprep.subr.bf16.mxu0 0
        %618 = vmatpush1.bf16.msra.mxu0 0
        %619 = vmatprep.subr.bf16.mxu0 0
        %620 = vmatpush1.bf16.msra.mxu0 0
        %621 = vmatprep.subr.bf16.mxu0 0
        %622 = vmatpush1.bf16.msra.mxu0 0
        %623 = vmatprep.subr.bf16.mxu0 0
        %624 = vmatpush1.bf16.msra.mxu0 0
        %625 = vmatprep.subr.bf16.mxu0 0
        %626 = vmatpush1.bf16.msra.mxu0 0
        %627 = vmatprep.subr.bf16.mxu0 0
        %628 = vmatpush1.bf16.msra.mxu0 0
        %629 = vmatprep.subr.bf16.mxu0 0
        %630 = vmatpush1.bf16.msra.mxu0 0
        %631 = vmatprep.subr.bf16.mxu0 0
        %632 = vmatpush1.bf16.msra.mxu0 0
        %633 = vmatprep.subr.bf16.mxu0 0
        %634 = vmatpush1.bf16.msra.mxu0 0
        %635 = vmatprep.subr.bf16.mxu0 0
        %636 = vmatpush1.bf16.msra.mxu0 0
        %637 = vmatprep.mubr.bf16.mxu0 0
        %638 = vmatmul.mubr.bf16.gmra.mrb[0].mxu0 %v582
        %v639 = vpop.f32.mrb[0].mxu0
        %v640 = vadd.f32 0.0, %v639
        %v641 = vpop.f32.mrb[0].mxu0
        %v642 = vpop.f32.mrb[0].mxu0
        %v643 = vadd.f32 0.0, %v642
        %v644 = vpop.f32.mrb[0].mxu0
        %645 = vmatprep.mubr.bf16.mxu0 0
        %646 = vmatmul.mubr.bf16.gmra.mrb[0].mxu0 %v585
        %v647 = vpop.f32.mrb[0].mxu0
        %v648 = vadd.f32 0.0, %v647
        %v649 = vpop.f32.mrb[0].mxu0
        %v650 = vpop.f32.mrb[0].mxu0
        %v651 = vadd.f32 0.0, %v650
        %v652 = vpop.f32.mrb[0].mxu0
        %653 = vmatprep.mubr.bf16.mxu0 0
        %654 = vmatmul.mubr.bf16.gmra.mrb[0].mxu0 %v588
        %v655 = vpop.f32.mrb[0].mxu0
        %v656 = vadd.f32 0.0, %v655
        %v657 = vpop.f32.mrb[0].mxu0
        %v658 = vpop.f32.mrb[0].mxu0
        %v659 = vadd.f32 0.0, %v658
        %v660 = vpop.f32.mrb[0].mxu0
        %661 = vmatprep.mubr.bf16.mxu0 0
        %662 = vmatmul.mubr.bf16.gmra.mrb[0].mxu0 %v591
        %v663 = vpop.f32.mrb[0].mxu0
        %v664 = vadd.f32 0.0, %v663
        %v665 = vpop.f32.mrb[0].mxu0
        %v666 = vpop.f32.mrb[0].mxu0
        %v667 = vadd.f32 0.0, %v666
        %v668 = vpop.f32.mrb[0].mxu0
        %669 = vmatprep.mubr.bf16.mxu0 0
        %670 = vmatmul.mubr.bf16.gmra.mrb[0].mxu0 %v594
        %v671 = vpop.f32.mrb[0].mxu0
        %v672 = vadd.f32 0.0, %v671
        %v673 = vpop.f32.mrb[0].mxu0
        %v674 = vpop.f32.mrb[0].mxu0
        %v675 = vadd.f32 0.0, %v674
        %v676 = vpop.f32.mrb[0].mxu0
        %677 = vmatprep.mubr.bf16.mxu0 0
        %678 = vmatmul.mubr.bf16.gmra.mrb[0].mxu0 %v597
        %v679 = vpop.f32.mrb[0].mxu0
        %v680 = vadd.f32 0.0, %v679
        %v681 = vpop.f32.mrb[0].mxu0
        %v682 = vpop.f32.mrb[0].mxu0
        %v683 = vadd.f32 0.0, %v682
        %v684 = vpop.f32.mrb[0].mxu0
        %685 = vmatprep.mubr.bf16.mxu0 0
        %686 = vmatmul.mubr.bf16.gmra.mrb[0].mxu0 %v600
        %v687 = vpop.f32.mrb[0].mxu0
        %v688 = vadd.f32 0.0, %v687
        %v689 = vpop.f32.mrb[0].mxu0
        %v690 = vpop.f32.mrb[0].mxu0
        %v691 = vadd.f32 0.0, %v690
        %v692 = vpop.f32.mrb[0].mxu0
        %693 = vmatprep.mubr.bf16.mxu0 0
        %694 = vmatmul.mubr.bf16.gmra.mrb[0].mxu0 %v603
        %v695 = vpop.f32.mrb[0].mxu0
        %v696 = vadd.f32 0.0, %v695
        %v697 = vpop.f32.mrb[0].mxu0
        %v698 = vpop.f32.mrb[0].mxu0
        %v699 = vadd.f32 0.0, %v698
        %v700 = vpop.f32.mrb[0].mxu0
        %701 = vdwg.mxu0
        %v702 = vadd.f32 %v500, %v640
        %v703 = vadd.f32 %v501, %v643
        %v704 = vadd.f32 %v502, %v648
        %v705 = vadd.f32 %v503, %v651
        %v706 = vadd.f32 %v504, %v656
        %v707 = vadd.f32 %v505, %v659
        %v708 = vadd.f32 %v506, %v664
        %v709 = vadd.f32 %v507, %v667
        %v710 = vadd.f32 %v508, %v672
        %v711 = vadd.f32 %v509, %v675
        %v712 = vadd.f32 %v510, %v680
        %v713 = vadd.f32 %v511, %v683
        %v714 = vadd.f32 %v512, %v688
        %v715 = vadd.f32 %v513, %v691
        %v716 = vadd.f32 %v514, %v696
        %v717 = vadd.f32 %v515, %v699
        %vm718 = vcmask 130048
        %719 = vst.msk [vmem:[#allocation2] sm:$0xff] %vm718, %v702
        %720 = vst.msk [vmem:[#allocation2 + $0x8] sm:$0xff] %vm718, %v703
        %721 = vst.msk [vmem:[#allocation2 + $0x10] sm:$0xff] %vm718, %v704
        %722 = vst.msk [vmem:[#allocation2 + $0x18] sm:$0xff] %vm718, %v705
        %723 = vst.msk [vmem:[#allocation2 + $0x20] sm:$0xff] %vm718, %v706
        %724 = vst.msk [vmem:[#allocation2 + $0x28] sm:$0xff] %vm718, %v707
        %725 = vst.msk [vmem:[#allocation2 + $0x30] sm:$0xff] %vm718, %v708
        %726 = vst.msk [vmem:[#allocation2 + $0x38] sm:$0xff] %vm718, %v709
        %727 = vst.msk [vmem:[#allocation2 + $0x40] sm:$0xff] %vm718, %v710
        %728 = vst.msk [vmem:[#allocation2 + $0x48] sm:$0xff] %vm718, %v711
        %729 = vst.msk [vmem:[#allocation2 + $0x50] sm:$0xff] %vm718, %v712
        %730 = vst.msk [vmem:[#allocation2 + $0x58] sm:$0xff] %vm718, %v713
        %731 = vst.msk [vmem:[#allocation2 + $0x60] sm:$0xff] %vm718, %v714
        %732 = vst.msk [vmem:[#allocation2 + $0x68] sm:$0xff] %vm718, %v715
        %733 = vst.msk [vmem:[#allocation2 + $0x70] sm:$0xff] %vm718, %v716
        %734 = vst.msk [vmem:[#allocation2 + $0x78] sm:$0xff] %vm718, %v717
        %v735 = vld [vmem:[#allocation3] sm:$0x1]
        %v737 = vsel %vm580, %v424, 0
        %739 = vmatprep.subr.bf16.mxu0 0
        %740 = vmatpush1.bf16.msra.mxu0 %v572
        %741 = vmatprep.subr.bf16.mxu0 0
        %742 = vmatpush1.bf16.msra.mxu0 %v573
        %743 = vmatprep.subr.bf16.mxu0 0
        %744 = vmatpush1.bf16.msra.mxu0 %v574
        %745 = vmatprep.subr.bf16.mxu0 0
        %746 = vmatpush1.bf16.msra.mxu0 %v575
        %747 = vmatprep.subr.bf16.mxu0 0
        %748 = vmatpush1.bf16.msra.mxu0 0
        %749 = vmatprep.subr.bf16.mxu0 0
        %750 = vmatpush1.bf16.msra.mxu0 0
        %751 = vmatprep.subr.bf16.mxu0 0
        %752 = vmatpush1.bf16.msra.mxu0 0
        %753 = vmatprep.subr.bf16.mxu0 0
        %754 = vmatpush1.bf16.msra.mxu0 0
        %755 = vmatprep.subr.bf16.mxu0 0
        %756 = vmatpush1.bf16.msra.mxu0 0
        %757 = vmatprep.subr.bf16.mxu0 0
        %758 = vmatpush1.bf16.msra.mxu0 0
        %759 = vmatprep.subr.bf16.mxu0 0
        %760 = vmatpush1.bf16.msra.mxu0 0
        %761 = vmatprep.subr.bf16.mxu0 0
        %762 = vmatpush1.bf16.msra.mxu0 0
        %763 = vmatprep.subr.bf16.mxu0 0
        %764 = vmatpush1.bf16.msra.mxu0 0
        %765 = vmatprep.subr.bf16.mxu0 0
        %766 = vmatpush1.bf16.msra.mxu0 0
        %767 = vmatprep.subr.bf16.mxu0 0
        %768 = vmatpush1.bf16.msra.mxu0 0
        %769 = vmatprep.subr.bf16.mxu0 0
        %770 = vmatpush1.bf16.msra.mxu0 0
        %771 = vmatprep.mubr.bf16.mxu0 0
        %772 = vmatmul.mubr.bf16.gmra.mrb[0].mxu0 %v737
        %v773 = vpop.f32.mrb[0].mxu0
        %v774 = vadd.f32 0.0, %v773
        %v775 = vpop.f32.mrb[0].mxu0
        %v776 = vpop.f32.mrb[0].mxu0
        %v777 = vpop.f32.mrb[0].mxu0
        %778 = vdwg.mxu0
        %v779 = vadd.f32 %v735, %v774
        %vm780 = vcmask 122880
        %781 = vst.msk [vmem:[#allocation3] sm:$0x1] %vm780, %v779
        // Predicated region
        $region57: #{hecto_forward.5} parent=51 // pred_check
          %p782 = pneg %p387
        $region58: #{hecto_forward.5} parent=51 // pred_check_branch
          %784 = sbr.rel (%p782) target = $region60
        $region59: #{hecto_forward.5} parent=51 // pred_region
          %v785 = vld [vmem:[#allocation3] sm:$0x1]
          %v786 = vmul.f32 %v785, 0.25
          %v787 = vmax.f32 %v786, 1e-06
          %v788 = vrcp.pop %v787
          %v789 = vld [vmem:[#allocation2] sm:$0xff]
          %v790 = vld [vmem:[#allocation2 + $0x8] sm:$0xff]
          %v791 = vld [vmem:[#allocation2 + $0x10] sm:$0xff]
          %v792 = vld [vmem:[#allocation2 + $0x18] sm:$0xff]
          %v793 = vld [vmem:[#allocation2 + $0x20] sm:$0xff]
          %v794 = vld [vmem:[#allocation2 + $0x28] sm:$0xff]
          %v795 = vld [vmem:[#allocation2 + $0x30] sm:$0xff]
          %v796 = vld [vmem:[#allocation2 + $0x38] sm:$0xff]
          %v797 = vld [vmem:[#allocation2 + $0x40] sm:$0xff]
          %v798 = vld [vmem:[#allocation2 + $0x48] sm:$0xff]
          %v799 = vld [vmem:[#allocation2 + $0x50] sm:$0xff]
          %v800 = vld [vmem:[#allocation2 + $0x58] sm:$0xff]
          %v801 = vld [vmem:[#allocation2 + $0x60] sm:$0xff]
          %v802 = vld [vmem:[#allocation2 + $0x68] sm:$0xff]
          %v803 = vld [vmem:[#allocation2 + $0x70] sm:$0xff]
          %v804 = vld [vmem:[#allocation2 + $0x78] sm:$0xff]
          %v805 = vmul.f32 %v789, 0.25
          %v806 = vmul.f32 %v790, 0.25
          %v807 = vmul.f32 %v791, 0.25
          %v808 = vmul.f32 %v792, 0.25
          %v809 = vmul.f32 %v793, 0.25
          %v810 = vmul.f32 %v794, 0.25
          %v811 = vmul.f32 %v795, 0.25
          %v812 = vmul.f32 %v796, 0.25
          %v813 = vmul.f32 %v797, 0.25
          %v814 = vmul.f32 %v798, 0.25
          %v815 = vmul.f32 %v799, 0.25
          %v816 = vmul.f32 %v800, 0.25
          %v817 = vmul.f32 %v801, 0.25
          %v818 = vmul.f32 %v802, 0.25
          %v819 = vmul.f32 %v803, 0.25
          %v820 = vmul.f32 %v804, 0.25
          %v822 = vlaneseq
          %v823 = vshrl.u32 %v822, 7
          %v824 = vsub.s32 0, %v823
          %v825 = vrot.slane %v788, %v824
          %v827 = vmul.f32 %v805, %v825
          %v828 = vmul.f32 %v806, %v825
          %v829 = vmul.f32 %v807, %v825
          %v830 = vmul.f32 %v808, %v825
          %v831 = vmul.f32 %v809, %v825
          %v832 = vmul.f32 %v810, %v825
          %v833 = vmul.f32 %v811, %v825
          %v834 = vmul.f32 %v812, %v825
          %v835 = vmul.f32 %v813, %v825
          %v836 = vmul.f32 %v814, %v825
          %v837 = vmul.f32 %v815, %v825
          %v838 = vmul.f32 %v816, %v825
          %v839 = vmul.f32 %v817, %v825
          %v840 = vmul.f32 %v818, %v825
          %v841 = vmul.f32 %v819, %v825
          %v842 = vmul.f32 %v820, %v825
          %v843 = vpack.c.bf16 %v828, %v827
          %v844 = vpack.c.bf16 %v830, %v829
          %v845 = vpack.c.bf16 %v832, %v831
          %v846 = vpack.c.bf16 %v834, %v833
          %v847 = vpack.c.bf16 %v836, %v835
          %v848 = vpack.c.bf16 %v838, %v837
          %v849 = vpack.c.bf16 %v840, %v839
          %v850 = vpack.c.bf16 %v842, %v841
          %v851 = vld [vmem:[%s4] sm:$0xff]
          %v852 = vld [vmem:[%s4 + $0x8] sm:$0xff]
          %v853 = vld [vmem:[%s4 + $0x10] sm:$0xff]
          %v854 = vld [vmem:[%s4 + $0x18] sm:$0xff]
          %v855 = vld [vmem:[%s4 + $0x20] sm:$0xff]
          %v856 = vld [vmem:[%s4 + $0x28] sm:$0xff]
          %v857 = vld [vmem:[%s4 + $0x30] sm:$0xff]
          %v858 = vld [vmem:[%s4 + $0x38] sm:$0xff]
          %v859 = vld [vmem:[%s4 + $0x40] sm:$0xff]
          %v860 = vld [vmem:[%s4 + $0x48] sm:$0xff]
          %v861 = vld [vmem:[%s4 + $0x50] sm:$0xff]
          %v862 = vld [vmem:[%s4 + $0x58] sm:$0xff]
          %v863 = vld [vmem:[%s4 + $0x60] sm:$0xff]
          %v864 = vld [vmem:[%s4 + $0x68] sm:$0xff]
          %v865 = vld [vmem:[%s4 + $0x70] sm:$0xff]
          %v866 = vld [vmem:[%s4 + $0x78] sm:$0xff]
          %v867 = vld [vmem:[%s5] sm:$0x3]
          %868 = vxpose.xlu0.b32.start [1/16] %v788, 128
          %869 = vxpose.xlu0.b32.cont [2/16] 0.0, 128
          %870 = vxpose.xlu0.b32.cont [3/16] 0.0, 128
          %871 = vxpose.xlu0.b32.cont [4/16] 0.0, 128
          %872 = vxpose.xlu0.b32.cont [5/16] 0.0, 128
          %873 = vxpose.xlu0.b32.cont [6/16] 0.0, 128
          %874 = vxpose.xlu0.b32.cont [7/16] 0.0, 128
          %875 = vxpose.xlu0.b32.cont [8/16] 0.0, 128
          %876 = vxpose.xlu0.b32.cont [9/16] 0.0, 128
          %877 = vxpose.xlu0.b32.cont [10/16] 0.0, 128
          %878 = vxpose.xlu0.b32.cont [11/16] 0.0, 128
          %879 = vxpose.xlu0.b32.cont [12/16] 0.0, 128
          %880 = vxpose.xlu0.b32.cont [13/16] 0.0, 128
          %881 = vxpose.xlu0.b32.cont [14/16] 0.0, 128
          %882 = vxpose.xlu0.b32.cont [15/16] 0.0, 128
          %883 = vxpose.xlu0.b32.end [16/16] 0.0, 128
          %v884 = vpop.trf.xlu0
          %v885 = vpop.trf.xlu0
          %v886 = vpop.trf.xlu0
          %v887 = vpop.trf.xlu0
          %v888 = vpop.trf.xlu0
          %v889 = vpop.trf.xlu0
          %v890 = vpop.trf.xlu0
          %v891 = vpop.trf.xlu0
          %v892 = vpop.trf.xlu0
          %v893 = vpop.trf.xlu0
          %v894 = vpop.trf.xlu0
          %v895 = vpop.trf.xlu0
          %v896 = vpop.trf.xlu0
          %v897 = vpop.trf.xlu0
          %v898 = vpop.trf.xlu0
          %v899 = vpop.trf.xlu0
          %v901 = vlaneseq
          %v902 = vshrl.u32 %v901, 7
          %v903 = vsub.s32 0, %v902
          %v904 = vrot.slane %v867, %v903
          %v905 = vlaneseq
          %v906 = vshrl.u32 %v905, 7
          %v907 = vsub.s32 1, %v906
          %v908 = vrot.slane %v867, %v907
          %vm909 = vcmask 7168
          %v911 = vsel %vm909, %v884, 0
          %v914 = vsel %vm909, %v885, 0
          %vm916 = vcmask 1040384
          %v917 = vsel %vm916, %v904, 0
          %v919 = vsel %vm916, %v908, 0
          %921 = vmatprep.subr.mxu0 %v919
          %922 = vmatpush1.msra.mxu0 %v917
          %923 = vmatprep.subr.mxu0 0.0
          %924 = vmatpush1.msra.mxu0 0.0
          %925 = vmatprep.subr.mxu0 0.0
          %926 = vmatpush1.msra.mxu0 0.0
          %927 = vmatprep.subr.mxu0 0.0
          %928 = vmatpush1.msra.mxu0 0.0
          %929 = vmatprep.subr.mxu0 0.0
          %930 = vmatpush1.msra.mxu0 0.0
          %931 = vmatprep.subr.mxu0 0.0
          %932 = vmatpush1.msra.mxu0 0.0
          %933 = vmatprep.subr.mxu0 0.0
          %934 = vmatpush1.msra.mxu0 0.0
          %935 = vmatprep.subr.mxu0 0.0
          %936 = vmatpush1.msra.mxu0 0.0
          %937 = vmatprep.subr.mxu0 0.0
          %938 = vmatpush1.msra.mxu0 0.0
          %939 = vmatprep.subr.mxu0 0.0
          %940 = vmatpush1.msra.mxu0 0.0
          %941 = vmatprep.subr.mxu0 0.0
          %942 = vmatpush1.msra.mxu0 0.0
          %943 = vmatprep.subr.mxu0 0.0
          %944 = vmatpush1.msra.mxu0 0.0
          %945 = vmatprep.subr.mxu0 0.0
          %946 = vmatpush1.msra.mxu0 0.0
          %947 = vmatprep.subr.mxu0 0.0
          %948 = vmatpush1.msra.mxu0 0.0
          %949 = vmatprep.subr.mxu0 0.0
          %950 = vmatpush1.msra.mxu0 0.0
          %951 = vmatprep.subr.mxu0 0.0
          %952 = vmatpush1.msra.mxu0 0.0
          %953 = vmatprep.subr.mxu0 0.0
          %954 = vmatpush1.msra.mxu0 0.0
          %955 = vmatprep.subr.mxu0 0.0
          %956 = vmatpush1.msra.mxu0 0.0
          %957 = vmatprep.subr.mxu0 0.0
          %958 = vmatpush1.msra.mxu0 0.0
          %959 = vmatprep.subr.mxu0 0.0
          %960 = vmatpush1.msra.mxu0 0.0
          %961 = vmatprep.subr.mxu0 0.0
          %962 = vmatpush1.msra.mxu0 0.0
          %963 = vmatprep.subr.mxu0 0.0
          %964 = vmatpush1.msra.mxu0 0.0
          %965 = vmatprep.subr.mxu0 0.0
          %966 = vmatpush1.msra.mxu0 0.0
          %967 = vmatprep.subr.mxu0 0.0
          %968 = vmatpush1.msra.mxu0 0.0
          %969 = vmatprep.subr.mxu0 0.0
          %970 = vmatpush1.msra.mxu0 0.0
          %971 = vmatprep.subr.mxu0 0.0
          %972 = vmatpush1.msra.mxu0 0.0
          %973 = vmatprep.subr.mxu0 0.0
          %974 = vmatpush1.msra.mxu0 0.0
          %975 = vmatprep.subr.mxu0 0.0
          %976 = vmatpush1.msra.mxu0 0.0
          %977 = vmatprep.subr.mxu0 0.0
          %978 = vmatpush1.msra.mxu0 0.0
          %979 = vmatprep.subr.mxu0 0.0
          %980 = vmatpush1.msra.mxu0 0.0
          %981 = vmatprep.subr.mxu0 0.0
          %982 = vmatpush1.msra.mxu0 0.0
          %983 = vmatprep.subr.mxu0 0.0
          %984 = vmatpush1.msra.mxu0 0.0
          %985 = vmatprep.mubr.f32.mxu0 0.0
          %986 = vmatmul.mubr.f32.gmra.mrb[0].mxu0 %v911
          %v987 = vpop.f32.mrb[0].mxu0
          %v988 = vadd.f32 0.0, %v987
          %v989 = vpop.f32.mrb[0].mxu0
          %v990 = vadd.f32 0.0, %v989
          %991 = vmatprep.mubr.f32.mxu0 0.0
          %992 = vmatmul.mubr.f32.gmra.mrb[0].mxu0 %v914
          %v993 = vpop.f32.mrb[0].mxu0
          %v994 = vadd.f32 0.0, %v993
          %v995 = vpop.f32.mrb[0].mxu0
          %v996 = vadd.f32 0.0, %v995
          %997 = vdwg.mxu0
          %998 = vxpose.xlu0.c.b16.start [1/8] %v843, 128
          %999 = vxpose.xlu0.c.b16.cont [2/8] %v844, 128
          %1000 = vxpose.xlu0.c.b16.cont [3/8] %v845, 128
          %1001 = vxpose.xlu0.c.b16.cont [4/8] %v846, 128
          %1002 = vxpose.xlu0.c.b16.cont [5/8] %v847, 128
          %1003 = vxpose.xlu0.c.b16.cont [6/8] %v848, 128
          %1004 = vxpose.xlu0.c.b16.cont [7/8] %v849, 128
          %1005 = vxpose.xlu0.c.b16.end [8/8] %v850, 128
          %v1006 = vpop.trf.xlu0
          %v1007 = vpop.trf.xlu0
          %v1008 = vpop.trf.xlu0
          %v1009 = vpop.trf.xlu0
          %v1010 = vpop.trf.xlu0
          %v1011 = vpop.trf.xlu0
          %v1012 = vpop.trf.xlu0
          %v1013 = vpop.trf.xlu0
          %v1030 = vunpack.c.l.b16 %v851
          %v1031 = vunpack.c.h.b16 %v851
          %v1032 = vunpack.c.l.b16 %v852
          %v1033 = vunpack.c.h.b16 %v852
          %v1034 = vunpack.c.l.b16 %v853
          %v1035 = vunpack.c.h.b16 %v853
          %v1036 = vunpack.c.l.b16 %v854
          %v1037 = vunpack.c.h.b16 %v854
          %v1038 = vunpack.c.l.b16 %v855
          %v1039 = vunpack.c.h.b16 %v855
          %v1040 = vunpack.c.l.b16 %v856
          %v1041 = vunpack.c.h.b16 %v856
          %v1042 = vunpack.c.l.b16 %v857
          %v1043 = vunpack.c.h.b16 %v857
          %v1044 = vunpack.c.l.b16 %v858
          %v1045 = vunpack.c.h.b16 %v858
          %v1046 = vunpack.c.l.b16 %v859
          %v1047 = vunpack.c.h.b16 %v859
          %v1048 = vunpack.c.l.b16 %v860
          %v1049 = vunpack.c.h.b16 %v860
          %v1050 = vunpack.c.l.b16 %v861
          %v1051 = vunpack.c.h.b16 %v861
          %v1052 = vunpack.c.l.b16 %v862
          %v1053 = vunpack.c.h.b16 %v862
          %v1054 = vunpack.c.l.b16 %v863
          %v1055 = vunpack.c.h.b16 %v863
          %v1056 = vunpack.c.l.b16 %v864
          %v1057 = vunpack.c.h.b16 %v864
          %v1058 = vunpack.c.l.b16 %v865
          %v1059 = vunpack.c.h.b16 %v865
          %v1060 = vunpack.c.l.b16 %v866
          %v1061 = vunpack.c.h.b16 %v866
          %v1062 = vpack.c.b16 %v1032, %v1030
          %v1063 = vpack.c.b16 %v1033, %v1031
          %v1064 = vpack.c.b16 %v1036, %v1034
          %v1065 = vpack.c.b16 %v1037, %v1035
          %v1066 = vpack.c.b16 %v1040, %v1038
          %v1067 = vpack.c.b16 %v1041, %v1039
          %v1068 = vpack.c.b16 %v1044, %v1042
          %v1069 = vpack.c.b16 %v1045, %v1043
          %v1070 = vpack.c.b16 %v1048, %v1046
          %v1071 = vpack.c.b16 %v1049, %v1047
          %v1072 = vpack.c.b16 %v1052, %v1050
          %v1073 = vpack.c.b16 %v1053, %v1051
          %v1074 = vpack.c.b16 %v1056, %v1054
          %v1075 = vpack.c.b16 %v1057, %v1055
          %v1076 = vpack.c.b16 %v1060, %v1058
          %v1077 = vpack.c.b16 %v1061, %v1059
          %1094 = vmatprep.subr.bf16.mxu0 %v1063
          %1095 = vmatpush1.bf16.msra.mxu0 %v1062
          %1096 = vmatprep.subr.bf16.mxu0 %v1065
          %1097 = vmatpush1.bf16.msra.mxu0 %v1064
          %1098 = vmatprep.subr.bf16.mxu0 %v1067
          %1099 = vmatpush1.bf16.msra.mxu0 %v1066
          %1100 = vmatprep.subr.bf16.mxu0 %v1069
          %1101 = vmatpush1.bf16.msra.mxu0 %v1068
          %1102 = vmatprep.subr.bf16.mxu0 %v1071
          %1103 = vmatpush1.bf16.msra.mxu0 %v1070
          %1104 = vmatprep.subr.bf16.mxu0 %v1073
          %1105 = vmatpush1.bf16.msra.mxu0 %v1072
          %1106 = vmatprep.subr.bf16.mxu0 %v1075
          %1107 = vmatpush1.bf16.msra.mxu0 %v1074
          %1108 = vmatprep.subr.bf16.mxu0 %v1077
          %1109 = vmatpush1.bf16.msra.mxu0 %v1076
          %1110 = vmatprep.subr.bf16.mxu0 0
          %1111 = vmatpush1.bf16.msra.mxu0 0
          %1112 = vmatprep.subr.bf16.mxu0 0
          %1113 = vmatpush1.bf16.msra.mxu0 0
          %1114 = vmatprep.subr.bf16.mxu0 0
          %1115 = vmatpush1.bf16.msra.mxu0 0
          %1116 = vmatprep.subr.bf16.mxu0 0
          %1117 = vmatpush1.bf16.msra.mxu0 0
          %1118 = vmatprep.subr.bf16.mxu0 0
          %1119 = vmatpush1.bf16.msra.mxu0 0
          %1120 = vmatprep.subr.bf16.mxu0 0
          %1121 = vmatpush1.bf16.msra.mxu0 0
          %1122 = vmatprep.subr.bf16.mxu0 0
          %1123 = vmatpush1.bf16.msra.mxu0 0
          %1124 = vmatprep.subr.bf16.mxu0 0
          %1125 = vmatpush1.bf16.msra.mxu0 0
          %1126 = vmatprep.mubr.bf16.mxu0 0
          %1127 = vmatmul.mubr.bf16.gmra.mrb[0].mxu0 %v1006
          %v1128 = vpop.f32.mrb[0].mxu0
          %v1129 = vadd.f32 %v988, %v1128
          %v1130 = vpop.f32.mrb[0].mxu0
          %v1131 = vadd.f32 %v990, %v1130
          %v1132 = vpop.f32.mrb[0].mxu0
          %v1133 = vadd.f32 %v994, %v1132
          %v1134 = vpop.f32.mrb[0].mxu0
          %v1135 = vadd.f32 %v996, %v1134
          %1136 = vdwg.mxu0
          %v1137 = vadd.f32 %v1129, %v1131
          %1138 = vadd.xlane.f32.xlu0 %v1137
          %v1139 = vpop.xlane.xlu0 %1138
          %v1140 = vadd.f32 %v1133, %v1135
          %1141 = vadd.xlane.f32.xlu0 %v1140
          %v1142 = vpop.xlane.xlu0 %1141
          %v1143 = vrcp.pop 256.0
          %v1144 = vmul.f32 %v1139, %v1143
          %v1145 = vmul.f32 %v1142, %v1143
          %v1146 = vsub.f32 %v1129, %v1144
          %v1147 = vsub.f32 %v1131, %v1144
          %v1148 = vsub.f32 %v1133, %v1145
          %v1149 = vsub.f32 %v1135, %v1145
          %v1150 = vmul.f32 %v1146, %v1146
          %v1151 = vmul.f32 %v1147, %v1147
          %v1152 = vmul.f32 %v1148, %v1148
          %v1153 = vmul.f32 %v1149, %v1149
          %v1154 = vadd.f32 %v1150, %v1151
          %1155 = vadd.xlane.f32.xlu0 %v1154
          %v1156 = vpop.xlane.xlu0 %1155
          %v1157 = vadd.f32 %v1152, %v1153
          %1158 = vadd.xlane.f32.xlu0 %v1157
          %v1159 = vpop.xlane.xlu0 %1158
          %v1160 = vmul.f32 %v1156, %v1143
          %v1161 = vmul.f32 %v1159, %v1143
          %v1162 = vadd.f32 %v1160, 1e-05
          %v1163 = vadd.f32 %v1161, 1e-05
          %v1164 = vrsqrt.pop %v1162
          %v1165 = vrsqrt.pop %v1163
          %v1166 = vmul.f32 %v1146, %v1164
          %v1167 = vmul.f32 %v1147, %v1164
          %v1168 = vmul.f32 %v1148, %v1165
          %v1169 = vmul.f32 %v1149, %v1165
          %v1170 = vld [vmem:[%s6] sm:$0x3]
          %v1172 = vlaneseq
          %v1173 = vshrl.u32 %v1172, 7
          %v1174 = vsub.s32 0, %v1173
          %v1175 = vrot.slane %v1170, %v1174
          %v1176 = vlaneseq
          %v1177 = vshrl.u32 %v1176, 7
          %v1178 = vsub.s32 1, %v1177
          %v1179 = vrot.slane %v1170, %v1178
          %v1182 = vmul.f32 %v1166, %v1175
          %v1183 = vmul.f32 %v1167, %v1179
          %v1184 = vmul.f32 %v1168, %v1175
          %v1185 = vmul.f32 %v1169, %v1179
          %v1186 = vld [vmem:[%s7] sm:$0x3]
          %v1188 = vlaneseq
          %v1189 = vshrl.u32 %v1188, 7
          %v1190 = vsub.s32 0, %v1189
          %v1191 = vrot.slane %v1186, %v1190
          %v1192 = vlaneseq
          %v1193 = vshrl.u32 %v1192, 7
          %v1194 = vsub.s32 1, %v1193
          %v1195 = vrot.slane %v1186, %v1194
          %v1198 = vadd.f32 %v1182, %v1191
          %v1199 = vadd.f32 %v1183, %v1195
          %v1200 = vadd.f32 %v1184, %v1191
          %v1201 = vadd.f32 %v1185, %v1195
          %1202 = vst [vmem:[%s360] sm:$0xff] %v1198
          %1203 = vst [vmem:[%s360 + $0x8] sm:$0xff] %v1199
          %1204 = vst [vmem:[%s360 + $0x10] sm:$0xff] %v1200
          %1205 = vst [vmem:[%s360 + $0x18] sm:$0xff] %v1201
        $region60: #{hecto_forward.5} parent=51 // pred_fallthru
          _
        %s1206 = sand.u32 %s231, 1
        %s1207 = scalar_lea.sflag [#allocation5], %s1206
        %s1208 = sand.u32 %s231, 1
        %s1209 = smul.addr %s1208, 32
        %s1210 = scalar_lea.vmem [#allocation4], %s1209
        // Predicated region
        $region61: #{hecto_forward.5} parent=51 // pred_check
          %p1211 = pneg %p241
        $region62: #{hecto_forward.5} parent=51 // pred_check_branch
          %1213 = sbr.rel (%p1211) target = $region64
        $region63: #{hecto_forward.5} parent=51 // pred_region
          %s1215 = ssub.s32 512, 512
          %1216 = vsyncadd %s1207, %s1215
          %s1217 = smul.addr %s26, 4
          %s1218 = smul.addr %s1217, 128
          %s1219 = scalar_lea.hbm %s8, %s1218
          %s1220 = sshll.u32 %s1210, 4
          %s1221 = int_to_ptr.vmem [resolvable:$true] %s1220
          %1226 = dma.vmem_to_hbm [thread:$0]  %s1221, 512, %s1219, %s1207, 256, 256, 16
        $region64: #{hecto_forward.5} parent=51 // pred_fallthru
          _
      $region52: #{hecto_forward.5} parent=5 // pred_fallthru
        _
      %p1227 = scmp.le.s32.totalorder 2, %s17
      // Predicated region
      $region65: #{hecto_forward.5} parent=5 // pred_check
        %p1228 = pneg %p1227
      $region66: #{hecto_forward.5} parent=5 // pred_check_branch
        %1230 = sbr.rel (%p1228) target = $region68
      $region67: #{hecto_forward.5} parent=5 // pred_region
        %s1231 = ssub.s32 %s17, 2
        // Predicated region
        $region69: #{hecto_forward.5} parent=67 // pred_check
          %p1232 = pneg %p247
        $region70: #{hecto_forward.5} parent=67 // pred_check_branch
          %1234 = sbr.rel (%p1232) target = $region72
        $region71: #{hecto_forward.5} parent=67 // pred_region
          %s1235 = sand.u32 %s232, 1
          %s1236 = scalar_lea.sflag [#allocation5], %s1235
          %s1237 = sand.u32 %s232, 1
          %s1238 = smul.addr %s1237, 32
          %s1239 = scalar_lea.vmem [#allocation4], %s1238
          %1240 = dma.done %s1236, 512
        $region72: #{hecto_forward.5} parent=67 // pred_fallthru
          _
      $region68: #{hecto_forward.5} parent=5 // pred_fallthru
        _
    $region6: #{hecto_forward.5} parent=1 // loop_footer
      %s21 = sadd.s32 1, %s17
    $region7: #{hecto_forward.5} parent=1 // loop_footer_branch
      %16 = sbr.rel target = $region3
    $region8: #{hecto_forward.5} parent=1 // loop_exit
      _
    %1241 = vsyncpa [#allocation5], 1
    %s1242 = scalar_lea.sflag [#allocation5], 1
    %1243 = vsyncpa %s1242, 1

// kernel: hecto_forward.3
$region0: #{hecto_forward.3}
  #allocation0 [shape = 'u32[]', space=smem, size = 0x4, offset = 0x4, fixed_abs, tag = 'smem constant byte address 0x4 - core index']
  #allocation1 [shape = 'u32[144,128]{1,0:T(1,128)}', space=vmem, size = 0x12000, scoped, tag = 'internal scratch']
  %s0 = inlined_call_operand.vmem [shape: bf16[16,128], index: 0, kind: input, shape index: {}]
  %s1 = inlined_call_operand.vmem [shape: f32[16,1], index: 1, kind: input, shape index: {}]
  %s2 = inlined_call_operand.vmem [shape: f32[16,1], index: 2, kind: input, shape index: {}]
  %s3 = inlined_call_operand.vmem [shape: bf16[128,256], index: 3, kind: input, shape index: {}]
  %s4 = inlined_call_operand.vmem [shape: f32[1,256], index: 4, kind: input, shape index: {}]
  %s5 = inlined_call_operand.vmem [shape: f32[1,256], index: 5, kind: input, shape index: {}]
  %s6 = inlined_call_operand.vmem [shape: f32[1,256], index: 6, kind: input, shape index: {}]
  %s7 = inlined_call_operand.vmem [shape: bf16[256,256], index: 7, kind: input, shape index: {}]
  %s8 = inlined_call_operand.vmem [shape: f32[1,256], index: 8, kind: input, shape index: {}]
  %s9 = inlined_call_operand.vmem [shape: bf16[256,384], index: 9, kind: input, shape index: {}]
  %s10 = inlined_call_operand.vmem [shape: f32[1,384], index: 10, kind: input, shape index: {}]
  %s11 = inlined_call_operand.vmem [shape: bf16[256,256], index: 11, kind: input, shape index: {}]
  %s12 = inlined_call_operand.vmem [shape: f32[1,256], index: 12, kind: input, shape index: {}]
  %s13 = inlined_call_operand.hbm [shape: f32[2,384], index: 13, kind: output, shape index: {0}]
  %s14 = inlined_call_operand.hbm [shape: f32[2,256], index: 14, kind: output, shape index: {1}]
  %15 = xla_tuple %s13, %s14
  %s16 = sld [smem:[#allocation0]]
  $region70: #{hecto_forward.3} parent=0
    _
  %s18 = ssub.s32 1, %s16
  %s19 = scalar_select 0, %s18, %s16
  $region1: #{hecto_forward.3} parent=0
    #allocation2 [shape = 'u8[3072]{0}', space=vmem, size = 0xc00, scoped, tag = 'output window, operand 0, single buffered']
    #allocation3 [shape = 's32[1]{0}', space=sflag, size = 0x4, scoped, tag = 'scoped memory for hecto_forward.3']
    #allocation4 [shape = 'u8[2048]{0}', space=vmem, size = 0x800, scoped, tag = 'output window, operand 1, single buffered']
    #allocation5 [shape = 's32[1]{0}', space=sflag, size = 0x4, scoped, tag = 'scoped memory for hecto_forward.3']
    %20 = vsyncpa [#allocation3], 0
    %21 = vsyncpa [#allocation5], 0
    // Predicated region
    $region2: #{hecto_forward.3} parent=1 // pred_check
      _
    $region3: #{hecto_forward.3} parent=1 // pred_check_branch
      %23 = sbr.rel (0) target = $region5
    $region4: #{hecto_forward.3} parent=1 // pred_region
      _
    $region5: #{hecto_forward.3} parent=1 // pred_fallthru
      _
    // Predicated region
    $region6: #{hecto_forward.3} parent=1 // pred_check
      _
    $region7: #{hecto_forward.3} parent=1 // pred_check_branch
      %25 = sbr.rel (0) target = $region9
    $region8: #{hecto_forward.3} parent=1 // pred_region
      _
    $region9: #{hecto_forward.3} parent=1 // pred_fallthru
      _
    // Predicated region
    $region10: #{hecto_forward.3} parent=1 // pred_check
      _
    $region11: #{hecto_forward.3} parent=1 // pred_check_branch
      %27 = sbr.rel (0) target = $region13
    $region12: #{hecto_forward.3} parent=1 // pred_region
      _
    $region13: #{hecto_forward.3} parent=1 // pred_fallthru
      _
    // Predicated region
    $region14: #{hecto_forward.3} parent=1 // pred_check
      _
    $region15: #{hecto_forward.3} parent=1 // pred_check_branch
      %29 = sbr.rel (0) target = $region17
    $region16: #{hecto_forward.3} parent=1 // pred_region
      _
    $region17: #{hecto_forward.3} parent=1 // pred_fallthru
      _
    // Predicated region
    $region18: #{hecto_forward.3} parent=1 // pred_check
      _
    $region19: #{hecto_forward.3} parent=1 // pred_check_branch
      %31 = sbr.rel (0) target = $region21
    $region20: #{hecto_forward.3} parent=1 // pred_region
      _
    $region21: #{hecto_forward.3} parent=1 // pred_fallthru
      _
    // Predicated region
    $region22: #{hecto_forward.3} parent=1 // pred_check
      _
    $region23: #{hecto_forward.3} parent=1 // pred_check_branch
      %33 = sbr.rel (0) target = $region25
    $region24: #{hecto_forward.3} parent=1 // pred_region
      _
    $region25: #{hecto_forward.3} parent=1 // pred_fallthru
      _
    // Predicated region
    $region26: #{hecto_forward.3} parent=1 // pred_check
      _
    $region27: #{hecto_forward.3} parent=1 // pred_check_branch
      %35 = sbr.rel (0) target = $region29
    $region28: #{hecto_forward.3} parent=1 // pred_region
      _
    $region29: #{hecto_forward.3} parent=1 // pred_fallthru
      _
    // Predicated region
    $region30: #{hecto_forward.3} parent=1 // pred_check
      _
    $region31: #{hecto_forward.3} parent=1 // pred_check_branch
      %37 = sbr.rel (0) target = $region33
    $region32: #{hecto_forward.3} parent=1 // pred_region
      _
    $region33: #{hecto_forward.3} parent=1 // pred_fallthru
      _
    // Predicated region
    $region34: #{hecto_forward.3} parent=1 // pred_check
      _
    $region35: #{hecto_forward.3} parent=1 // pred_check_branch
      %39 = sbr.rel (0) target = $region37
    $region36: #{hecto_forward.3} parent=1 // pred_region
      _
    $region37: #{hecto_forward.3} parent=1 // pred_fallthru
      _
    // Predicated region
    $region38: #{hecto_forward.3} parent=1 // pred_check
      _
    $region39: #{hecto_forward.3} parent=1 // pred_check_branch
      %41 = sbr.rel (0) target = $region41
    $region40: #{hecto_forward.3} parent=1 // pred_region
      _
    $region41: #{hecto_forward.3} parent=1 // pred_fallthru
      _
    // Predicated region
    $region42: #{hecto_forward.3} parent=1 // pred_check
      _
    $region43: #{hecto_forward.3} parent=1 // pred_check_branch
      %43 = sbr.rel (0) target = $region45
    $region44: #{hecto_forward.3} parent=1 // pred_region
      _
    $region45: #{hecto_forward.3} parent=1 // pred_fallthru
      _
    // Predicated region
    $region46: #{hecto_forward.3} parent=1 // pred_check
      _
    $region47: #{hecto_forward.3} parent=1 // pred_check_branch
      %45 = sbr.rel (0) target = $region49
    $region48: #{hecto_forward.3} parent=1 // pred_region
      _
    $region49: #{hecto_forward.3} parent=1 // pred_fallthru
      _
    // Predicated region
    $region50: #{hecto_forward.3} parent=1 // pred_check
      _
    $region51: #{hecto_forward.3} parent=1 // pred_check_branch
      %47 = sbr.rel (0) target = $region53
    $region52: #{hecto_forward.3} parent=1 // pred_region
      _
    $region53: #{hecto_forward.3} parent=1 // pred_fallthru
      _
    %v49 = vld [vmem:[%s0] sm:$0xf]
    %v50 = vld [vmem:[%s0 + $0x4] sm:$0xf]
    %v51 = vld [vmem:[%s3] sm:$0xff]
    %v52 = vld [vmem:[%s3 + $0x8] sm:$0xff]
    %v53 = vld [vmem:[%s3 + $0x10] sm:$0xff]
    %v54 = vld [vmem:[%s3 + $0x18] sm:$0xff]
    %v55 = vld [vmem:[%s3 + $0x20] sm:$0xff]
    %v56 = vld [vmem:[%s3 + $0x28] sm:$0xff]
    %v57 = vld [vmem:[%s3 + $0x30] sm:$0xff]
    %v58 = vld [vmem:[%s3 + $0x38] sm:$0xff]
    %v59 = vld [vmem:[%s3 + $0x40] sm:$0xff]
    %v60 = vld [vmem:[%s3 + $0x48] sm:$0xff]
    %v61 = vld [vmem:[%s3 + $0x50] sm:$0xff]
    %v62 = vld [vmem:[%s3 + $0x58] sm:$0xff]
    %v63 = vld [vmem:[%s3 + $0x60] sm:$0xff]
    %v64 = vld [vmem:[%s3 + $0x68] sm:$0xff]
    %v65 = vld [vmem:[%s3 + $0x70] sm:$0xff]
    %v66 = vld [vmem:[%s3 + $0x78] sm:$0xff]
    %v67 = vld [vmem:[%s4] sm:$0x3]
    %v69 = vlaneseq
    %v70 = vshrl.u32 %v69, 7
    %v71 = vsub.s32 0, %v70
    %v72 = vrot.slane %v67, %v71
    %v73 = vlaneseq
    %v74 = vshrl.u32 %v73, 7
    %v75 = vsub.s32 1, %v74
    %v76 = vrot.slane %v67, %v75
    %v81 = vunpack.c.l.b16 %v49
    %v82 = vunpack.c.l.b16 %v50
    %v83 = vpack.c.b16 %v82, %v81
    %v101 = vunpack.c.l.b16 %v51
    %v102 = vunpack.c.h.b16 %v51
    %v103 = vunpack.c.l.b16 %v52
    %v104 = vunpack.c.h.b16 %v52
    %v105 = vunpack.c.l.b16 %v53
    %v106 = vunpack.c.h.b16 %v53
    %v107 = vunpack.c.l.b16 %v54
    %v108 = vunpack.c.h.b16 %v54
    %v109 = vunpack.c.l.b16 %v55
    %v110 = vunpack.c.h.b16 %v55
    %v111 = vunpack.c.l.b16 %v56
    %v112 = vunpack.c.h.b16 %v56
    %v113 = vunpack.c.l.b16 %v57
    %v114 = vunpack.c.h.b16 %v57
    %v115 = vunpack.c.l.b16 %v58
    %v116 = vunpack.c.h.b16 %v58
    %v117 = vunpack.c.l.b16 %v59
    %v118 = vunpack.c.h.b16 %v59
    %v119 = vunpack.c.l.b16 %v60
    %v120 = vunpack.c.h.b16 %v60
    %v121 = vunpack.c.l.b16 %v61
    %v122 = vunpack.c.h.b16 %v61
    %v123 = vunpack.c.l.b16 %v62
    %v124 = vunpack.c.h.b16 %v62
    %v125 = vunpack.c.l.b16 %v63
    %v126 = vunpack.c.h.b16 %v63
    %v127 = vunpack.c.l.b16 %v64
    %v128 = vunpack.c.h.b16 %v64
    %v129 = vunpack.c.l.b16 %v65
    %v130 = vunpack.c.h.b16 %v65
    %v131 = vunpack.c.l.b16 %v66
    %v132 = vunpack.c.h.b16 %v66
    %v133 = vpack.c.b16 %v103, %v101
    %v134 = vpack.c.b16 %v104, %v102
    %v135 = vpack.c.b16 %v107, %v105
    %v136 = vpack.c.b16 %v108, %v106
    %v137 = vpack.c.b16 %v111, %v109
    %v138 = vpack.c.b16 %v112, %v110
    %v139 = vpack.c.b16 %v115, %v113
    %v140 = vpack.c.b16 %v116, %v114
    %v141 = vpack.c.b16 %v119, %v117
    %v142 = vpack.c.b16 %v120, %v118
    %v143 = vpack.c.b16 %v123, %v121
    %v144 = vpack.c.b16 %v124, %v122
    %v145 = vpack.c.b16 %v127, %v125
    %v146 = vpack.c.b16 %v128, %v126
    %v147 = vpack.c.b16 %v131, %v129
    %v148 = vpack.c.b16 %v132, %v130
    %165 = vmatprep.subr.bf16.mxu0 %v134
    %166 = vmatpush1.bf16.msra.mxu0 %v133
    %167 = vmatprep.subr.bf16.mxu0 %v136
    %168 = vmatpush1.bf16.msra.mxu0 %v135
    %169 = vmatprep.subr.bf16.mxu0 %v138
    %170 = vmatpush1.bf16.msra.mxu0 %v137
    %171 = vmatprep.subr.bf16.mxu0 %v140
    %172 = vmatpush1.bf16.msra.mxu0 %v139
    %173 = vmatprep.subr.bf16.mxu0 %v142
    %174 = vmatpush1.bf16.msra.mxu0 %v141
    %175 = vmatprep.subr.bf16.mxu0 %v144
    %176 = vmatpush1.bf16.msra.mxu0 %v143
    %177 = vmatprep.subr.bf16.mxu0 %v146
    %178 = vmatpush1.bf16.msra.mxu0 %v145
    %179 = vmatprep.subr.bf16.mxu0 %v148
    %180 = vmatpush1.bf16.msra.mxu0 %v147
    %181 = vmatprep.subr.bf16.mxu0 0
    %182 = vmatpush1.bf16.msra.mxu0 0
    %183 = vmatprep.subr.bf16.mxu0 0
    %184 = vmatpush1.bf16.msra.mxu0 0
    %185 = vmatprep.subr.bf16.mxu0 0
    %186 = vmatpush1.bf16.msra.mxu0 0
    %187 = vmatprep.subr.bf16.mxu0 0
    %188 = vmatpush1.bf16.msra.mxu0 0
    %189 = vmatprep.subr.bf16.mxu0 0
    %190 = vmatpush1.bf16.msra.mxu0 0
    %191 = vmatprep.subr.bf16.mxu0 0
    %192 = vmatpush1.bf16.msra.mxu0 0
    %193 = vmatprep.subr.bf16.mxu0 0
    %194 = vmatpush1.bf16.msra.mxu0 0
    %195 = vmatprep.subr.bf16.mxu0 0
    %196 = vmatpush1.bf16.msra.mxu0 0
    %197 = vmatprep.mubr.bf16.mxu0 0
    %198 = vmatmul.mubr.bf16.gmra.mrb[0].mxu0 %v83
    %v199 = vpop.f32.mrb[0].mxu0
    %v200 = vadd.f32 %v72, %v199
    %v201 = vpop.f32.mrb[0].mxu0
    %v202 = vadd.f32 %v76, %v201
    %v203 = vpop.f32.mrb[0].mxu0
    %v204 = vadd.f32 %v72, %v203
    %v205 = vpop.f32.mrb[0].mxu0
    %v206 = vadd.f32 %v76, %v205
    %207 = vdwg.mxu0
    %v208 = vand.u32 2147483647, %v200
    %v209 = vand.u32 2147483647, %v202
    %v210 = vand.u32 2147483647, %v204
    %v211 = vand.u32 2147483647, %v206
    %v212 = vadd.f32 %v208, %v209
    %213 = vadd.xlane.f32.xlu0 %v212
    %v214 = vpop.xlane.xlu0 %213
    %v215 = vadd.f32 %v210, %v211
    %216 = vadd.xlane.f32.xlu0 %v215
    %v217 = vpop.xlane.xlu0 %216
    %vm218 = vcmp.gt.f32.partialorder %v214, 0.0
    %vm219 = vcmp.gt.f32.partialorder %v217, 0.0
    %v220 = vsel %vm218, 1, 0
    %v221 = vsel %vm219, 1, 0
    %v222 = vcvt.s32.f32 %v220
    %v223 = vcvt.s32.f32 %v221
    %v224 = vadd.f32 %v200, %v202
    %225 = vadd.xlane.f32.xlu0 %v224
    %v226 = vpop.xlane.xlu0 %225
    %v227 = vadd.f32 %v204, %v206
    %228 = vadd.xlane.f32.xlu0 %v227
    %v229 = vpop.xlane.xlu0 %228
    %v230 = vrcp.pop 256.0
    %v231 = vmul.f32 %v226, %v230
    %v232 = vmul.f32 %v229, %v230
    %v233 = vsub.f32 %v200, %v231
    %v234 = vsub.f32 %v202, %v231
    %v235 = vsub.f32 %v204, %v232
    %v236 = vsub.f32 %v206, %v232
    %v237 = vmul.f32 %v233, %v233
    %v238 = vmul.f32 %v234, %v234
    %v239 = vmul.f32 %v235, %v235
    %v240 = vmul.f32 %v236, %v236
    %v241 = vadd.f32 %v237, %v238
    %242 = vadd.xlane.f32.xlu0 %v241
    %v243 = vpop.xlane.xlu0 %242
    %v244 = vadd.f32 %v239, %v240
    %245 = vadd.xlane.f32.xlu0 %v244
    %v246 = vpop.xlane.xlu0 %245
    %v247 = vmul.f32 %v243, %v230
    %v248 = vmul.f32 %v246, %v230
    %v249 = vadd.f32 %v247, 1e-05
    %v250 = vadd.f32 %v248, 1e-05
    %v251 = vrsqrt.pop %v249
    %v252 = vrsqrt.pop %v250
    %v253 = vmul.f32 %v233, %v251
    %v254 = vmul.f32 %v234, %v251
    %v255 = vmul.f32 %v235, %v252
    %v256 = vmul.f32 %v236, %v252
    %v257 = vld [vmem:[%s5] sm:$0x3]
    %v259 = vlaneseq
    %v260 = vshrl.u32 %v259, 7
    %v261 = vsub.s32 0, %v260
    %v262 = vrot.slane %v257, %v261
    %v263 = vlaneseq
    %v264 = vshrl.u32 %v263, 7
    %v265 = vsub.s32 1, %v264
    %v266 = vrot.slane %v257, %v265
    %v269 = vmul.f32 %v253, %v262
    %v270 = vmul.f32 %v254, %v266
    %v271 = vmul.f32 %v255, %v262
    %v272 = vmul.f32 %v256, %v266
    %v273 = vld [vmem:[%s6] sm:$0x3]
    %v275 = vlaneseq
    %v276 = vshrl.u32 %v275, 7
    %v277 = vsub.s32 0, %v276
    %v278 = vrot.slane %v273, %v277
    %v279 = vlaneseq
    %v280 = vshrl.u32 %v279, 7
    %v281 = vsub.s32 1, %v280
    %v282 = vrot.slane %v273, %v281
    %v285 = vadd.f32 %v269, %v278
    %v286 = vadd.f32 %v270, %v282
    %v287 = vadd.f32 %v271, %v278
    %v288 = vadd.f32 %v272, %v282
    %v289 = vld [vmem:[%s1] sm:$0xff]
    %v290 = vld [vmem:[%s1 + $0x8] sm:$0xff]
    %v291 = vmul.f32 %v289, %v222
    %v292 = vmul.f32 %v290, %v223
    %294 = vset.pattern.permute.xlu0 0
    %295 = vperm.xlu0 %294, %v291
    %v296 = vpop.permute.xlu0 %295
    %299 = vset.pattern.permute.xlu0 0
    %300 = vperm.xlu0 %299, %v292
    %v301 = vpop.permute.xlu0 %300
    %v303 = vmul.f32 %v285, %v296
    %v304 = vmul.f32 %v286, %v296
    %v305 = vmul.f32 %v287, %v301
    %v306 = vmul.f32 %v288, %v301
    %v307 = vrot.slane %v303, 4
    %v308 = vadd.f32 %v303, %v307
    %v309 = vrot.slane %v308, 2
    %v310 = vadd.f32 %v308, %v309
    %v311 = vrot.slane %v310, 1
    %v312 = vadd.f32 %v310, %v311
    %v313 = vrot.slane %v304, 4
    %v314 = vadd.f32 %v304, %v313
    %v315 = vrot.slane %v314, 2
    %v316 = vadd.f32 %v314, %v315
    %v317 = vrot.slane %v316, 1
    %v318 = vadd.f32 %v316, %v317
    %v319 = vrot.slane %v305, 4
    %v320 = vadd.f32 %v305, %v319
    %v321 = vrot.slane %v320, 2
    %v322 = vadd.f32 %v320, %v321
    %v323 = vrot.slane %v322, 1
    %v324 = vadd.f32 %v322, %v323
    %v325 = vrot.slane %v306, 4
    %v326 = vadd.f32 %v306, %v325
    %v327 = vrot.slane %v326, 2
    %v328 = vadd.f32 %v326, %v327
    %v329 = vrot.slane %v328, 1
    %v330 = vadd.f32 %v328, %v329
    %vm331 = vcmask 7168
    %v332 = vsel %vm331, %v291, 0.0
    %v333 = vrot.slane %v332, 4
    %v334 = vadd.f32 %v332, %v333
    %v335 = vrot.slane %v334, 2
    %v336 = vadd.f32 %v334, %v335
    %v337 = vrot.slane %v336, 1
    %v338 = vadd.f32 %v336, %v337
    %v339 = vsel %vm331, %v292, 0.0
    %v340 = vrot.slane %v339, 4
    %v341 = vadd.f32 %v339, %v340
    %v342 = vrot.slane %v341, 2
    %v343 = vadd.f32 %v341, %v342
    %v344 = vrot.slane %v343, 1
    %v345 = vadd.f32 %v343, %v344
    %v346 = vld [vmem:[%s2] sm:$0xff]
    %v347 = vld [vmem:[%s2 + $0x8] sm:$0xff]
    %v348 = vmul.f32 %v222, %v346
    %v349 = vmul.f32 %v223, %v347
    %351 = vset.pattern.permute.xlu0 0
    %352 = vperm.xlu0 %351, %v348
    %v353 = vpop.permute.xlu0 %352
    %356 = vset.pattern.permute.xlu0 0
    %357 = vperm.xlu0 %356, %v349
    %v358 = vpop.permute.xlu0 %357
    %v360 = vmul.f32 %v285, %v353
    %v361 = vmul.f32 %v286, %v353
    %v362 = vmul.f32 %v287, %v358
    %v363 = vmul.f32 %v288, %v358
    %v364 = vadd.f32 %v360, %v362
    %v365 = vrot.slane %v364, 4
    %v366 = vadd.f32 %v364, %v365
    %v367 = vrot.slane %v366, 2
    %v368 = vadd.f32 %v366, %v367
    %v369 = vrot.slane %v368, 1
    %v370 = vadd.f32 %v368, %v369
    %v371 = vadd.f32 %v361, %v363
    %v372 = vrot.slane %v371, 4
    %v373 = vadd.f32 %v371, %v372
    %v374 = vrot.slane %v373, 2
    %v375 = vadd.f32 %v373, %v374
    %v376 = vrot.slane %v375, 1
    %v377 = vadd.f32 %v375, %v376
    %v378 = vsel %vm331, %v348, 0.0
    %v379 = vsel %vm331, %v349, 0.0
    %v380 = vadd.f32 %v378, %v379
    %v381 = vrot.slane %v380, 4
    %v382 = vadd.f32 %v380, %v381
    %v383 = vrot.slane %v382, 2
    %v384 = vadd.f32 %v382, %v383
    %v385 = vrot.slane %v384, 1
    %v386 = vadd.f32 %v384, %v385
    %v387 = vadd.f32 %v338, %v386
    %v388 = vadd.f32 %v345, %v386
    %v389 = vmax.f32 %v387, 1e-06
    %v390 = vmax.f32 %v388, 1e-06
    %v391 = vrcp.pop %v389
    %v392 = vrcp.pop %v390
    %v393 = vadd.f32 %v312, %v370
    %v394 = vadd.f32 %v318, %v377
    %v395 = vadd.f32 %v324, %v370
    %v396 = vadd.f32 %v330, %v377
    %398 = vset.pattern.permute.xlu0 0
    %399 = vperm.xlu0 %398, %v391
    %v400 = vpop.permute.xlu0 %399
    %403 = vset.pattern.permute.xlu0 0
    %404 = vperm.xlu0 %403, %v392
    %v405 = vpop.permute.xlu0 %404
    %v407 = vmul.f32 %v393, %v400
    %v408 = vmul.f32 %v394, %v400
    %v409 = vmul.f32 %v395, %v405
    %v410 = vmul.f32 %v396, %v405
    %v411 = vlaneseq
    %v412 = vshrl.u32 %v411, 7
    %v413 = vsub.s32 0, %v412
    %v414 = vrot.slane %v285, %v413
    %v415 = vlaneseq
    %v416 = vshrl.u32 %v415, 7
    %v417 = vsub.s32 0, %v416
    %v418 = vrot.slane %v286, %v417
    %v423 = vrot.slane %v409, 7
    %vm424 = vcmask 1041409
    %v425 = vsel %vm424, %v423, %v407
    %v426 = vrot.slane %v410, 7
    %v427 = vsel %vm424, %v426, %v408
    %v430 = vadd.f32 %v414, %v425
    %v431 = vadd.f32 %v418, %v427
    %v432 = vpack.c.bf16 %v430, %v430
    %v433 = vpack.c.bf16 %v431, %v431
    %v434 = vld [vmem:[%s7] sm:$0xff]
    %v435 = vld [vmem:[%s7 + $0x8] sm:$0xff]
    %v436 = vld [vmem:[%s7 + $0x10] sm:$0xff]
    %v437 = vld [vmem:[%s7 + $0x18] sm:$0xff]
    %v438 = vld [vmem:[%s7 + $0x20] sm:$0xff]
    %v439 = vld [vmem:[%s7 + $0x28] sm:$0xff]
    %v440 = vld [vmem:[%s7 + $0x30] sm:$0xff]
    %v441 = vld [vmem:[%s7 + $0x38] sm:$0xff]
    %v442 = vld [vmem:[%s7 + $0x40] sm:$0xff]
    %v443 = vld [vmem:[%s7 + $0x48] sm:$0xff]
    %v444 = vld [vmem:[%s7 + $0x50] sm:$0xff]
    %v445 = vld [vmem:[%s7 + $0x58] sm:$0xff]
    %v446 = vld [vmem:[%s7 + $0x60] sm:$0xff]
    %v447 = vld [vmem:[%s7 + $0x68] sm:$0xff]
    %v448 = vld [vmem:[%s7 + $0x70] sm:$0xff]
    %v449 = vld [vmem:[%s7 + $0x78] sm:$0xff]
    %v450 = vld [vmem:[%s7 + $0x80] sm:$0xff]
    %v451 = vld [vmem:[%s7 + $0x88] sm:$0xff]
    %v452 = vld [vmem:[%s7 + $0x90] sm:$0xff]
    %v453 = vld [vmem:[%s7 + $0x98] sm:$0xff]
    %v454 = vld [vmem:[%s7 + $0xa0] sm:$0xff]
    %v455 = vld [vmem:[%s7 + $0xa8] sm:$0xff]
    %v456 = vld [vmem:[%s7 + $0xb0] sm:$0xff]
    %v457 = vld [vmem:[%s7 + $0xb8] sm:$0xff]
    %v458 = vld [vmem:[%s7 + $0xc0] sm:$0xff]
    %v459 = vld [vmem:[%s7 + $0xc8] sm:$0xff]
    %v460 = vld [vmem:[%s7 + $0xd0] sm:$0xff]
    %v461 = vld [vmem:[%s7 + $0xd8] sm:$0xff]
    %v462 = vld [vmem:[%s7 + $0xe0] sm:$0xff]
    %v463 = vld [vmem:[%s7 + $0xe8] sm:$0xff]
    %v464 = vld [vmem:[%s7 + $0xf0] sm:$0xff]
    %v465 = vld [vmem:[%s7 + $0xf8] sm:$0xff]
    %v466 = vld [vmem:[%s8] sm:$0x3]
    %v468 = vlaneseq
    %v469 = vshrl.u32 %v468, 7
    %v470 = vsub.s32 0, %v469
    %v471 = vrot.slane %v466, %v470
    %v472 = vlaneseq
    %v473 = vshrl.u32 %v472, 7
    %v474 = vsub.s32 1, %v473
    %v475 = vrot.slane %v466, %v474
    %v510 = vunpack.c.l.b16 %v434
    %v511 = vunpack.c.h.b16 %v434
    %v512 = vunpack.c.l.b16 %v435
    %v513 = vunpack.c.h.b16 %v435
    %v514 = vunpack.c.l.b16 %v436
    %v515 = vunpack.c.h.b16 %v436
    %v516 = vunpack.c.l.b16 %v437
    %v517 = vunpack.c.h.b16 %v437
    %v518 = vunpack.c.l.b16 %v438
    %v519 = vunpack.c.h.b16 %v438
    %v520 = vunpack.c.l.b16 %v439
    %v521 = vunpack.c.h.b16 %v439
    %v522 = vunpack.c.l.b16 %v440
    %v523 = vunpack.c.h.b16 %v440
    %v524 = vunpack.c.l.b16 %v441
    %v525 = vunpack.c.h.b16 %v441
    %v526 = vunpack.c.l.b16 %v442
    %v527 = vunpack.c.h.b16 %v442
    %v528 = vunpack.c.l.b16 %v443
    %v529 = vunpack.c.h.b16 %v443
    %v530 = vunpack.c.l.b16 %v444
    %v531 = vunpack.c.h.b16 %v444
    %v532 = vunpack.c.l.b16 %v445
    %v533 = vunpack.c.h.b16 %v445
    %v534 = vunpack.c.l.b16 %v446
    %v535 = vunpack.c.h.b16 %v446
    %v536 = vunpack.c.l.b16 %v447
    %v537 = vunpack.c.h.b16 %v447
    %v538 = vunpack.c.l.b16 %v448
    %v539 = vunpack.c.h.b16 %v448
    %v540 = vunpack.c.l.b16 %v449
    %v541 = vunpack.c.h.b16 %v449
    %v542 = vunpack.c.l.b16 %v450
    %v543 = vunpack.c.h.b16 %v450
    %v544 = vunpack.c.l.b16 %v451
    %v545 = vunpack.c.h.b16 %v451
    %v546 = vunpack.c.l.b16 %v452
    %v547 = vunpack.c.h.b16 %v452
    %v548 = vunpack.c.l.b16 %v453
    %v549 = vunpack.c.h.b16 %v453
    %v550 = vunpack.c.l.b16 %v454
    %v551 = vunpack.c.h.b16 %v454
    %v552 = vunpack.c.l.b16 %v455
    %v553 = vunpack.c.h.b16 %v455
    %v554 = vunpack.c.l.b16 %v456
    %v555 = vunpack.c.h.b16 %v456
    %v556 = vunpack.c.l.b16 %v457
    %v557 = vunpack.c.h.b16 %v457
    %v558 = vunpack.c.l.b16 %v458
    %v559 = vunpack.c.h.b16 %v458
    %v560 = vunpack.c.l.b16 %v459
    %v561 = vunpack.c.h.b16 %v459
    %v562 = vunpack.c.l.b16 %v460
    %v563 = vunpack.c.h.b16 %v460
    %v564 = vunpack.c.l.b16 %v461
    %v565 = vunpack.c.h.b16 %v461
    %v566 = vunpack.c.l.b16 %v462
    %v567 = vunpack.c.h.b16 %v462
    %v568 = vunpack.c.l.b16 %v463
    %v569 = vunpack.c.h.b16 %v463
    %v570 = vunpack.c.l.b16 %v464
    %v571 = vunpack.c.h.b16 %v464
    %v572 = vunpack.c.l.b16 %v465
    %v573 = vunpack.c.h.b16 %v465
    %v574 = vpack.c.b16 %v512, %v510
    %v575 = vpack.c.b16 %v513, %v511
    %v576 = vpack.c.b16 %v516, %v514
    %v577 = vpack.c.b16 %v517, %v515
    %v578 = vpack.c.b16 %v520, %v518
    %v579 = vpack.c.b16 %v521, %v519
    %v580 = vpack.c.b16 %v524, %v522
    %v581 = vpack.c.b16 %v525, %v523
    %v582 = vpack.c.b16 %v528, %v526
    %v583 = vpack.c.b16 %v529, %v527
    %v584 = vpack.c.b16 %v532, %v530
    %v585 = vpack.c.b16 %v533, %v531
    %v586 = vpack.c.b16 %v536, %v534
    %v587 = vpack.c.b16 %v537, %v535
    %v588 = vpack.c.b16 %v540, %v538
    %v589 = vpack.c.b16 %v541, %v539
    %v590 = vpack.c.b16 %v544, %v542
    %v591 = vpack.c.b16 %v545, %v543
    %v592 = vpack.c.b16 %v548, %v546
    %v593 = vpack.c.b16 %v549, %v547
    %v594 = vpack.c.b16 %v552, %v550
    %v595 = vpack.c.b16 %v553, %v551
    %v596 = vpack.c.b16 %v556, %v554
    %v597 = vpack.c.b16 %v557, %v555
    %v598 = vpack.c.b16 %v560, %v558
    %v599 = vpack.c.b16 %v561, %v559
    %v600 = vpack.c.b16 %v564, %v562
    %v601 = vpack.c.b16 %v565, %v563
    %v602 = vpack.c.b16 %v568, %v566
    %v603 = vpack.c.b16 %v569, %v567
    %v604 = vpack.c.b16 %v572, %v570
    %v605 = vpack.c.b16 %v573, %v571
    %638 = vmatprep.subr.bf16.mxu0 %v575
    %639 = vmatpush1.bf16.msra.mxu0 %v574
    %640 = vmatprep.subr.bf16.mxu0 %v577
    %641 = vmatpush1.bf16.msra.mxu0 %v576
    %642 = vmatprep.subr.bf16.mxu0 %v579
    %643 = vmatpush1.bf16.msra.mxu0 %v578
    %644 = vmatprep.subr.bf16.mxu0 %v581
    %645 = vmatpush1.bf16.msra.mxu0 %v580
    %646 = vmatprep.subr.bf16.mxu0 %v583
    %647 = vmatpush1.bf16.msra.mxu0 %v582
    %648 = vmatprep.subr.bf16.mxu0 %v585
    %649 = vmatpush1.bf16.msra.mxu0 %v584
    %650 = vmatprep.subr.bf16.mxu0 %v587
    %651 = vmatpush1.bf16.msra.mxu0 %v586
    %652 = vmatprep.subr.bf16.mxu0 %v589
    %653 = vmatpush1.bf16.msra.mxu0 %v588
    %654 = vmatprep.subr.bf16.mxu0 %v591
    %655 = vmatpush1.bf16.msra.mxu0 %v590
    %656 = vmatprep.subr.bf16.mxu0 %v593
    %657 = vmatpush1.bf16.msra.mxu0 %v592
    %658 = vmatprep.subr.bf16.mxu0 %v595
    %659 = vmatpush1.bf16.msra.mxu0 %v594
    %660 = vmatprep.subr.bf16.mxu0 %v597
    %661 = vmatpush1.bf16.msra.mxu0 %v596
    %662 = vmatprep.subr.bf16.mxu0 %v599
    %663 = vmatpush1.bf16.msra.mxu0 %v598
    %664 = vmatprep.subr.bf16.mxu0 %v601
    %665 = vmatpush1.bf16.msra.mxu0 %v600
    %666 = vmatprep.subr.bf16.mxu0 %v603
    %667 = vmatpush1.bf16.msra.mxu0 %v602
    %668 = vmatprep.subr.bf16.mxu0 %v605
    %669 = vmatpush1.bf16.msra.mxu0 %v604
    %670 = vmatprep.mubr.bf16.mxu0 %v433
    %671 = vmatmul.mubr.bf16.gmra.mrb[0].mxu0 %v432
    %v672 = vpop.f32.mrb[0].mxu0
    %v673 = vadd.f32 %v471, %v672
    %v674 = vpop.f32.mrb[0].mxu0
    %v675 = vadd.f32 %v475, %v674
    %v676 = vpop.f32.mrb[0].mxu0
    %v677 = vpop.f32.mrb[0].mxu0
    %678 = vdwg.mxu0
    %v679 = vmax.f32 %v673, 0.0
    %v680 = vmax.f32 %v675, 0.0
    %v681 = vpack.c.bf16 %v679, %v679
    %v682 = vpack.c.bf16 %v680, %v680
    %v683 = vld [vmem:[%s9] sm:$0xff]
    %v684 = vld [vmem:[%s9 + $0x8] sm:$0xf]
    %v685 = vld [vmem:[%s9 + $0xc] sm:$0xff]
    %v686 = vld [vmem:[%s9 + $0x14] sm:$0xf]
    %v687 = vld [vmem:[%s9 + $0x18] sm:$0xff]
    %v688 = vld [vmem:[%s9 + $0x20] sm:$0xf]
    %v689 = vld [vmem:[%s9 + $0x24] sm:$0xff]
    %v690 = vld [vmem:[%s9 + $0x2c] sm:$0xf]
    %v691 = vld [vmem:[%s9 + $0x30] sm:$0xff]
    %v692 = vld [vmem:[%s9 + $0x38] sm:$0xf]
    %v693 = vld [vmem:[%s9 + $0x3c] sm:$0xff]
    %v694 = vld [vmem:[%s9 + $0x44] sm:$0xf]
    %v695 = vld [vmem:[%s9 + $0x48] sm:$0xff]
    %v696 = vld [vmem:[%s9 + $0x50] sm:$0xf]
    %v697 = vld [vmem:[%s9 + $0x54] sm:$0xff]
    %v698 = vld [vmem:[%s9 + $0x5c] sm:$0xf]
    %v699 = vld [vmem:[%s9 + $0x60] sm:$0xff]
    %v700 = vld [vmem:[%s9 + $0x68] sm:$0xf]
    %v701 = vld [vmem:[%s9 + $0x6c] sm:$0xff]
    %v702 = vld [vmem:[%s9 + $0x74] sm:$0xf]
    %v703 = vld [vmem:[%s9 + $0x78] sm:$0xff]
    %v704 = vld [vmem:[%s9 + $0x80] sm:$0xf]
    %v705 = vld [vmem:[%s9 + $0x84] sm:$0xff]
    %v706 = vld [vmem:[%s9 + $0x8c] sm:$0xf]
    %v707 = vld [vmem:[%s9 + $0x90] sm:$0xff]
    %v708 = vld [vmem:[%s9 + $0x98] sm:$0xf]
    %v709 = vld [vmem:[%s9 + $0x9c] sm:$0xff]
    %v710 = vld [vmem:[%s9 + $0xa4] sm:$0xf]
    %v711 = vld [vmem:[%s9 + $0xa8] sm:$0xff]
    %v712 = vld [vmem:[%s9 + $0xb0] sm:$0xf]
    %v713 = vld [vmem:[%s9 + $0xb4] sm:$0xff]
    %v714 = vld [vmem:[%s9 + $0xbc] sm:$0xf]
    %v715 = vld [vmem:[%s9 + $0xc0] sm:$0xff]
    %v716 = vld [vmem:[%s9 + $0xc8] sm:$0xf]
    %v717 = vld [vmem:[%s9 + $0xcc] sm:$0xff]
    %v718 = vld [vmem:[%s9 + $0xd4] sm:$0xf]
    %v719 = vld [vmem:[%s9 + $0xd8] sm:$0xff]
    %v720 = vld [vmem:[%s9 + $0xe0] sm:$0xf]
    %v721 = vld [vmem:[%s9 + $0xe4] sm:$0xff]
    %v722 = vld [vmem:[%s9 + $0xec] sm:$0xf]
    %v723 = vld [vmem:[%s9 + $0xf0] sm:$0xff]
    %v724 = vld [vmem:[%s9 + $0xf8] sm:$0xf]
    %v725 = vld [vmem:[%s9 + $0xfc] sm:$0xff]
    %v726 = vld [vmem:[%s9 + $0x104] sm:$0xf]
    %v727 = vld [vmem:[%s9 + $0x108] sm:$0xff]
    %v728 = vld [vmem:[%s9 + $0x110] sm:$0xf]
    %v729 = vld [vmem:[%s9 + $0x114] sm:$0xff]
    %v730 = vld [vmem:[%s9 + $0x11c] sm:$0xf]
    %v731 = vld [vmem:[%s9 + $0x120] sm:$0xff]
    %v732 = vld [vmem:[%s9 + $0x128] sm:$0xf]
    %v733 = vld [vmem:[%s9 + $0x12c] sm:$0xff]
    %v734 = vld [vmem:[%s9 + $0x134] sm:$0xf]
    %v735 = vld [vmem:[%s9 + $0x138] sm:$0xff]
    %v736 = vld [vmem:[%s9 + $0x140] sm:$0xf]
    %v737 = vld [vmem:[%s9 + $0x144] sm:$0xff]
    %v738 = vld [vmem:[%s9 + $0x14c] sm:$0xf]
    %v739 = vld [vmem:[%s9 + $0x150] sm:$0xff]
    %v740 = vld [vmem:[%s9 + $0x158] sm:$0xf]
    %v741 = vld [vmem:[%s9 + $0x15c] sm:$0xff]
    %v742 = vld [vmem:[%s9 + $0x164] sm:$0xf]
    %v743 = vld [vmem:[%s9 + $0x168] sm:$0xff]
    %v744 = vld [vmem:[%s9 + $0x170] sm:$0xf]
    %v745 = vld [vmem:[%s9 + $0x174] sm:$0xff]
    %v746 = vld [vmem:[%s9 + $0x17c] sm:$0xf]
    %v747 = vld [vmem:[%s10] sm:$0x7]
    %v749 = vlaneseq
    %v750 = vshrl.u32 %v749, 7
    %v751 = vsub.s32 0, %v750
    %v752 = vrot.slane %v747, %v751
    %v753 = vlaneseq
    %v754 = vshrl.u32 %v753, 7
    %v755 = vsub.s32 1, %v754
    %v756 = vrot.slane %v747, %v755
    %v757 = vlaneseq
    %v758 = vshrl.u32 %v757, 7
    %v759 = vsub.s32 2, %v758
    %v760 = vrot.slane %v747, %v759
    %v828 = vunpack.c.l.b16 %v683
    %v829 = vunpack.c.h.b16 %v683
    %v830 = vunpack.c.l.b16 %v684
    %v831 = vunpack.c.l.b16 %v685
    %v832 = vunpack.c.h.b16 %v685
    %v833 = vunpack.c.l.b16 %v686
    %v834 = vunpack.c.l.b16 %v687
    %v835 = vunpack.c.h.b16 %v687
    %v836 = vunpack.c.l.b16 %v688
    %v837 = vunpack.c.l.b16 %v689
    %v838 = vunpack.c.h.b16 %v689
    %v839 = vunpack.c.l.b16 %v690
    %v840 = vunpack.c.l.b16 %v691
    %v841 = vunpack.c.h.b16 %v691
    %v842 = vunpack.c.l.b16 %v692
    %v843 = vunpack.c.l.b16 %v693
    %v844 = vunpack.c.h.b16 %v693
    %v845 = vunpack.c.l.b16 %v694
    %v846 = vunpack.c.l.b16 %v695
    %v847 = vunpack.c.h.b16 %v695
    %v848 = vunpack.c.l.b16 %v696
    %v849 = vunpack.c.l.b16 %v697
    %v850 = vunpack.c.h.b16 %v697
    %v851 = vunpack.c.l.b16 %v698
    %v852 = vunpack.c.l.b16 %v699
    %v853 = vunpack.c.h.b16 %v699
    %v854 = vunpack.c.l.b16 %v700
    %v855 = vunpack.c.l.b16 %v701
    %v856 = vunpack.c.h.b16 %v701
    %v857 = vunpack.c.l.b16 %v702
    %v858 = vunpack.c.l.b16 %v703
    %v859 = vunpack.c.h.b16 %v703
    %v860 = vunpack.c.l.b16 %v704
    %v861 = vunpack.c.l.b16 %v705
    %v862 = vunpack.c.h.b16 %v705
    %v863 = vunpack.c.l.b16 %v706
    %v864 = vunpack.c.l.b16 %v707
    %v865 = vunpack.c.h.b16 %v707
    %v866 = vunpack.c.l.b16 %v708
    %v867 = vunpack.c.l.b16 %v709
    %v868 = vunpack.c.h.b16 %v709
    %v869 = vunpack.c.l.b16 %v710
    %v870 = vunpack.c.l.b16 %v711
    %v871 = vunpack.c.h.b16 %v711
    %v872 = vunpack.c.l.b16 %v712
    %v873 = vunpack.c.l.b16 %v713
    %v874 = vunpack.c.h.b16 %v713
    %v875 = vunpack.c.l.b16 %v714
    %v876 = vunpack.c.l.b16 %v715
    %v877 = vunpack.c.h.b16 %v715
    %v878 = vunpack.c.l.b16 %v716
    %v879 = vunpack.c.l.b16 %v717
    %v880 = vunpack.c.h.b16 %v717
    %v881 = vunpack.c.l.b16 %v718
    %v882 = vunpack.c.l.b16 %v719
    %v883 = vunpack.c.h.b16 %v719
    %v884 = vunpack.c.l.b16 %v720
    %v885 = vunpack.c.l.b16 %v721
    %v886 = vunpack.c.h.b16 %v721
    %v887 = vunpack.c.l.b16 %v722
    %v888 = vunpack.c.l.b16 %v723
    %v889 = vunpack.c.h.b16 %v723
    %v890 = vunpack.c.l.b16 %v724
    %v891 = vunpack.c.l.b16 %v725
    %v892 = vunpack.c.h.b16 %v725
    %v893 = vunpack.c.l.b16 %v726
    %v894 = vunpack.c.l.b16 %v727
    %v895 = vunpack.c.h.b16 %v727
    %v896 = vunpack.c.l.b16 %v728
    %v897 = vunpack.c.l.b16 %v729
    %v898 = vunpack.c.h.b16 %v729
    %v899 = vunpack.c.l.b16 %v730
    %v900 = vunpack.c.l.b16 %v731
    %v901 = vunpack.c.h.b16 %v731
    %v902 = vunpack.c.l.b16 %v732
    %v903 = vunpack.c.l.b16 %v733
    %v904 = vunpack.c.h.b16 %v733
    %v905 = vunpack.c.l.b16 %v734
    %v906 = vunpack.c.l.b16 %v735
    %v907 = vunpack.c.h.b16 %v735
    %v908 = vunpack.c.l.b16 %v736
    %v909 = vunpack.c.l.b16 %v737
    %v910 = vunpack.c.h.b16 %v737
    %v911 = vunpack.c.l.b16 %v738
    %v912 = vunpack.c.l.b16 %v739
    %v913 = vunpack.c.h.b16 %v739
    %v914 = vunpack.c.l.b16 %v740
    %v915 = vunpack.c.l.b16 %v741
    %v916 = vunpack.c.h.b16 %v741
    %v917 = vunpack.c.l.b16 %v742
    %v918 = vunpack.c.l.b16 %v743
    %v919 = vunpack.c.h.b16 %v743
    %v920 = vunpack.c.l.b16 %v744
    %v921 = vunpack.c.l.b16 %v745
    %v922 = vunpack.c.h.b16 %v745
    %v923 = vunpack.c.l.b16 %v746
    %v924 = vpack.c.b16 %v831, %v828
    %v925 = vpack.c.b16 %v832, %v829
    %v926 = vpack.c.b16 %v833, %v830
    %v927 = vpack.c.b16 %v837, %v834
    %v928 = vpack.c.b16 %v838, %v835
    %v929 = vpack.c.b16 %v839, %v836
    %v930 = vpack.c.b16 %v843, %v840
    %v931 = vpack.c.b16 %v844, %v841
    %v932 = vpack.c.b16 %v845, %v842
    %v933 = vpack.c.b16 %v849, %v846
    %v934 = vpack.c.b16 %v850, %v847
    %v935 = vpack.c.b16 %v851, %v848
    %v936 = vpack.c.b16 %v855, %v852
    %v937 = vpack.c.b16 %v856, %v853
    %v938 = vpack.c.b16 %v857, %v854
    %v939 = vpack.c.b16 %v861, %v858
    %v940 = vpack.c.b16 %v862, %v859
    %v941 = vpack.c.b16 %v863, %v860
    %v942 = vpack.c.b16 %v867, %v864
    %v943 = vpack.c.b16 %v868, %v865
    %v944 = vpack.c.b16 %v869, %v866
    %v945 = vpack.c.b16 %v873, %v870
    %v946 = vpack.c.b16 %v874, %v871
    %v947 = vpack.c.b16 %v875, %v872
    %v948 = vpack.c.b16 %v879, %v876
    %v949 = vpack.c.b16 %v880, %v877
    %v950 = vpack.c.b16 %v881, %v878
    %v951 = vpack.c.b16 %v885, %v882
    %v952 = vpack.c.b16 %v886, %v883
    %v953 = vpack.c.b16 %v887, %v884
    %v954 = vpack.c.b16 %v891, %v888
    %v955 = vpack.c.b16 %v892, %v889
    %v956 = vpack.c.b16 %v893, %v890
    %v957 = vpack.c.b16 %v897, %v894
    %v958 = vpack.c.b16 %v898, %v895
    %v959 = vpack.c.b16 %v899, %v896
    %v960 = vpack.c.b16 %v903, %v900
    %v961 = vpack.c.b16 %v904, %v901
    %v962 = vpack.c.b16 %v905, %v902
    %v963 = vpack.c.b16 %v909, %v906
    %v964 = vpack.c.b16 %v910, %v907
    %v965 = vpack.c.b16 %v911, %v908
    %v966 = vpack.c.b16 %v915, %v912
    %v967 = vpack.c.b16 %v916, %v913
    %v968 = vpack.c.b16 %v917, %v914
    %v969 = vpack.c.b16 %v921, %v918
    %v970 = vpack.c.b16 %v922, %v919
    %v971 = vpack.c.b16 %v923, %v920
    %1020 = vmatprep.subr.bf16.mxu0 %v925
    %1021 = vmatpush1.bf16.msra.mxu0 %v924
    %1022 = vmatprep.subr.bf16.mxu0 %v928
    %1023 = vmatpush1.bf16.msra.mxu0 %v927
    %1024 = vmatprep.subr.bf16.mxu0 %v931
    %1025 = vmatpush1.bf16.msra.mxu0 %v930
    %1026 = vmatprep.subr.bf16.mxu0 %v934
    %1027 = vmatpush1.bf16.msra.mxu0 %v933
    %1028 = vmatprep.subr.bf16.mxu0 %v937
    %1029 = vmatpush1.bf16.msra.mxu0 %v936
    %1030 = vmatprep.subr.bf16.mxu0 %v940
    %1031 = vmatpush1.bf16.msra.mxu0 %v939
    %1032 = vmatprep.subr.bf16.mxu0 %v943
    %1033 = vmatpush1.bf16.msra.mxu0 %v942
    %1034 = vmatprep.subr.bf16.mxu0 %v946
    %1035 = vmatpush1.bf16.msra.mxu0 %v945
    %1036 = vmatprep.subr.bf16.mxu0 %v949
    %1037 = vmatpush1.bf16.msra.mxu0 %v948
    %1038 = vmatprep.subr.bf16.mxu0 %v952
    %1039 = vmatpush1.bf16.msra.mxu0 %v951
    %1040 = vmatprep.subr.bf16.mxu0 %v955
    %1041 = vmatpush1.bf16.msra.mxu0 %v954
    %1042 = vmatprep.subr.bf16.mxu0 %v958
    %1043 = vmatpush1.bf16.msra.mxu0 %v957
    %1044 = vmatprep.subr.bf16.mxu0 %v961
    %1045 = vmatpush1.bf16.msra.mxu0 %v960
    %1046 = vmatprep.subr.bf16.mxu0 %v964
    %1047 = vmatpush1.bf16.msra.mxu0 %v963
    %1048 = vmatprep.subr.bf16.mxu0 %v967
    %1049 = vmatpush1.bf16.msra.mxu0 %v966
    %1050 = vmatprep.subr.bf16.mxu0 %v970
    %1051 = vmatpush1.bf16.msra.mxu0 %v969
    %1052 = vmatprep.mubr.bf16.mxu0 %v682
    %1053 = vmatmul.mubr.bf16.gmra.mrb[0].mxu0 %v681
    %v1054 = vpop.f32.mrb[0].mxu0
    %v1055 = vadd.f32 %v752, %v1054
    %v1056 = vpop.f32.mrb[0].mxu0
    %v1057 = vadd.f32 %v756, %v1056
    %v1058 = vpop.f32.mrb[0].mxu0
    %v1059 = vpop.f32.mrb[0].mxu0
    %1060 = vdwg.mxu0
    %1061 = vmatprep.subr.bf16.mxu0 0
    %1062 = vmatpush1.bf16.msra.mxu0 %v926
    %1063 = vmatprep.subr.bf16.mxu0 0
    %1064 = vmatpush1.bf16.msra.mxu0 %v929
    %1065 = vmatprep.subr.bf16.mxu0 0
    %1066 = vmatpush1.bf16.msra.mxu0 %v932
    %1067 = vmatprep.subr.bf16.mxu0 0
    %1068 = vmatpush1.bf16.msra.mxu0 %v935
    %1069 = vmatprep.subr.bf16.mxu0 0
    %1070 = vmatpush1.bf16.msra.mxu0 %v938
    %1071 = vmatprep.subr.bf16.mxu0 0
    %1072 = vmatpush1.bf16.msra.mxu0 %v941
    %1073 = vmatprep.subr.bf16.mxu0 0
    %1074 = vmatpush1.bf16.msra.mxu0 %v944
    %1075 = vmatprep.subr.bf16.mxu0 0
    %1076 = vmatpush1.bf16.msra.mxu0 %v947
    %1077 = vmatprep.subr.bf16.mxu0 0
    %1078 = vmatpush1.bf16.msra.mxu0 %v950
    %1079 = vmatprep.subr.bf16.mxu0 0
    %1080 = vmatpush1.bf16.msra.mxu0 %v953
    %1081 = vmatprep.subr.bf16.mxu0 0
    %1082 = vmatpush1.bf16.msra.mxu0 %v956
    %1083 = vmatprep.subr.bf16.mxu0 0
    %1084 = vmatpush1.bf16.msra.mxu0 %v959
    %1085 = vmatprep.subr.bf16.mxu0 0
    %1086 = vmatpush1.bf16.msra.mxu0 %v962
    %1087 = vmatprep.subr.bf16.mxu0 0
    %1088 = vmatpush1.bf16.msra.mxu0 %v965
    %1089 = vmatprep.subr.bf16.mxu0 0
    %1090 = vmatpush1.bf16.msra.mxu0 %v968
    %1091 = vmatprep.subr.bf16.mxu0 0
    %1092 = vmatpush1.bf16.msra.mxu0 %v971
    %1093 = vmatprep.mubr.bf16.mxu0 %v682
    %1094 = vmatmul.mubr.bf16.gmra.mrb[0].mxu0 %v681
    %v1095 = vpop.f32.mrb[0].mxu0
    %v1096 = vadd.f32 %v760, %v1095
    %v1097 = vpop.f32.mrb[0].mxu0
    %v1098 = vpop.f32.mrb[0].mxu0
    %v1099 = vpop.f32.mrb[0].mxu0
    %1100 = vdwg.mxu0
    %v1104 = vcombine.low %v1055, %v1057
    %v1106 = vunpack.c.l.s4 1983009808
    %v1107 = vunpack.c.0.s8 %v1106
    %v1108 = vlaneseq
    %v1109 = vshrl.u32 %v1108, 7
    %v1110 = vsub.s32 %v1107, %v1109
    %v1111 = vrot.slane %v1104, %v1110
    %v1113 = vunpack.c.l.s4 1983009808
    %v1114 = vunpack.c.0.s8 %v1113
    %v1115 = vlaneseq
    %v1116 = vshrl.u32 %v1115, 7
    %v1117 = vsub.s32 %v1114, %v1116
    %v1118 = vrot.slane %v1096, %v1117
    %v1119 = vcombine.low %v1111, %v1118
    %1121 = vst [vmem:[#allocation2] sm:$0x3f] %v1119
    %v1122 = vld [vmem:[%s11] sm:$0xff]
    %v1123 = vld [vmem:[%s11 + $0x8] sm:$0xff]
    %v1124 = vld [vmem:[%s11 + $0x10] sm:$0xff]
    %v1125 = vld [vmem:[%s11 + $0x18] sm:$0xff]
    %v1126 = vld [vmem:[%s11 + $0x20] sm:$0xff]
    %v1127 = vld [vmem:[%s11 + $0x28] sm:$0xff]
    %v1128 = vld [vmem:[%s11 + $0x30] sm:$0xff]
    %v1129 = vld [vmem:[%s11 + $0x38] sm:$0xff]
    %v1130 = vld [vmem:[%s11 + $0x40] sm:$0xff]
    %v1131 = vld [vmem:[%s11 + $0x48] sm:$0xff]
    %v1132 = vld [vmem:[%s11 + $0x50] sm:$0xff]
    %v1133 = vld [vmem:[%s11 + $0x58] sm:$0xff]
    %v1134 = vld [vmem:[%s11 + $0x60] sm:$0xff]
    %v1135 = vld [vmem:[%s11 + $0x68] sm:$0xff]
    %v1136 = vld [vmem:[%s11 + $0x70] sm:$0xff]
    %v1137 = vld [vmem:[%s11 + $0x78] sm:$0xff]
    %v1138 = vld [vmem:[%s11 + $0x80] sm:$0xff]
    %v1139 = vld [vmem:[%s11 + $0x88] sm:$0xff]
    %v1140 = vld [vmem:[%s11 + $0x90] sm:$0xff]
    %v1141 = vld [vmem:[%s11 + $0x98] sm:$0xff]
    %v1142 = vld [vmem:[%s11 + $0xa0] sm:$0xff]
    %v1143 = vld [vmem:[%s11 + $0xa8] sm:$0xff]
    %v1144 = vld [vmem:[%s11 + $0xb0] sm:$0xff]
    %v1145 = vld [vmem:[%s11 + $0xb8] sm:$0xff]
    %v1146 = vld [vmem:[%s11 + $0xc0] sm:$0xff]
    %v1147 = vld [vmem:[%s11 + $0xc8] sm:$0xff]
    %v1148 = vld [vmem:[%s11 + $0xd0] sm:$0xff]
    %v1149 = vld [vmem:[%s11 + $0xd8] sm:$0xff]
    %v1150 = vld [vmem:[%s11 + $0xe0] sm:$0xff]
    %v1151 = vld [vmem:[%s11 + $0xe8] sm:$0xff]
    %v1152 = vld [vmem:[%s11 + $0xf0] sm:$0xff]
    %v1153 = vld [vmem:[%s11 + $0xf8] sm:$0xff]
    %v1154 = vld [vmem:[%s12] sm:$0x3]
    %v1156 = vlaneseq
    %v1157 = vshrl.u32 %v1156, 7
    %v1158 = vsub.s32 0, %v1157
    %v1159 = vrot.slane %v1154, %v1158
    %v1160 = vlaneseq
    %v1161 = vshrl.u32 %v1160, 7
    %v1162 = vsub.s32 1, %v1161
    %v1163 = vrot.slane %v1154, %v1162
    %v1198 = vunpack.c.l.b16 %v1122
    %v1199 = vunpack.c.h.b16 %v1122
    %v1200 = vunpack.c.l.b16 %v1123
    %v1201 = vunpack.c.h.b16 %v1123
    %v1202 = vunpack.c.l.b16 %v1124
    %v1203 = vunpack.c.h.b16 %v1124
    %v1204 = vunpack.c.l.b16 %v1125
    %v1205 = vunpack.c.h.b16 %v1125
    %v1206 = vunpack.c.l.b16 %v1126
    %v1207 = vunpack.c.h.b16 %v1126
    %v1208 = vunpack.c.l.b16 %v1127
    %v1209 = vunpack.c.h.b16 %v1127
    %v1210 = vunpack.c.l.b16 %v1128
    %v1211 = vunpack.c.h.b16 %v1128
    %v1212 = vunpack.c.l.b16 %v1129
    %v1213 = vunpack.c.h.b16 %v1129
    %v1214 = vunpack.c.l.b16 %v1130
    %v1215 = vunpack.c.h.b16 %v1130
    %v1216 = vunpack.c.l.b16 %v1131
    %v1217 = vunpack.c.h.b16 %v1131
    %v1218 = vunpack.c.l.b16 %v1132
    %v1219 = vunpack.c.h.b16 %v1132
    %v1220 = vunpack.c.l.b16 %v1133
    %v1221 = vunpack.c.h.b16 %v1133
    %v1222 = vunpack.c.l.b16 %v1134
    %v1223 = vunpack.c.h.b16 %v1134
    %v1224 = vunpack.c.l.b16 %v1135
    %v1225 = vunpack.c.h.b16 %v1135
    %v1226 = vunpack.c.l.b16 %v1136
    %v1227 = vunpack.c.h.b16 %v1136
    %v1228 = vunpack.c.l.b16 %v1137
    %v1229 = vunpack.c.h.b16 %v1137
    %v1230 = vunpack.c.l.b16 %v1138
    %v1231 = vunpack.c.h.b16 %v1138
    %v1232 = vunpack.c.l.b16 %v1139
    %v1233 = vunpack.c.h.b16 %v1139
    %v1234 = vunpack.c.l.b16 %v1140
    %v1235 = vunpack.c.h.b16 %v1140
    %v1236 = vunpack.c.l.b16 %v1141
    %v1237 = vunpack.c.h.b16 %v1141
    %v1238 = vunpack.c.l.b16 %v1142
    %v1239 = vunpack.c.h.b16 %v1142
    %v1240 = vunpack.c.l.b16 %v1143
    %v1241 = vunpack.c.h.b16 %v1143
    %v1242 = vunpack.c.l.b16 %v1144
    %v1243 = vunpack.c.h.b16 %v1144
    %v1244 = vunpack.c.l.b16 %v1145
    %v1245 = vunpack.c.h.b16 %v1145
    %v1246 = vunpack.c.l.b16 %v1146
    %v1247 = vunpack.c.h.b16 %v1146
    %v1248 = vunpack.c.l.b16 %v1147
    %v1249 = vunpack.c.h.b16 %v1147
    %v1250 = vunpack.c.l.b16 %v1148
    %v1251 = vunpack.c.h.b16 %v1148
    %v1252 = vunpack.c.l.b16 %v1149
    %v1253 = vunpack.c.h.b16 %v1149
    %v1254 = vunpack.c.l.b16 %v1150
    %v1255 = vunpack.c.h.b16 %v1150
    %v1256 = vunpack.c.l.b16 %v1151
    %v1257 = vunpack.c.h.b16 %v1151
    %v1258 = vunpack.c.l.b16 %v1152
    %v1259 = vunpack.c.h.b16 %v1152
    %v1260 = vunpack.c.l.b16 %v1153
    %v1261 = vunpack.c.h.b16 %v1153
    %v1262 = vpack.c.b16 %v1200, %v1198
    %v1263 = vpack.c.b16 %v1201, %v1199
    %v1264 = vpack.c.b16 %v1204, %v1202
    %v1265 = vpack.c.b16 %v1205, %v1203
    %v1266 = vpack.c.b16 %v1208, %v1206
    %v1267 = vpack.c.b16 %v1209, %v1207
    %v1268 = vpack.c.b16 %v1212, %v1210
    %v1269 = vpack.c.b16 %v1213, %v1211
    %v1270 = vpack.c.b16 %v1216, %v1214
    %v1271 = vpack.c.b16 %v1217, %v1215
    %v1272 = vpack.c.b16 %v1220, %v1218
    %v1273 = vpack.c.b16 %v1221, %v1219
    %v1274 = vpack.c.b16 %v1224, %v1222
    %v1275 = vpack.c.b16 %v1225, %v1223
    %v1276 = vpack.c.b16 %v1228, %v1226
    %v1277 = vpack.c.b16 %v1229, %v1227
    %v1278 = vpack.c.b16 %v1232, %v1230
    %v1279 = vpack.c.b16 %v1233, %v1231
    %v1280 = vpack.c.b16 %v1236, %v1234
    %v1281 = vpack.c.b16 %v1237, %v1235
    %v1282 = vpack.c.b16 %v1240, %v1238
    %v1283 = vpack.c.b16 %v1241, %v1239
    %v1284 = vpack.c.b16 %v1244, %v1242
    %v1285 = vpack.c.b16 %v1245, %v1243
    %v1286 = vpack.c.b16 %v1248, %v1246
    %v1287 = vpack.c.b16 %v1249, %v1247
    %v1288 = vpack.c.b16 %v1252, %v1250
    %v1289 = vpack.c.b16 %v1253, %v1251
    %v1290 = vpack.c.b16 %v1256, %v1254
    %v1291 = vpack.c.b16 %v1257, %v1255
    %v1292 = vpack.c.b16 %v1260, %v1258
    %v1293 = vpack.c.b16 %v1261, %v1259
    %1326 = vmatprep.subr.bf16.mxu0 %v1263
    %1327 = vmatpush1.bf16.msra.mxu0 %v1262
    %1328 = vmatprep.subr.bf16.mxu0 %v1265
    %1329 = vmatpush1.bf16.msra.mxu0 %v1264
    %1330 = vmatprep.subr.bf16.mxu0 %v1267
    %1331 = vmatpush1.bf16.msra.mxu0 %v1266
    %1332 = vmatprep.subr.bf16.mxu0 %v1269
    %1333 = vmatpush1.bf16.msra.mxu0 %v1268
    %1334 = vmatprep.subr.bf16.mxu0 %v1271
    %1335 = vmatpush1.bf16.msra.mxu0 %v1270
    %1336 = vmatprep.subr.bf16.mxu0 %v1273
    %1337 = vmatpush1.bf16.msra.mxu0 %v1272
    %1338 = vmatprep.subr.bf16.mxu0 %v1275
    %1339 = vmatpush1.bf16.msra.mxu0 %v1274
    %1340 = vmatprep.subr.bf16.mxu0 %v1277
    %1341 = vmatpush1.bf16.msra.mxu0 %v1276
    %1342 = vmatprep.subr.bf16.mxu0 %v1279
    %1343 = vmatpush1.bf16.msra.mxu0 %v1278
    %1344 = vmatprep.subr.bf16.mxu0 %v1281
    %1345 = vmatpush1.bf16.msra.mxu0 %v1280
    %1346 = vmatprep.subr.bf16.mxu0 %v1283
    %1347 = vmatpush1.bf16.msra.mxu0 %v1282
    %1348 = vmatprep.subr.bf16.mxu0 %v1285
    %1349 = vmatpush1.bf16.msra.mxu0 %v1284
    %1350 = vmatprep.subr.bf16.mxu0 %v1287
    %1351 = vmatpush1.bf16.msra.mxu0 %v1286
    %1352 = vmatprep.subr.bf16.mxu0 %v1289
    %1353 = vmatpush1.bf16.msra.mxu0 %v1288
    %1354 = vmatprep.subr.bf16.mxu0 %v1291
    %1355 = vmatpush1.bf16.msra.mxu0 %v1290
    %1356 = vmatprep.subr.bf16.mxu0 %v1293
    %1357 = vmatpush1.bf16.msra.mxu0 %v1292
    %1358 = vmatprep.mubr.bf16.mxu0 %v433
    %1359 = vmatmul.mubr.bf16.gmra.mrb[0].mxu0 %v432
    %v1360 = vpop.f32.mrb[0].mxu0
    %v1361 = vadd.f32 %v1159, %v1360
    %v1362 = vpop.f32.mrb[0].mxu0
    %v1363 = vadd.f32 %v1163, %v1362
    %v1364 = vpop.f32.mrb[0].mxu0
    %v1365 = vpop.f32.mrb[0].mxu0
    %1366 = vdwg.mxu0
    %v1369 = vcombine.low %v1361, %v1363
    %v1371 = vunpack.c.l.s4 1983009808
    %v1372 = vunpack.c.0.s8 %v1371
    %v1373 = vlaneseq
    %v1374 = vshrl.u32 %v1373, 7
    %v1375 = vsub.s32 %v1372, %v1374
    %v1376 = vrot.slane %v1369, %v1375
    %1378 = vst [vmem:[#allocation4] sm:$0xf] %v1376
    // Predicated region
    $region54: #{hecto_forward.3} parent=1 // pred_check
      _
    $region55: #{hecto_forward.3} parent=1 // pred_check_branch
      %1380 = sbr.rel (0) target = $region57
    $region56: #{hecto_forward.3} parent=1 // pred_region
      %s1382 = ssub.s32 96, 96
      %1383 = vsyncadd [#allocation3], %s1382
      %s1385 = sshll.u32 [#allocation2], 4
      %s1386 = int_to_ptr.vmem [resolvable:$true] %s1385
      %1388 = dma.vmem_to_hbm [thread:$0]  %s1386, 96, %s13, [#allocation3]
    $region57: #{hecto_forward.3} parent=1 // pred_fallthru
      _
    // Predicated region
    $region58: #{hecto_forward.3} parent=1 // pred_check
      _
    $region59: #{hecto_forward.3} parent=1 // pred_check_branch
      %1390 = sbr.rel (0) target = $region61
    $region60: #{hecto_forward.3} parent=1 // pred_region
      %s1392 = ssub.s32 64, 64
      %1393 = vsyncadd [#allocation5], %s1392
      %s1395 = sshll.u32 [#allocation4], 4
      %s1396 = int_to_ptr.vmem [resolvable:$true] %s1395
      %1398 = dma.vmem_to_hbm [thread:$0]  %s1396, 64, %s14, [#allocation5]
    $region61: #{hecto_forward.3} parent=1 // pred_fallthru
      _
    // Predicated region
    $region62: #{hecto_forward.3} parent=1 // pred_check
      _
    $region63: #{hecto_forward.3} parent=1 // pred_check_branch
      %1400 = sbr.rel (0) target = $region65
    $region64: #{hecto_forward.3} parent=1 // pred_region
      %1401 = dma.done [#allocation3], 96
    $region65: #{hecto_forward.3} parent=1 // pred_fallthru
      _
    // Predicated region
    $region66: #{hecto_forward.3} parent=1 // pred_check
      _
    $region67: #{hecto_forward.3} parent=1 // pred_check_branch
      %1403 = sbr.rel (0) target = $region69
    $region68: #{hecto_forward.3} parent=1 // pred_region
      %1404 = dma.done [#allocation5], 64
    $region69: #{hecto_forward.3} parent=1 // pred_fallthru
      _
    %1405 = vsyncpa [#allocation3], 1
    %1406 = vsyncpa [#allocation5], 1

</llo_original>
